<compile_context>
chip_gen: v7x
topology: tpu7x:2x2x1
jax: 0.10.0
libtpu: 0.0.40
codegen_flags: <defaults>
</compile_context>

<pallas_src>
import functools

import jax
import jax.numpy as jnp
import numpy as np
from jax.experimental import pallas as pl
from jax.experimental.pallas import tpu as pltpu

EPS = 1e-5


# ---------------------------------------------------------------------------
# Pallas kernel: one grid step == one (batch, row-tile) of the fused DoubleConv.
# ---------------------------------------------------------------------------
def _double_conv_kernel(x_ref, w1_ref, b1_ref, m_ref, w2_ref, b2_ref,
                        o_ref, y1_ref, *, TH, Wp):
    """Per-block shapes:
      x_ref : (1, 1, C_in, (TH+5)*Wp + 1)  padded+flattened input window
                                           (halo rows + 1 leading zero elem)
      w1_ref: (9, C_mid, C_in)             conv1 taps with BN1 scale folded in
      b1_ref: (C_mid, 1)                   folded BN1 shift
      m_ref : (1, 1, (TH+2)*Wp + 1)        validity mask for the intermediate
      w2_ref: (9, C_out, C_mid)            conv2 taps with BN2 scale folded in
      b2_ref: (C_out, 1)                   folded BN2 shift
      o_ref : (1, 1, C_out, TH*Wp)         this tile's output rows (junk cols kept)
      y1_ref: (C_mid, (TH+2)*Wp + 2)       VMEM scratch for the intermediate
    """
    L1p = (TH + 2) * Wp + 1          # intermediate positions (incl. lead zero)
    L2 = TH * Wp                     # output positions owned by this tile
    c_mid = w1_ref.shape[1]

    # The single scratch column past the intermediate is only ever read for
    # junk (cropped) output columns; zero it anyway so no uninitialised VMEM
    # is consumed.
    y1_ref[:, L1p:] = jnp.zeros((c_mid, 1), jnp.float32)

    # ---- conv1 (3x3, zero pad) + folded BN1 + ReLU over TH+2 halo rows ------
    acc1 = jnp.dot(w1_ref[0], x_ref[0, 0, :, 0:L1p],
                   preferred_element_type=jnp.float32)
    for k in range(1, 9):
        off = (k // 3) * Wp + (k % 3)
        acc1 = acc1 + jnp.dot(w1_ref[k], x_ref[0, 0, :, off:off + L1p],
                              preferred_element_type=jnp.float32)
    # mask zeroes out-of-image halo rows and the 2 wrap columns; those zeros
    # then act as conv2's zero padding.  Aligned (offset-0) scratch store.
    y1_ref[:, :L1p] = jnp.maximum(acc1 + b1_ref[...], 0.0) * m_ref[0]

    # ---- conv2 (3x3, zero pad) + folded BN2 + ReLU on the TH output rows ----
    acc2 = jnp.dot(w2_ref[0], y1_ref[:, 0:L2],
                   preferred_element_type=jnp.float32)
    for k in range(1, 9):
        off = (k // 3) * Wp + (k % 3)
        acc2 = acc2 + jnp.dot(w2_ref[k], y1_ref[:, off:off + L2],
                              preferred_element_type=jnp.float32)
    o_ref[0, 0] = jnp.maximum(acc2 + b2_ref[...], 0.0).astype(o_ref.dtype)


# ---------------------------------------------------------------------------
# Row-tile chooser: largest divisor of H whose working set fits a VMEM budget.
# ---------------------------------------------------------------------------
def _pick_row_tile(H, W, c_in, c_mid, c_out, budget_bytes=12 * 2**20):
    Wp = W + 2
    up8 = lambda c: -(-c // 8) * 8          # sublane padding
    up128 = lambda l: -(-l // 128) * 128    # lane padding

    def est_bytes(th):
        l1p = (th + 2) * Wp + 1
        l2 = th * Wp
        wlen1 = (th + 5) * Wp + 1
        elems = (2 * (up8(c_in) * up128(wlen1)            # input window (x2 bufs)
                      + up128(l1p)                        # mask
                      + up8(c_out) * up128(l2))           # output
                 + up8(c_mid) * up128(l1p + 1)            # scratch
                 + 2 * 9 * (up8(c_mid) * up128(c_in)      # weights
                            + up8(c_out) * up128(c_mid)))
        return 4 * elems

    best = None
    for th in range(1, H + 1):
        if H % th == 0 and est_bytes(th) <= budget_bytes:
            best = th
    return best if best is not None else 1


# ---------------------------------------------------------------------------
# Wrapper: BN folding, padding / window gathering, pallas_call plumbing.
# ---------------------------------------------------------------------------
def double_conv_pallas(x, p, row_tile=None):
    B, C_in, H, W = x.shape
    C_mid = p["w1"].shape[0]
    C_out = p["w2"].shape[0]
    Wp = W + 2

    if row_tile is not None and H % row_tile == 0:
        TH = row_tile
    else:
        TH = _pick_row_tile(H, W, C_in, C_mid, C_out)
    n_tiles = H // TH

    L1p = (TH + 2) * Wp + 1
    L2 = TH * Wp
    WLEN1 = (TH + 5) * Wp + 1

    # ---- fold eval-mode BatchNorm into conv weights / bias ------------------
    s1 = p["g1"] / jnp.sqrt(p["v1"] + EPS)
    s2 = p["g2"] / jnp.sqrt(p["v2"] + EPS)
    w1_eff = p["w1"] * s1[:, None, None, None]
    w2_eff = p["w2"] * s2[:, None, None, None]
    b1_eff = (p["bt1"] - p["m1"] * s1).reshape(C_mid, 1)
    b2_eff = (p["bt2"] - p["m2"] * s2).reshape(C_out, 1)
    w1_taps = jnp.transpose(w1_eff, (2, 3, 0, 1)).reshape(9, C_mid, C_in)
    w2_taps = jnp.transpose(w2_eff, (2, 3, 0, 1)).reshape(9, C_out, C_mid)

    # ---- zero-pad spatially (NCHW kept), flatten rows, prepend 1 zero elem,
    #      gather per-tile windows --------------------------------------------
    xpad = jnp.pad(x, ((0, 0), (0, 0), (2, 3), (1, 1)))
    xflat = xpad.reshape(B, C_in, (H + 5) * Wp)
    xflat = jnp.pad(xflat, ((0, 0), (0, 0), (1, 0)))
    windows = jnp.stack(
        [xflat[:, :, t * L2: t * L2 + WLEN1] for t in range(n_tiles)], axis=1)
    # windows: (B, n_tiles, C_in, WLEN1)

    # ---- per-tile validity mask for the intermediate ------------------------
    q = jnp.arange(n_tiles)[:, None] * TH - 1 + jnp.arange(TH + 2)[None, :]
    row_ok = (q >= 0) & (q < H)                    # (n_tiles, TH+2)
    col_ok = jnp.arange(Wp) < W                    # (Wp,)
    mask = (row_ok[:, :, None] & col_ok[None, None, :]).astype(jnp.float32)
    mask = mask.reshape(n_tiles, 1, L1p - 1)
    mask = jnp.pad(mask, ((0, 0), (0, 0), (1, 0)))  # leading (junk) position

    kernel = functools.partial(_double_conv_kernel, TH=TH, Wp=Wp)
    flops = int(2 * 9 * B * H * W * (C_in * C_mid + C_mid * C_out))
    bytes_accessed = int(4 * (windows.size + B * n_tiles * C_out * L2
                              + w1_taps.size + w2_taps.size + mask.size))

    out = pl.pallas_call(
        kernel,
        out_shape=jax.ShapeDtypeStruct((B, n_tiles, C_out, L2), jnp.float32),
        grid_spec=pltpu.PrefetchScalarGridSpec(
            num_scalar_prefetch=0,
            grid=(B, n_tiles),
            in_specs=[
                pl.BlockSpec((1, 1, C_in, WLEN1), lambda b, t: (b, t, 0, 0)),
                pl.BlockSpec((9, C_mid, C_in), lambda b, t: (0, 0, 0)),
                pl.BlockSpec((C_mid, 1), lambda b, t: (0, 0)),
                pl.BlockSpec((1, 1, L1p), lambda b, t: (t, 0, 0)),
                pl.BlockSpec((9, C_out, C_mid), lambda b, t: (0, 0, 0)),
                pl.BlockSpec((C_out, 1), lambda b, t: (0, 0)),
            ],
            out_specs=pl.BlockSpec((1, 1, C_out, L2),
                                   lambda b, t: (b, t, 0, 0)),
            scratch_shapes=[pltpu.VMEM((C_mid, L1p + 1), jnp.float32)],
        ),
        compiler_params=pltpu.CompilerParams(
            dimension_semantics=("parallel", "parallel"),
            vmem_limit_bytes=32 * 1024 * 1024),
        cost_estimate=pl.CostEstimate(flops=flops, transcendentals=0,
                                      bytes_accessed=bytes_accessed),
    )(windows, w1_taps, b1_eff, mask, w2_taps, b2_eff)

    # ---- reassemble row tiles -> (B, C_out, H, W); drop wrap columns --------
    out = out.reshape(B, n_tiles, C_out, TH, Wp)
    out = jnp.transpose(out, (0, 2, 1, 3, 4)).reshape(B, C_out, H, Wp)
    return out[:, :, :, :W]


# ---------------------------------------------------------------------------
# Pure-JAX reference (NCHW, unfolded BN) for verification.
# ---------------------------------------------------------------------------
def double_conv_ref(x, p):
    def conv(z, w):
        return jax.lax.conv_general_dilated(
            z, w, window_strides=(1, 1), padding=((1, 1), (1, 1)),
            dimension_numbers=("NCHW", "OIHW", "NCHW"),
            precision=jax.lax.Precision.HIGHEST)

    def bn(z, g, b, m, v):
        return ((z - m[None, :, None, None])
                / jnp.sqrt(v[None, :, None, None] + EPS)
                * g[None, :, None, None] + b[None, :, None, None])

    h = jnp.maximum(bn(conv(x, p["w1"]), p["g1"], p["bt1"], p["m1"], p["v1"]),
                    0.0)
    return jnp.maximum(bn(conv(h, p["w2"]), p["g2"], p["bt2"], p["m2"],
                          p["v2"]), 0.0)


# ---------------------------------------------------------------------------
# Deterministic synthetic parameters.
# ---------------------------------------------------------------------------
def init_params(key, c_in, c_out, c_mid=None):
    c_mid = c_mid or c_out
    ks = jax.random.split(key, 10)
    n = lambda k, s: 0.2 * jax.random.normal(k, s, jnp.float32)
    return {
        "w1": n(ks[0], (c_mid, c_in, 3, 3)),
        "g1": 1.0 + n(ks[1], (c_mid,)), "bt1": n(ks[2], (c_mid,)),
        "m1": n(ks[3], (c_mid,)), "v1": 0.5 + jnp.abs(n(ks[4], (c_mid,))),
        "w2": n(ks[5], (c_out, c_mid, 3, 3)),
        "g2": 1.0 + n(ks[6], (c_out,)), "bt2": n(ks[7], (c_out,)),
        "m2": n(ks[8], (c_out,)), "v2": 0.5 + jnp.abs(n(ks[9], (c_out,))),
    }


if __name__ == "__main__":
    key = jax.random.PRNGKey(0)
    kx, kp = jax.random.split(key)

    B, C_in, C_out, H, W = 2, 4, 8, 16, 16          # DoubleConv(4, 8)
    x = jax.random.normal(kx, (B, C_in, H, W), jnp.float32)
    params = init_params(kp, C_in, C_out)

    out = jax.jit(double_conv_pallas)(x, params)
    out = jax.block_until_ready(out)

    ref = double_conv_ref(x, params)
    assert out.shape == (B, C_out, H, W)
    np.testing.assert_allclose(np.asarray(out), np.asarray(ref),
                               atol=1e-4, rtol=1e-4)
    print("KERNEL_OK")
</pallas_src>

<mosaic_0001>
module attributes {stable_mosaic.version = 11 : i64} {
  func.func @_double_conv_kernel(%arg0: i32, %arg1: i32, %arg2: memref<1x1x4x379xf32, #tpu.memory_space<vmem>>, %arg3: memref<9x8x4xf32, #tpu.memory_space<vmem>>, %arg4: memref<8x1xf32, #tpu.memory_space<vmem>>, %arg5: memref<1x1x325xf32, #tpu.memory_space<vmem>>, %arg6: memref<9x8x8xf32, #tpu.memory_space<vmem>>, %arg7: memref<8x1xf32, #tpu.memory_space<vmem>>, %arg8: memref<1x1x8x288xf32, #tpu.memory_space<vmem>>, %arg9: memref<8x326xf32, #tpu.memory_space<vmem>>) attributes {dimension_semantics = [#tpu.dimension_semantics<parallel>, #tpu.dimension_semantics<parallel>], iteration_bounds = array<i64: 2, 1>, scalar_prefetch = 0 : i64, scratch_operands = 1 : i64, tpu.core_type = #tpu.core_type<tc>, window_params = [{transform_indices = @transform_0, window_bounds = array<i64: 1, 1, 4, 379>}, {pipeline_mode = #tpu.pipeline_mode<synchronous>, transform_indices = @transform_1, window_bounds = array<i64: 9, 8, 4>}, {pipeline_mode = #tpu.pipeline_mode<synchronous>, transform_indices = @transform_2, window_bounds = array<i64: 8, 1>}, {transform_indices = @transform_3, window_bounds = array<i64: 1, 1, 325>}, {pipeline_mode = #tpu.pipeline_mode<synchronous>, transform_indices = @transform_4, window_bounds = array<i64: 9, 8, 8>}, {pipeline_mode = #tpu.pipeline_mode<synchronous>, transform_indices = @transform_5, window_bounds = array<i64: 8, 1>}, {transform_indices = @transform_6, window_bounds = array<i64: 1, 1, 8, 288>}]} {
    %cst = arith.constant 0.000000e+00 : f32
    %0 = vector.broadcast %cst : f32 to vector<8x1xf32>
    %c0 = arith.constant 0 : index
    %c325 = arith.constant 325 : index
    %1 = vector.load %arg9[%c0, %c325] : memref<8x326xf32, #tpu.memory_space<vmem>>, vector<8x1xf32>
    tpu.vector_store %arg9[%c0, %c325], %0 {strides = array<i32>} : memref<8x326xf32, #tpu.memory_space<vmem>>, vector<8x1xf32>,
    %c0_0 = arith.constant 0 : index
    %c0_1 = arith.constant 0 : index
    %c0_2 = arith.constant 0 : index
    %2 = vector.load %arg3[%c0_0, %c0_1, %c0_2] : memref<9x8x4xf32, #tpu.memory_space<vmem>>, vector<1x8x4xf32>
    %3 = vector.shape_cast %2 : vector<1x8x4xf32> to vector<8x4xf32>
    %c0_3 = arith.constant 0 : index
    %c0_4 = arith.constant 0 : index
    %c0_5 = arith.constant 0 : index
    %c0_6 = arith.constant 0 : index
    %4 = vector.load %arg2[%c0_3, %c0_4, %c0_5, %c0_6] : memref<1x1x4x379xf32, #tpu.memory_space<vmem>>, vector<1x1x4x325xf32>
    %5 = vector.shape_cast %4 : vector<1x1x4x325xf32> to vector<4x325xf32>
    %cst_7 = arith.constant dense<0.000000e+00> : vector<8x325xf32>
    %6 = tpu.matmul %3, %5, %cst_7 {dimension_numbers = #tpu.dot_dimension_numbers<[1], [0], [0], [1], [0, 0, 1, 1], [], []>} : vector<8x4xf32>, vector<4x325xf32>, vector<8x325xf32> -> vector<8x325xf32>
    %c1 = arith.constant 1 : index
    %c0_8 = arith.constant 0 : index
    %c0_9 = arith.constant 0 : index
    %7 = vector.load %arg3[%c1, %c0_8, %c0_9] : memref<9x8x4xf32, #tpu.memory_space<vmem>>, vector<1x8x4xf32>
    %8 = vector.shape_cast %7 : vector<1x8x4xf32> to vector<8x4xf32>
    %c0_10 = arith.constant 0 : index
    %c0_11 = arith.constant 0 : index
    %c0_12 = arith.constant 0 : index
    %c1_13 = arith.constant 1 : index
    %9 = vector.load %arg2[%c0_10, %c0_11, %c0_12, %c1_13] : memref<1x1x4x379xf32, #tpu.memory_space<vmem>>, vector<1x1x4x325xf32>
    %10 = vector.shape_cast %9 : vector<1x1x4x325xf32> to vector<4x325xf32>
    %cst_14 = arith.constant dense<0.000000e+00> : vector<8x325xf32>
    %11 = tpu.matmul %8, %10, %cst_14 {dimension_numbers = #tpu.dot_dimension_numbers<[1], [0], [0], [1], [0, 0, 1, 1], [], []>} : vector<8x4xf32>, vector<4x325xf32>, vector<8x325xf32> -> vector<8x325xf32>
    %12 = arith.addf %6, %11 : vector<8x325xf32>
    %c2 = arith.constant 2 : index
    %c0_15 = arith.constant 0 : index
    %c0_16 = arith.constant 0 : index
    %13 = vector.load %arg3[%c2, %c0_15, %c0_16] : memref<9x8x4xf32, #tpu.memory_space<vmem>>, vector<1x8x4xf32>
    %14 = vector.shape_cast %13 : vector<1x8x4xf32> to vector<8x4xf32>
    %c0_17 = arith.constant 0 : index
    %c0_18 = arith.constant 0 : index
    %c0_19 = arith.constant 0 : index
    %c2_20 = arith.constant 2 : index
    %15 = vector.load %arg2[%c0_17, %c0_18, %c0_19, %c2_20] : memref<1x1x4x379xf32, #tpu.memory_space<vmem>>, vector<1x1x4x325xf32>
    %16 = vector.shape_cast %15 : vector<1x1x4x325xf32> to vector<4x325xf32>
    %cst_21 = arith.constant dense<0.000000e+00> : vector<8x325xf32>
    %17 = tpu.matmul %14, %16, %cst_21 {dimension_numbers = #tpu.dot_dimension_numbers<[1], [0], [0], [1], [0, 0, 1, 1], [], []>} : vector<8x4xf32>, vector<4x325xf32>, vector<8x325xf32> -> vector<8x325xf32>
    %18 = arith.addf %12, %17 : vector<8x325xf32>
    %c3 = arith.constant 3 : index
    %c0_22 = arith.constant 0 : index
    %c0_23 = arith.constant 0 : index
    %19 = vector.load %arg3[%c3, %c0_22, %c0_23] : memref<9x8x4xf32, #tpu.memory_space<vmem>>, vector<1x8x4xf32>
    %20 = vector.shape_cast %19 : vector<1x8x4xf32> to vector<8x4xf32>
    %c0_24 = arith.constant 0 : index
    %c0_25 = arith.constant 0 : index
    %c0_26 = arith.constant 0 : index
    %c18 = arith.constant 18 : index
    %21 = vector.load %arg2[%c0_24, %c0_25, %c0_26, %c18] : memref<1x1x4x379xf32, #tpu.memory_space<vmem>>, vector<1x1x4x325xf32>
    %22 = vector.shape_cast %21 : vector<1x1x4x325xf32> to vector<4x325xf32>
    %cst_27 = arith.constant dense<0.000000e+00> : vector<8x325xf32>
    %23 = tpu.matmul %20, %22, %cst_27 {dimension_numbers = #tpu.dot_dimension_numbers<[1], [0], [0], [1], [0, 0, 1, 1], [], []>} : vector<8x4xf32>, vector<4x325xf32>, vector<8x325xf32> -> vector<8x325xf32>
    %24 = arith.addf %18, %23 : vector<8x325xf32>
    %c4 = arith.constant 4 : index
    %c0_28 = arith.constant 0 : index
    %c0_29 = arith.constant 0 : index
    %25 = vector.load %arg3[%c4, %c0_28, %c0_29] : memref<9x8x4xf32, #tpu.memory_space<vmem>>, vector<1x8x4xf32>
    %26 = vector.shape_cast %25 : vector<1x8x4xf32> to vector<8x4xf32>
    %c0_30 = arith.constant 0 : index
    %c0_31 = arith.constant 0 : index
    %c0_32 = arith.constant 0 : index
    %c19 = arith.constant 19 : index
    %27 = vector.load %arg2[%c0_30, %c0_31, %c0_32, %c19] : memref<1x1x4x379xf32, #tpu.memory_space<vmem>>, vector<1x1x4x325xf32>
    %28 = vector.shape_cast %27 : vector<1x1x4x325xf32> to vector<4x325xf32>
    %cst_33 = arith.constant dense<0.000000e+00> : vector<8x325xf32>
    %29 = tpu.matmul %26, %28, %cst_33 {dimension_numbers = #tpu.dot_dimension_numbers<[1], [0], [0], [1], [0, 0, 1, 1], [], []>} : vector<8x4xf32>, vector<4x325xf32>, vector<8x325xf32> -> vector<8x325xf32>
    %30 = arith.addf %24, %29 : vector<8x325xf32>
    %c5 = arith.constant 5 : index
    %c0_34 = arith.constant 0 : index
    %c0_35 = arith.constant 0 : index
    %31 = vector.load %arg3[%c5, %c0_34, %c0_35] : memref<9x8x4xf32, #tpu.memory_space<vmem>>, vector<1x8x4xf32>
    %32 = vector.shape_cast %31 : vector<1x8x4xf32> to vector<8x4xf32>
    %c0_36 = arith.constant 0 : index
    %c0_37 = arith.constant 0 : index
    %c0_38 = arith.constant 0 : index
    %c20 = arith.constant 20 : index
    %33 = vector.load %arg2[%c0_36, %c0_37, %c0_38, %c20] : memref<1x1x4x379xf32, #tpu.memory_space<vmem>>, vector<1x1x4x325xf32>
    %34 = vector.shape_cast %33 : vector<1x1x4x325xf32> to vector<4x325xf32>
    %cst_39 = arith.constant dense<0.000000e+00> : vector<8x325xf32>
    %35 = tpu.matmul %32, %34, %cst_39 {dimension_numbers = #tpu.dot_dimension_numbers<[1], [0], [0], [1], [0, 0, 1, 1], [], []>} : vector<8x4xf32>, vector<4x325xf32>, vector<8x325xf32> -> vector<8x325xf32>
    %36 = arith.addf %30, %35 : vector<8x325xf32>
    %c6 = arith.constant 6 : index
    %c0_40 = arith.constant 0 : index
    %c0_41 = arith.constant 0 : index
    %37 = vector.load %arg3[%c6, %c0_40, %c0_41] : memref<9x8x4xf32, #tpu.memory_space<vmem>>, vector<1x8x4xf32>
    %38 = vector.shape_cast %37 : vector<1x8x4xf32> to vector<8x4xf32>
    %c0_42 = arith.constant 0 : index
    %c0_43 = arith.constant 0 : index
    %c0_44 = arith.constant 0 : index
    %c36 = arith.constant 36 : index
    %39 = vector.load %arg2[%c0_42, %c0_43, %c0_44, %c36] : memref<1x1x4x379xf32, #tpu.memory_space<vmem>>, vector<1x1x4x325xf32>
    %40 = vector.shape_cast %39 : vector<1x1x4x325xf32> to vector<4x325xf32>
    %cst_45 = arith.constant dense<0.000000e+00> : vector<8x325xf32>
    %41 = tpu.matmul %38, %40, %cst_45 {dimension_numbers = #tpu.dot_dimension_numbers<[1], [0], [0], [1], [0, 0, 1, 1], [], []>} : vector<8x4xf32>, vector<4x325xf32>, vector<8x325xf32> -> vector<8x325xf32>
    %42 = arith.addf %36, %41 : vector<8x325xf32>
    %c7 = arith.constant 7 : index
    %c0_46 = arith.constant 0 : index
    %c0_47 = arith.constant 0 : index
    %43 = vector.load %arg3[%c7, %c0_46, %c0_47] : memref<9x8x4xf32, #tpu.memory_space<vmem>>, vector<1x8x4xf32>
    %44 = vector.shape_cast %43 : vector<1x8x4xf32> to vector<8x4xf32>
    %c0_48 = arith.constant 0 : index
    %c0_49 = arith.constant 0 : index
    %c0_50 = arith.constant 0 : index
    %c37 = arith.constant 37 : index
    %45 = vector.load %arg2[%c0_48, %c0_49, %c0_50, %c37] : memref<1x1x4x379xf32, #tpu.memory_space<vmem>>, vector<1x1x4x325xf32>
    %46 = vector.shape_cast %45 : vector<1x1x4x325xf32> to vector<4x325xf32>
    %cst_51 = arith.constant dense<0.000000e+00> : vector<8x325xf32>
    %47 = tpu.matmul %44, %46, %cst_51 {dimension_numbers = #tpu.dot_dimension_numbers<[1], [0], [0], [1], [0, 0, 1, 1], [], []>} : vector<8x4xf32>, vector<4x325xf32>, vector<8x325xf32> -> vector<8x325xf32>
    %48 = arith.addf %42, %47 : vector<8x325xf32>
    %c8 = arith.constant 8 : index
    %c0_52 = arith.constant 0 : index
    %c0_53 = arith.constant 0 : index
    %49 = vector.load %arg3[%c8, %c0_52, %c0_53] : memref<9x8x4xf32, #tpu.memory_space<vmem>>, vector<1x8x4xf32>
    %50 = vector.shape_cast %49 : vector<1x8x4xf32> to vector<8x4xf32>
    %c0_54 = arith.constant 0 : index
    %c0_55 = arith.constant 0 : index
    %c0_56 = arith.constant 0 : index
    %c38 = arith.constant 38 : index
    %51 = vector.load %arg2[%c0_54, %c0_55, %c0_56, %c38] : memref<1x1x4x379xf32, #tpu.memory_space<vmem>>, vector<1x1x4x325xf32>
    %52 = vector.shape_cast %51 : vector<1x1x4x325xf32> to vector<4x325xf32>
    %cst_57 = arith.constant dense<0.000000e+00> : vector<8x325xf32>
    %53 = tpu.matmul %50, %52, %cst_57 {dimension_numbers = #tpu.dot_dimension_numbers<[1], [0], [0], [1], [0, 0, 1, 1], [], []>} : vector<8x4xf32>, vector<4x325xf32>, vector<8x325xf32> -> vector<8x325xf32>
    %54 = arith.addf %48, %53 : vector<8x325xf32>
    %c0_58 = arith.constant 0 : index
    %c0_59 = arith.constant 0 : index
    %55 = vector.load %arg4[%c0_58, %c0_59] : memref<8x1xf32, #tpu.memory_space<vmem>>, vector<8x1xf32>
    %56 = vector.broadcast %55 : vector<8x1xf32> to vector<8x325xf32>
    %57 = arith.addf %54, %56 : vector<8x325xf32>
    %cst_60 = arith.constant 0.000000e+00 : f32
    %58 = vector.broadcast %cst_60 : f32 to vector<8x325xf32>
    %59 = arith.maximumf %57, %58 : vector<8x325xf32>
    %c0_61 = arith.constant 0 : index
    %c0_62 = arith.constant 0 : index
    %c0_63 = arith.constant 0 : index
    %60 = vector.load %arg5[%c0_61, %c0_62, %c0_63] : memref<1x1x325xf32, #tpu.memory_space<vmem>>, vector<1x1x325xf32>
    %61 = vector.shape_cast %60 : vector<1x1x325xf32> to vector<1x325xf32>
    %62 = vector.broadcast %61 : vector<1x325xf32> to vector<8x325xf32>
    %63 = arith.mulf %59, %62 : vector<8x325xf32>
    %c0_64 = arith.constant 0 : index
    %c0_65 = arith.constant 0 : index
    %64 = vector.load %arg9[%c0_64, %c0_65] : memref<8x326xf32, #tpu.memory_space<vmem>>, vector<8x325xf32>
    tpu.vector_store %arg9[%c0_64, %c0_65], %63 {strides = array<i32>} : memref<8x326xf32, #tpu.memory_space<vmem>>, vector<8x325xf32>,
    %c0_66 = arith.constant 0 : index
    %c0_67 = arith.constant 0 : index
    %c0_68 = arith.constant 0 : index
    %65 = vector.load %arg6[%c0_66, %c0_67, %c0_68] : memref<9x8x8xf32, #tpu.memory_space<vmem>>, vector<1x8x8xf32>
    %66 = vector.shape_cast %65 : vector<1x8x8xf32> to vector<8x8xf32>
    %c0_69 = arith.constant 0 : index
    %c0_70 = arith.constant 0 : index
    %67 = vector.load %arg9[%c0_69, %c0_70] : memref<8x326xf32, #tpu.memory_space<vmem>>, vector<8x288xf32>
    %cst_71 = arith.constant dense<0.000000e+00> : vector<8x288xf32>
    %68 = tpu.matmul %66, %67, %cst_71 {dimension_numbers = #tpu.dot_dimension_numbers<[1], [0], [0], [1], [0, 0, 1, 1], [], []>} : vector<8x8xf32>, vector<8x288xf32>, vector<8x288xf32> -> vector<8x288xf32>
    %c1_72 = arith.constant 1 : index
    %c0_73 = arith.constant 0 : index
    %c0_74 = arith.constant 0 : index
    %69 = vector.load %arg6[%c1_72, %c0_73, %c0_74] : memref<9x8x8xf32, #tpu.memory_space<vmem>>, vector<1x8x8xf32>
    %70 = vector.shape_cast %69 : vector<1x8x8xf32> to vector<8x8xf32>
    %c0_75 = arith.constant 0 : index
    %c1_76 = arith.constant 1 : index
    %71 = vector.load %arg9[%c0_75, %c1_76] : memref<8x326xf32, #tpu.memory_space<vmem>>, vector<8x288xf32>
    %cst_77 = arith.constant dense<0.000000e+00> : vector<8x288xf32>
    %72 = tpu.matmul %70, %71, %cst_77 {dimension_numbers = #tpu.dot_dimension_numbers<[1], [0], [0], [1], [0, 0, 1, 1], [], []>} : vector<8x8xf32>, vector<8x288xf32>, vector<8x288xf32> -> vector<8x288xf32>
    %73 = arith.addf %68, %72 : vector<8x288xf32>
    %c2_78 = arith.constant 2 : index
    %c0_79 = arith.constant 0 : index
    %c0_80 = arith.constant 0 : index
    %74 = vector.load %arg6[%c2_78, %c0_79, %c0_80] : memref<9x8x8xf32, #tpu.memory_space<vmem>>, vector<1x8x8xf32>
    %75 = vector.shape_cast %74 : vector<1x8x8xf32> to vector<8x8xf32>
    %c0_81 = arith.constant 0 : index
    %c2_82 = arith.constant 2 : index
    %76 = vector.load %arg9[%c0_81, %c2_82] : memref<8x326xf32, #tpu.memory_space<vmem>>, vector<8x288xf32>
    %cst_83 = arith.constant dense<0.000000e+00> : vector<8x288xf32>
    %77 = tpu.matmul %75, %76, %cst_83 {dimension_numbers = #tpu.dot_dimension_numbers<[1], [0], [0], [1], [0, 0, 1, 1], [], []>} : vector<8x8xf32>, vector<8x288xf32>, vector<8x288xf32> -> vector<8x288xf32>
    %78 = arith.addf %73, %77 : vector<8x288xf32>
    %c3_84 = arith.constant 3 : index
    %c0_85 = arith.constant 0 : index
    %c0_86 = arith.constant 0 : index
    %79 = vector.load %arg6[%c3_84, %c0_85, %c0_86] : memref<9x8x8xf32, #tpu.memory_space<vmem>>, vector<1x8x8xf32>
    %80 = vector.shape_cast %79 : vector<1x8x8xf32> to vector<8x8xf32>
    %c0_87 = arith.constant 0 : index
    %c18_88 = arith.constant 18 : index
    %81 = vector.load %arg9[%c0_87, %c18_88] : memref<8x326xf32, #tpu.memory_space<vmem>>, vector<8x288xf32>
    %cst_89 = arith.constant dense<0.000000e+00> : vector<8x288xf32>
    %82 = tpu.matmul %80, %81, %cst_89 {dimension_numbers = #tpu.dot_dimension_numbers<[1], [0], [0], [1], [0, 0, 1, 1], [], []>} : vector<8x8xf32>, vector<8x288xf32>, vector<8x288xf32> -> vector<8x288xf32>
    %83 = arith.addf %78, %82 : vector<8x288xf32>
    %c4_90 = arith.constant 4 : index
    %c0_91 = arith.constant 0 : index
    %c0_92 = arith.constant 0 : index
    %84 = vector.load %arg6[%c4_90, %c0_91, %c0_92] : memref<9x8x8xf32, #tpu.memory_space<vmem>>, vector<1x8x8xf32>
    %85 = vector.shape_cast %84 : vector<1x8x8xf32> to vector<8x8xf32>
    %c0_93 = arith.constant 0 : index
    %c19_94 = arith.constant 19 : index
    %86 = vector.load %arg9[%c0_93, %c19_94] : memref<8x326xf32, #tpu.memory_space<vmem>>, vector<8x288xf32>
    %cst_95 = arith.constant dense<0.000000e+00> : vector<8x288xf32>
    %87 = tpu.matmul %85, %86, %cst_95 {dimension_numbers = #tpu.dot_dimension_numbers<[1], [0], [0], [1], [0, 0, 1, 1], [], []>} : vector<8x8xf32>, vector<8x288xf32>, vector<8x288xf32> -> vector<8x288xf32>
    %88 = arith.addf %83, %87 : vector<8x288xf32>
    %c5_96 = arith.constant 5 : index
    %c0_97 = arith.constant 0 : index
    %c0_98 = arith.constant 0 : index
    %89 = vector.load %arg6[%c5_96, %c0_97, %c0_98] : memref<9x8x8xf32, #tpu.memory_space<vmem>>, vector<1x8x8xf32>
    %90 = vector.shape_cast %89 : vector<1x8x8xf32> to vector<8x8xf32>
    %c0_99 = arith.constant 0 : index
    %c20_100 = arith.constant 20 : index
    %91 = vector.load %arg9[%c0_99, %c20_100] : memref<8x326xf32, #tpu.memory_space<vmem>>, vector<8x288xf32>
    %cst_101 = arith.constant dense<0.000000e+00> : vector<8x288xf32>
    %92 = tpu.matmul %90, %91, %cst_101 {dimension_numbers = #tpu.dot_dimension_numbers<[1], [0], [0], [1], [0, 0, 1, 1], [], []>} : vector<8x8xf32>, vector<8x288xf32>, vector<8x288xf32> -> vector<8x288xf32>
    %93 = arith.addf %88, %92 : vector<8x288xf32>
    %c6_102 = arith.constant 6 : index
    %c0_103 = arith.constant 0 : index
    %c0_104 = arith.constant 0 : index
    %94 = vector.load %arg6[%c6_102, %c0_103, %c0_104] : memref<9x8x8xf32, #tpu.memory_space<vmem>>, vector<1x8x8xf32>
    %95 = vector.shape_cast %94 : vector<1x8x8xf32> to vector<8x8xf32>
    %c0_105 = arith.constant 0 : index
    %c36_106 = arith.constant 36 : index
    %96 = vector.load %arg9[%c0_105, %c36_106] : memref<8x326xf32, #tpu.memory_space<vmem>>, vector<8x288xf32>
    %cst_107 = arith.constant dense<0.000000e+00> : vector<8x288xf32>
    %97 = tpu.matmul %95, %96, %cst_107 {dimension_numbers = #tpu.dot_dimension_numbers<[1], [0], [0], [1], [0, 0, 1, 1], [], []>} : vector<8x8xf32>, vector<8x288xf32>, vector<8x288xf32> -> vector<8x288xf32>
    %98 = arith.addf %93, %97 : vector<8x288xf32>
    %c7_108 = arith.constant 7 : index
    %c0_109 = arith.constant 0 : index
    %c0_110 = arith.constant 0 : index
    %99 = vector.load %arg6[%c7_108, %c0_109, %c0_110] : memref<9x8x8xf32, #tpu.memory_space<vmem>>, vector<1x8x8xf32>
    %100 = vector.shape_cast %99 : vector<1x8x8xf32> to vector<8x8xf32>
    %c0_111 = arith.constant 0 : index
    %c37_112 = arith.constant 37 : index
    %101 = vector.load %arg9[%c0_111, %c37_112] : memref<8x326xf32, #tpu.memory_space<vmem>>, vector<8x288xf32>
    %cst_113 = arith.constant dense<0.000000e+00> : vector<8x288xf32>
    %102 = tpu.matmul %100, %101, %cst_113 {dimension_numbers = #tpu.dot_dimension_numbers<[1], [0], [0], [1], [0, 0, 1, 1], [], []>} : vector<8x8xf32>, vector<8x288xf32>, vector<8x288xf32> -> vector<8x288xf32>
    %103 = arith.addf %98, %102 : vector<8x288xf32>
    %c8_114 = arith.constant 8 : index
    %c0_115 = arith.constant 0 : index
    %c0_116 = arith.constant 0 : index
    %104 = vector.load %arg6[%c8_114, %c0_115, %c0_116] : memref<9x8x8xf32, #tpu.memory_space<vmem>>, vector<1x8x8xf32>
    %105 = vector.shape_cast %104 : vector<1x8x8xf32> to vector<8x8xf32>
    %c0_117 = arith.constant 0 : index
    %c38_118 = arith.constant 38 : index
    %106 = vector.load %arg9[%c0_117, %c38_118] : memref<8x326xf32, #tpu.memory_space<vmem>>, vector<8x288xf32>
    %cst_119 = arith.constant dense<0.000000e+00> : vector<8x288xf32>
    %107 = tpu.matmul %105, %106, %cst_119 {dimension_numbers = #tpu.dot_dimension_numbers<[1], [0], [0], [1], [0, 0, 1, 1], [], []>} : vector<8x8xf32>, vector<8x288xf32>, vector<8x288xf32> -> vector<8x288xf32>
    %108 = arith.addf %103, %107 : vector<8x288xf32>
    %c0_120 = arith.constant 0 : index
    %c0_121 = arith.constant 0 : index
    %109 = vector.load %arg7[%c0_120, %c0_121] : memref<8x1xf32, #tpu.memory_space<vmem>>, vector<8x1xf32>
    %110 = vector.broadcast %109 : vector<8x1xf32> to vector<8x288xf32>
    %111 = arith.addf %108, %110 : vector<8x288xf32>
    %cst_122 = arith.constant 0.000000e+00 : f32
    %112 = vector.broadcast %cst_122 : f32 to vector<8x288xf32>
    %113 = arith.maximumf %111, %112 : vector<8x288xf32>
    %c0_123 = arith.constant 0 : index
    %c0_124 = arith.constant 0 : index
    %c0_125 = arith.constant 0 : index
    %c0_126 = arith.constant 0 : index
    %114 = vector.load %arg8[%c0_123, %c0_124, %c0_125, %c0_126] : memref<1x1x8x288xf32, #tpu.memory_space<vmem>>, vector<1x1x8x288xf32>
    %115 = vector.shape_cast %114 : vector<1x1x8x288xf32> to vector<8x288xf32>
    %116 = vector.shape_cast %113 : vector<8x288xf32> to vector<1x1x8x288xf32>
    tpu.vector_store %arg8[%c0_123, %c0_124, %c0_125, %c0_126], %116 {strides = array<i32>} : memref<1x1x8x288xf32, #tpu.memory_space<vmem>>, vector<1x1x8x288xf32>,
    return
  }
  func.func @transform_0(%arg0: i32, %arg1: i32) -> (i32, i32, i32, i32) {
    %c0_i32 = arith.constant 0 : i32
    %c0_i32_0 = arith.constant 0 : i32
    %c0_i32_1 = arith.constant 0 : i32
    return %arg0, %arg1, %c0_i32, %c0_i32_0 : i32, i32, i32, i32
  }
  func.func @transform_1(%arg0: i32, %arg1: i32) -> (i32, i32, i32) {
    %c0_i32 = arith.constant 0 : i32
    %c0_i32_0 = arith.constant 0 : i32
    %c0_i32_1 = arith.constant 0 : i32
    %c0_i32_2 = arith.constant 0 : i32
    return %c0_i32, %c0_i32_0, %c0_i32_1 : i32, i32, i32
  }
  func.func @transform_2(%arg0: i32, %arg1: i32) -> (i32, i32) {
    %c0_i32 = arith.constant 0 : i32
    %c0_i32_0 = arith.constant 0 : i32
    %c0_i32_1 = arith.constant 0 : i32
    return %c0_i32, %c0_i32_0 : i32, i32
  }
  func.func @transform_3(%arg0: i32, %arg1: i32) -> (i32, i32, i32) {
    %c0_i32 = arith.constant 0 : i32
    %c0_i32_0 = arith.constant 0 : i32
    %c0_i32_1 = arith.constant 0 : i32
    return %arg1, %c0_i32, %c0_i32_0 : i32, i32, i32
  }
  func.func @transform_4(%arg0: i32, %arg1: i32) -> (i32, i32, i32) {
    %c0_i32 = arith.constant 0 : i32
    %c0_i32_0 = arith.constant 0 : i32
    %c0_i32_1 = arith.constant 0 : i32
    %c0_i32_2 = arith.constant 0 : i32
    return %c0_i32, %c0_i32_0, %c0_i32_1 : i32, i32, i32
  }
  func.func @transform_5(%arg0: i32, %arg1: i32) -> (i32, i32) {
    %c0_i32 = arith.constant 0 : i32
    %c0_i32_0 = arith.constant 0 : i32
    %c0_i32_1 = arith.constant 0 : i32
    return %c0_i32, %c0_i32_0 : i32, i32
  }
  func.func @transform_6(%arg0: i32, %arg1: i32) -> (i32, i32, i32, i32) {
    %c0_i32 = arith.constant 0 : i32
    %c0_i32_0 = arith.constant 0 : i32
    %c0_i32_1 = arith.constant 0 : i32
    return %arg0, %arg1, %c0_i32, %c0_i32_0 : i32, i32, i32, i32
  }
}

</mosaic_0001>

<llo_original>
// kernel: double_conv_pallas.1
$region0: #{double_conv_pallas.1}
  #allocation0 [shape = 'u32[]', space=smem, size = 0x4, offset = 0x4, fixed_abs, tag = 'smem constant byte address 0x4 - core index']
  #allocation1 [shape = 'u32[144,128]{1,0:T(1,128)}', space=vmem, size = 0x12000, scoped, tag = 'internal scratch']
  #allocation2 [shape = 'f32[8,326]{1,0:T(8,128)}', space=vmem, size = 0x3000, scoped, tag = 'scratch operand']
  %s0 = inlined_call_operand.vmem [shape: f32[2,1,4,379], index: 0, kind: input, shape index: {}]
  %s1 = inlined_call_operand.vmem [shape: f32[9,8,4], index: 1, kind: input, shape index: {}]
  %s2 = inlined_call_operand.vmem [shape: f32[8,1], index: 2, kind: input, shape index: {}]
  %s3 = inlined_call_operand.vmem [shape: f32[1,1,325], index: 3, kind: input, shape index: {}]
  %s4 = inlined_call_operand.vmem [shape: f32[9,8,8], index: 4, kind: input, shape index: {}]
  %s5 = inlined_call_operand.vmem [shape: f32[8,1], index: 5, kind: input, shape index: {}]
  %s6 = inlined_call_operand.vmem [shape: f32[2,1,8,288], index: 6, kind: output, shape index: {}]
  %s7 = sld [smem:[#allocation0]]
  $region57: #{double_conv_pallas.1} parent=0
    _
  %s9 = ssub.s32 1, %s7
  %s10 = scalar_select 0, %s9, %s7
  loop: start=0, step=1, limit=4
  $region2: #{double_conv_pallas.1} parent=0 // loop_pre_header
    _
  $region3: #{double_conv_pallas.1} parent=0 // loop_header
    %s12 = sphi 0, %s16
    %p13 = scmp.ge.s32.totalorder %s12, 4
    %s19 = sphi 0, %s31
    %s20 = sphi 0, %s27
    %s21 = sphi 0, %s19
    %s22 = sphi 0, %s20
    %s23 = sphi 0, %s21
    %s24 = sphi 0, %s22
    %s36 = sphi 0, %s38
    %s39 = sphi 0, %s36
    %s40 = sphi 0, %s39
    %s56 = sphi 0, %s40
    %s60 = sphi 0, %s60
    %s62 = sphi 0, %s60
    %s63 = sphi 0, %s62
    %s77 = sphi 0, %s63
    %s81 = sphi 0, %s81
    %s83 = sphi 0, %s81
    %s84 = sphi 0, %s83
    %s98 = sphi 0, %s84
    %s104 = sphi 0, %s106
    %s107 = sphi 0, %s104
    %s108 = sphi 0, %s107
    %s124 = sphi 0, %s108
    %s128 = sphi 0, %s128
    %s130 = sphi 0, %s128
    %s131 = sphi 0, %s130
    %s145 = sphi 0, %s131
    %s149 = sphi 0, %s149
    %s151 = sphi 0, %s149
    %s152 = sphi 0, %s151
    %s166 = sphi 0, %s152
    %s174 = sphi 0, %s176
    %s177 = sphi 0, %s174
    %s178 = sphi 0, %s177
    %s194 = sphi 0, %s178
  $region4: #{double_conv_pallas.1} parent=0 // loop_header_branch
    %15 = sbr.rel (%p13) target = $region8
  $region5: #{double_conv_pallas.1} parent=0 // loop_body
    %s17 = ssub.s32 %s12, 1
    %s18 = ssub.s32 %s12, 2
    %s25 = sadd.s32 1, %s20
    %p26 = scmp.ge.s32.totalorder %s25, 1
    %s27 = scalar_select %p26, 0, %s25
    %s28 = sadd.s32 1, %s19
    %s29 = scalar_select %p26, %s28, %s19
    %p30 = scmp.ge.s32.totalorder %s29, 2
    %s31 = scalar_select %p30, 0, %s29
    %s32 = ssub.s32 %s19, %s31
    %s33 = ssub.s32 %s20, %s27
    %s34 = sor.u32 %s32, %s33
    %p35 = scmp.eq.s32.totalorder %s34, 0
    %s37 = sadd.s32 %s36, 1
    %s38 = scalar_select %p35, %s36, %s37
    %p41 = pneg %p35
    %p42 = scmp.eq.s32.totalorder %s12, 1
    %p43 = por %p41, %p42
    %p44 = scmp.ne.s32.totalorder %s36, %s39
    %p45 = scmp.eq.s32.totalorder %s12, 0
    %p46 = por %p44, %p45
    %p47 = scmp.ne.s32.totalorder %s36, %s39
    %p48 = scmp.eq.s32.totalorder %s17, 1
    %p49 = por %p47, %p48
    %p50 = scmp.ne.s32.totalorder %s39, %s40
    %p51 = scmp.eq.s32.totalorder %s17, 0
    %p52 = por %p50, %p51
    %p53 = scmp.ne.s32.totalorder %s39, %s40
    %p54 = scmp.eq.s32.totalorder %s18, 1
    %p55 = por %p53, %p54
    %p57 = scmp.ne.s32.totalorder %s40, %s56
    %p58 = scmp.eq.s32.totalorder %s18, 0
    %p59 = por %p57, %p58
    %s61 = sadd.s32 %s60, 1
    %p64 = scmp.eq.s32.totalorder %s12, 1
    %p65 = scmp.ne.s32.totalorder %s60, %s62
    %p66 = scmp.eq.s32.totalorder %s12, 0
    %p67 = por %p65, %p66
    %p68 = scmp.ne.s32.totalorder %s60, %s62
    %p69 = scmp.eq.s32.totalorder %s17, 1
    %p70 = por %p68, %p69
    %p71 = scmp.ne.s32.totalorder %s62, %s63
    %p72 = scmp.eq.s32.totalorder %s17, 0
    %p73 = por %p71, %p72
    %p74 = scmp.ne.s32.totalorder %s62, %s63
    %p75 = scmp.eq.s32.totalorder %s18, 1
    %p76 = por %p74, %p75
    %p78 = scmp.ne.s32.totalorder %s63, %s77
    %p79 = scmp.eq.s32.totalorder %s18, 0
    %p80 = por %p78, %p79
    %s82 = sadd.s32 %s81, 1
    %p85 = scmp.eq.s32.totalorder %s12, 1
    %p86 = scmp.ne.s32.totalorder %s81, %s83
    %p87 = scmp.eq.s32.totalorder %s12, 0
    %p88 = por %p86, %p87
    %p89 = scmp.ne.s32.totalorder %s81, %s83
    %p90 = scmp.eq.s32.totalorder %s17, 1
    %p91 = por %p89, %p90
    %p92 = scmp.ne.s32.totalorder %s83, %s84
    %p93 = scmp.eq.s32.totalorder %s17, 0
    %p94 = por %p92, %p93
    %p95 = scmp.ne.s32.totalorder %s83, %s84
    %p96 = scmp.eq.s32.totalorder %s18, 1
    %p97 = por %p95, %p96
    %p99 = scmp.ne.s32.totalorder %s84, %s98
    %p100 = scmp.eq.s32.totalorder %s18, 0
    %p101 = por %p99, %p100
    %s102 = ssub.s32 %s20, %s27
    %p103 = scmp.eq.s32.totalorder %s102, 0
    %s105 = sadd.s32 %s104, 1
    %s106 = scalar_select %p103, %s104, %s105
    %p109 = pneg %p103
    %p110 = scmp.eq.s32.totalorder %s12, 1
    %p111 = por %p109, %p110
    %p112 = scmp.ne.s32.totalorder %s104, %s107
    %p113 = scmp.eq.s32.totalorder %s12, 0
    %p114 = por %p112, %p113
    %p115 = scmp.ne.s32.totalorder %s104, %s107
    %p116 = scmp.eq.s32.totalorder %s17, 1
    %p117 = por %p115, %p116
    %p118 = scmp.ne.s32.totalorder %s107, %s108
    %p119 = scmp.eq.s32.totalorder %s17, 0
    %p120 = por %p118, %p119
    %p121 = scmp.ne.s32.totalorder %s107, %s108
    %p122 = scmp.eq.s32.totalorder %s18, 1
    %p123 = por %p121, %p122
    %p125 = scmp.ne.s32.totalorder %s108, %s124
    %p126 = scmp.eq.s32.totalorder %s18, 0
    %p127 = por %p125, %p126
    %s129 = sadd.s32 %s128, 1
    %p132 = scmp.eq.s32.totalorder %s12, 1
    %p133 = scmp.ne.s32.totalorder %s128, %s130
    %p134 = scmp.eq.s32.totalorder %s12, 0
    %p135 = por %p133, %p134
    %p136 = scmp.ne.s32.totalorder %s128, %s130
    %p137 = scmp.eq.s32.totalorder %s17, 1
    %p138 = por %p136, %p137
    %p139 = scmp.ne.s32.totalorder %s130, %s131
    %p140 = scmp.eq.s32.totalorder %s17, 0
    %p141 = por %p139, %p140
    %p142 = scmp.ne.s32.totalorder %s130, %s131
    %p143 = scmp.eq.s32.totalorder %s18, 1
    %p144 = por %p142, %p143
    %p146 = scmp.ne.s32.totalorder %s131, %s145
    %p147 = scmp.eq.s32.totalorder %s18, 0
    %p148 = por %p146, %p147
    %s150 = sadd.s32 %s149, 1
    %p153 = scmp.eq.s32.totalorder %s12, 1
    %p154 = scmp.ne.s32.totalorder %s149, %s151
    %p155 = scmp.eq.s32.totalorder %s12, 0
    %p156 = por %p154, %p155
    %p157 = scmp.ne.s32.totalorder %s149, %s151
    %p158 = scmp.eq.s32.totalorder %s17, 1
    %p159 = por %p157, %p158
    %p160 = scmp.ne.s32.totalorder %s151, %s152
    %p161 = scmp.eq.s32.totalorder %s17, 0
    %p162 = por %p160, %p161
    %p163 = scmp.ne.s32.totalorder %s151, %s152
    %p164 = scmp.eq.s32.totalorder %s18, 1
    %p165 = por %p163, %p164
    %p167 = scmp.ne.s32.totalorder %s152, %s166
    %p168 = scmp.eq.s32.totalorder %s18, 0
    %p169 = por %p167, %p168
    %s170 = ssub.s32 %s19, %s31
    %s171 = ssub.s32 %s20, %s27
    %s172 = sor.u32 %s170, %s171
    %p173 = scmp.eq.s32.totalorder %s172, 0
    %s175 = sadd.s32 %s174, 1
    %s176 = scalar_select %p173, %s174, %s175
    %p179 = pneg %p173
    %p180 = scmp.eq.s32.totalorder %s12, 1
    %p181 = por %p179, %p180
    %p182 = scmp.ne.s32.totalorder %s174, %s177
    %p183 = scmp.eq.s32.totalorder %s12, 0
    %p184 = por %p182, %p183
    %p185 = scmp.ne.s32.totalorder %s174, %s177
    %p186 = scmp.eq.s32.totalorder %s17, 1
    %p187 = por %p185, %p186
    %p188 = scmp.ne.s32.totalorder %s177, %s178
    %p189 = scmp.eq.s32.totalorder %s17, 0
    %p190 = por %p188, %p189
    %p191 = scmp.ne.s32.totalorder %s177, %s178
    %p192 = scmp.eq.s32.totalorder %s18, 1
    %p193 = por %p191, %p192
    %p195 = scmp.ne.s32.totalorder %s178, %s194
    %p196 = scmp.eq.s32.totalorder %s18, 0
    %p197 = por %p195, %p196
    %p198 = scmp.le.s32.totalorder 1, %s12
    %p199 = scmp.lt.s32.totalorder %s12, 3
    %p200 = pnand %p198, %p199
    %p201 = pneg %p200
    // Predicated region
    $region9: #{double_conv_pallas.1} parent=5 // pred_check
      _
    $region10: #{double_conv_pallas.1} parent=5 // pred_check_branch
      %203 = sbr.rel (%p200) target = $region12
    $region11: #{double_conv_pallas.1} parent=5 // pred_region
      %s204 = ssub.s32 %s12, 1
      // Predicated region
      $region13: #{double_conv_pallas.1} parent=11 // pred_check
        %p205 = pneg %p73
      $region14: #{double_conv_pallas.1} parent=11 // pred_check_branch
        %207 = sbr.rel (%p205) target = $region16
      $region15: #{double_conv_pallas.1} parent=11 // pred_region
        _
      $region16: #{double_conv_pallas.1} parent=11 // pred_fallthru
        _
      // Predicated region
      $region17: #{double_conv_pallas.1} parent=11 // pred_check
        %p208 = pneg %p94
      $region18: #{double_conv_pallas.1} parent=11 // pred_check_branch
        %210 = sbr.rel (%p208) target = $region20
      $region19: #{double_conv_pallas.1} parent=11 // pred_region
        _
      $region20: #{double_conv_pallas.1} parent=11 // pred_fallthru
        _
      // Predicated region
      $region21: #{double_conv_pallas.1} parent=11 // pred_check
        %p211 = pneg %p120
      $region22: #{double_conv_pallas.1} parent=11 // pred_check_branch
        %213 = sbr.rel (%p211) target = $region24
      $region23: #{double_conv_pallas.1} parent=11 // pred_region
        %p214 = scmp.lt.s32.totalorder %s22, 0
        %s215 = scalar_select %p214, %s22, 0
        %s216 = smul.addr %s215, 3
        %s217 = scalar_lea.vmem %s3, %s216
      $region24: #{double_conv_pallas.1} parent=11 // pred_fallthru
        _
      // Predicated region
      $region25: #{double_conv_pallas.1} parent=11 // pred_check
        %p218 = pneg %p141
      $region26: #{double_conv_pallas.1} parent=11 // pred_check_branch
        %220 = sbr.rel (%p218) target = $region28
      $region27: #{double_conv_pallas.1} parent=11 // pred_region
        _
      $region28: #{double_conv_pallas.1} parent=11 // pred_fallthru
        _
      // Predicated region
      $region29: #{double_conv_pallas.1} parent=11 // pred_check
        %p221 = pneg %p162
      $region30: #{double_conv_pallas.1} parent=11 // pred_check_branch
        %223 = sbr.rel (%p221) target = $region32
      $region31: #{double_conv_pallas.1} parent=11 // pred_region
        _
      $region32: #{double_conv_pallas.1} parent=11 // pred_fallthru
        _
    $region12: #{double_conv_pallas.1} parent=5 // pred_fallthru
      _
    %p224 = scmp.lt.s32.totalorder %s12, 2
    // Predicated region
    $region33: #{double_conv_pallas.1} parent=5 // pred_check
      %p225 = pneg %p224
    $region34: #{double_conv_pallas.1} parent=5 // pred_check_branch
      %227 = sbr.rel (%p225) target = $region36
    $region35: #{double_conv_pallas.1} parent=5 // pred_region
      // Predicated region
      $region37: #{double_conv_pallas.1} parent=35 // pred_check
        %p228 = pneg %p46
      $region38: #{double_conv_pallas.1} parent=35 // pred_check_branch
        %230 = sbr.rel (%p228) target = $region40
      $region39: #{double_conv_pallas.1} parent=35 // pred_region
        %p231 = scmp.lt.s32.totalorder %s19, 1
        %s232 = scalar_select %p231, %s19, 1
        %p233 = scmp.lt.s32.totalorder %s20, 0
        %s234 = scalar_select %p233, %s20, 0
        %s235 = smul.addr %s234, 3
        %s236 = smul.addr %s232, 3
        %s237 = sadd.s32 %s235, %s236
        %s238 = smul.addr %s237, 4
        %s239 = scalar_lea.vmem %s0, %s238
      $region40: #{double_conv_pallas.1} parent=35 // pred_fallthru
        _
    $region36: #{double_conv_pallas.1} parent=5 // pred_fallthru
      _
    %p240 = scmp.le.s32.totalorder 1, %s12
    %p241 = scmp.lt.s32.totalorder %s12, 3
    %p242 = pnand %p240, %p241
    %p243 = pneg %p242
    // Predicated region
    $region41: #{double_conv_pallas.1} parent=5 // pred_check
      _
    $region42: #{double_conv_pallas.1} parent=5 // pred_check_branch
      %245 = sbr.rel (%p242) target = $region44
    $region43: #{double_conv_pallas.1} parent=5 // pred_region
      %s246 = ssub.s32 %s12, 1
      %p247 = scmp.lt.s32.totalorder %s21, 1
      %s248 = scalar_select %p247, %s21, 1
      %p249 = scmp.lt.s32.totalorder %s22, 0
      %s250 = scalar_select %p249, %s22, 0
      %s251 = smul.addr %s250, 3
      %s252 = smul.addr %s248, 3
      %s253 = sadd.s32 %s251, %s252
      %s254 = smul.addr %s253, 4
      %s255 = scalar_lea.vmem %s0, %s254
      %p256 = pneg %p52
      %p257 = pneg %p49
      %p258 = pneg %p73
      %p259 = pneg %p70
      %p260 = pneg %p94
      %p261 = pneg %p91
      %p262 = scmp.lt.s32.totalorder %s22, 0
      %s263 = scalar_select %p262, %s22, 0
      %s264 = smul.addr %s263, 3
      %s265 = scalar_lea.vmem %s3, %s264
      %p266 = pneg %p120
      %p267 = pneg %p117
      %p268 = pneg %p141
      %p269 = pneg %p138
      %p270 = pneg %p162
      %p271 = pneg %p159
      %p272 = pneg %p190
      %p273 = pneg %p187
      %p274 = scmp.lt.s32.totalorder %s21, 1
      %s275 = scalar_select %p274, %s21, 1
      %p276 = scmp.lt.s32.totalorder %s22, 0
      %s277 = scalar_select %p276, %s22, 0
      %s278 = smul.addr %s277, 3
      %s279 = smul.addr %s275, 3
      %s280 = sadd.s32 %s278, %s279
      %s281 = smul.addr %s280, 8
      %s282 = scalar_lea.vmem %s6, %s281
      %p283 = scmp.lt.s32.totalorder %s21, 1
      %s284 = scalar_select %p283, %s21, 1
      %p285 = scmp.lt.s32.totalorder %s22, 0
      %s286 = scalar_select %p285, %s22, 0
      %s287 = smul.addr %s286, 3
      %s288 = smul.addr %s284, 3
      %s289 = sadd.s32 %s287, %s288
      %s290 = smul.addr %s289, 4
      %s291 = scalar_lea.vmem %s0, %s290
      %p292 = scmp.lt.s32.totalorder %s22, 0
      %s293 = scalar_select %p292, %s22, 0
      %s294 = smul.addr %s293, 3
      %s295 = scalar_lea.vmem %s3, %s294
      %p296 = scmp.lt.s32.totalorder %s21, 1
      %s297 = scalar_select %p296, %s21, 1
      %p298 = scmp.lt.s32.totalorder %s22, 0
      %s299 = scalar_select %p298, %s22, 0
      %s300 = smul.addr %s299, 3
      %s301 = smul.addr %s297, 3
      %s302 = sadd.s32 %s300, %s301
      %s303 = smul.addr %s302, 8
      %s304 = scalar_lea.vmem %s6, %s303
      %vm305 = vcmask 572968
      %306 = vst.msk [vmem:[#allocation2 + $0x10] sm:$0xff] %vm305, 0.0
      %v307 = vld [vmem:[%s1] sm:$0xff]
      %v308 = vld [vmem:[%s291] sm:$0xff]
      %v309 = vld [vmem:[%s291 + $0x8] sm:$0xf]
      %s310 = scalar_lea.vmem %s1, 8
      %v311 = vld [vmem:[%s310] sm:$0xff]
      %v314 = vcombine.high %v308, %v308
      %315 = vrot.lane.b32.xlu0 %v308, 127
      %v316 = vpop.permute.xlu0 %315
      %317 = vrot.lane.b32.xlu0 %v314, 127
      %v318 = vpop.permute.xlu0 %317
      %319 = vrot.lane.b32.xlu0 %v309, 127
      %v320 = vpop.permute.xlu0 %319
      %vm321 = vcmask 1039360
      %v322 = vsel %vm321, %v316, %v318
      %v323 = vsel %vm321, %v318, %v320
      %vm324 = vcmask 31744
      %v326 = vsel %vm324, %v311, 0
      %vm328 = vcmask 1043456
      %v329 = vsel %vm328, %v322, 0
      %v331 = vsel %vm328, %v323, 0
      %v333 = vsel %vm328, %v320, 0
      %335 = vmatprep.subr.mxu0 %v331
      %336 = vmatpush1.msra.mxu0 %v329
      %337 = vmatprep.subr.mxu0 0.0
      %338 = vmatpush1.msra.mxu0 0.0
      %339 = vmatprep.subr.mxu0 0.0
      %340 = vmatpush1.msra.mxu0 0.0
      %341 = vmatprep.subr.mxu0 0.0
      %342 = vmatpush1.msra.mxu0 0.0
      %343 = vmatprep.subr.mxu0 0.0
      %344 = vmatpush1.msra.mxu0 0.0
      %345 = vmatprep.subr.mxu0 0.0
      %346 = vmatpush1.msra.mxu0 0.0
      %347 = vmatprep.subr.mxu0 0.0
      %348 = vmatpush1.msra.mxu0 0.0
      %349 = vmatprep.subr.mxu0 0.0
      %350 = vmatpush1.msra.mxu0 0.0
      %351 = vmatprep.subr.mxu0 0.0
      %352 = vmatpush1.msra.mxu0 0.0
      %353 = vmatprep.subr.mxu0 0.0
      %354 = vmatpush1.msra.mxu0 0.0
      %355 = vmatprep.subr.mxu0 0.0
      %356 = vmatpush1.msra.mxu0 0.0
      %357 = vmatprep.subr.mxu0 0.0
      %358 = vmatpush1.msra.mxu0 0.0
      %359 = vmatprep.subr.mxu0 0.0
      %360 = vmatpush1.msra.mxu0 0.0
      %361 = vmatprep.subr.mxu0 0.0
      %362 = vmatpush1.msra.mxu0 0.0
      %363 = vmatprep.subr.mxu0 0.0
      %364 = vmatpush1.msra.mxu0 0.0
      %365 = vmatprep.subr.mxu0 0.0
      %366 = vmatpush1.msra.mxu0 0.0
      %367 = vmatprep.subr.mxu0 0.0
      %368 = vmatpush1.msra.mxu0 0.0
      %369 = vmatprep.subr.mxu0 0.0
      %370 = vmatpush1.msra.mxu0 0.0
      %371 = vmatprep.subr.mxu0 0.0
      %372 = vmatpush1.msra.mxu0 0.0
      %373 = vmatprep.subr.mxu0 0.0
      %374 = vmatpush1.msra.mxu0 0.0
      %375 = vmatprep.subr.mxu0 0.0
      %376 = vmatpush1.msra.mxu0 0.0
      %377 = vmatprep.subr.mxu0 0.0
      %378 = vmatpush1.msra.mxu0 0.0
      %379 = vmatprep.subr.mxu0 0.0
      %380 = vmatpush1.msra.mxu0 0.0
      %381 = vmatprep.subr.mxu0 0.0
      %382 = vmatpush1.msra.mxu0 0.0
      %383 = vmatprep.subr.mxu0 0.0
      %384 = vmatpush1.msra.mxu0 0.0
      %385 = vmatprep.subr.mxu0 0.0
      %386 = vmatpush1.msra.mxu0 0.0
      %387 = vmatprep.subr.mxu0 0.0
      %388 = vmatpush1.msra.mxu0 0.0
      %389 = vmatprep.subr.mxu0 0.0
      %390 = vmatpush1.msra.mxu0 0.0
      %391 = vmatprep.subr.mxu0 0.0
      %392 = vmatpush1.msra.mxu0 0.0
      %393 = vmatprep.subr.mxu0 0.0
      %394 = vmatpush1.msra.mxu0 0.0
      %395 = vmatprep.subr.mxu0 0.0
      %396 = vmatpush1.msra.mxu0 0.0
      %397 = vmatprep.subr.mxu0 0.0
      %398 = vmatpush1.msra.mxu0 0.0
      %399 = vmatprep.mubr.f32.mxu0 0.0
      %400 = vmatmul.mubr.f32.gmra.mrb[0].mxu0 %v326
      %v401 = vpop.f32.mrb[0].mxu0
      %v402 = vadd.f32 0.0, %v401
      %v403 = vpop.f32.mrb[0].mxu0
      %v404 = vadd.f32 0.0, %v403
      %405 = vdwg.mxu0
      %406 = vmatprep.subr.mxu0 0.0
      %407 = vmatpush1.msra.mxu0 %v333
      %408 = vmatprep.subr.mxu0 0.0
      %409 = vmatpush1.msra.mxu0 0.0
      %410 = vmatprep.subr.mxu0 0.0
      %411 = vmatpush1.msra.mxu0 0.0
      %412 = vmatprep.subr.mxu0 0.0
      %413 = vmatpush1.msra.mxu0 0.0
      %414 = vmatprep.subr.mxu0 0.0
      %415 = vmatpush1.msra.mxu0 0.0
      %416 = vmatprep.subr.mxu0 0.0
      %417 = vmatpush1.msra.mxu0 0.0
      %418 = vmatprep.subr.mxu0 0.0
      %419 = vmatpush1.msra.mxu0 0.0
      %420 = vmatprep.subr.mxu0 0.0
      %421 = vmatpush1.msra.mxu0 0.0
      %422 = vmatprep.subr.mxu0 0.0
      %423 = vmatpush1.msra.mxu0 0.0
      %424 = vmatprep.subr.mxu0 0.0
      %425 = vmatpush1.msra.mxu0 0.0
      %426 = vmatprep.subr.mxu0 0.0
      %427 = vmatpush1.msra.mxu0 0.0
      %428 = vmatprep.subr.mxu0 0.0
      %429 = vmatpush1.msra.mxu0 0.0
      %430 = vmatprep.subr.mxu0 0.0
      %431 = vmatpush1.msra.mxu0 0.0
      %432 = vmatprep.subr.mxu0 0.0
      %433 = vmatpush1.msra.mxu0 0.0
      %434 = vmatprep.subr.mxu0 0.0
      %435 = vmatpush1.msra.mxu0 0.0
      %436 = vmatprep.subr.mxu0 0.0
      %437 = vmatpush1.msra.mxu0 0.0
      %438 = vmatprep.subr.mxu0 0.0
      %439 = vmatpush1.msra.mxu0 0.0
      %440 = vmatprep.subr.mxu0 0.0
      %441 = vmatpush1.msra.mxu0 0.0
      %442 = vmatprep.subr.mxu0 0.0
      %443 = vmatpush1.msra.mxu0 0.0
      %444 = vmatprep.subr.mxu0 0.0
      %445 = vmatpush1.msra.mxu0 0.0
      %446 = vmatprep.subr.mxu0 0.0
      %447 = vmatpush1.msra.mxu0 0.0
      %448 = vmatprep.subr.mxu0 0.0
      %449 = vmatpush1.msra.mxu0 0.0
      %450 = vmatprep.subr.mxu0 0.0
      %451 = vmatpush1.msra.mxu0 0.0
      %452 = vmatprep.subr.mxu0 0.0
      %453 = vmatpush1.msra.mxu0 0.0
      %454 = vmatprep.subr.mxu0 0.0
      %455 = vmatpush1.msra.mxu0 0.0
      %456 = vmatprep.subr.mxu0 0.0
      %457 = vmatpush1.msra.mxu0 0.0
      %458 = vmatprep.subr.mxu0 0.0
      %459 = vmatpush1.msra.mxu0 0.0
      %460 = vmatprep.subr.mxu0 0.0
      %461 = vmatpush1.msra.mxu0 0.0
      %462 = vmatprep.subr.mxu0 0.0
      %463 = vmatpush1.msra.mxu0 0.0
      %464 = vmatprep.subr.mxu0 0.0
      %465 = vmatpush1.msra.mxu0 0.0
      %466 = vmatprep.subr.mxu0 0.0
      %467 = vmatpush1.msra.mxu0 0.0
      %468 = vmatprep.subr.mxu0 0.0
      %469 = vmatpush1.msra.mxu0 0.0
      %470 = vmatprep.mubr.f32.mxu0 0.0
      %471 = vmatmul.mubr.f32.gmra.mrb[0].mxu0 %v326
      %v472 = vpop.f32.mrb[0].mxu0
      %v473 = vadd.f32 0.0, %v472
      %v474 = vpop.f32.mrb[0].mxu0
      %475 = vdwg.mxu0
      %v477 = vsel %vm324, %v307, 0
      %v479 = vsel %vm328, %v308, 0
      %v481 = vsel %vm328, %v314, 0
      %v483 = vsel %vm328, %v309, 0
      %485 = vmatprep.subr.mxu0 %v481
      %486 = vmatpush1.msra.mxu0 %v479
      %487 = vmatprep.subr.mxu0 0.0
      %488 = vmatpush1.msra.mxu0 0.0
      %489 = vmatprep.subr.mxu0 0.0
      %490 = vmatpush1.msra.mxu0 0.0
      %491 = vmatprep.subr.mxu0 0.0
      %492 = vmatpush1.msra.mxu0 0.0
      %493 = vmatprep.subr.mxu0 0.0
      %494 = vmatpush1.msra.mxu0 0.0
      %495 = vmatprep.subr.mxu0 0.0
      %496 = vmatpush1.msra.mxu0 0.0
      %497 = vmatprep.subr.mxu0 0.0
      %498 = vmatpush1.msra.mxu0 0.0
      %499 = vmatprep.subr.mxu0 0.0
      %500 = vmatpush1.msra.mxu0 0.0
      %501 = vmatprep.subr.mxu0 0.0
      %502 = vmatpush1.msra.mxu0 0.0
      %503 = vmatprep.subr.mxu0 0.0
      %504 = vmatpush1.msra.mxu0 0.0
      %505 = vmatprep.subr.mxu0 0.0
      %506 = vmatpush1.msra.mxu0 0.0
      %507 = vmatprep.subr.mxu0 0.0
      %508 = vmatpush1.msra.mxu0 0.0
      %509 = vmatprep.subr.mxu0 0.0
      %510 = vmatpush1.msra.mxu0 0.0
      %511 = vmatprep.subr.mxu0 0.0
      %512 = vmatpush1.msra.mxu0 0.0
      %513 = vmatprep.subr.mxu0 0.0
      %514 = vmatpush1.msra.mxu0 0.0
      %515 = vmatprep.subr.mxu0 0.0
      %516 = vmatpush1.msra.mxu0 0.0
      %517 = vmatprep.subr.mxu0 0.0
      %518 = vmatpush1.msra.mxu0 0.0
      %519 = vmatprep.subr.mxu0 0.0
      %520 = vmatpush1.msra.mxu0 0.0
      %521 = vmatprep.subr.mxu0 0.0
      %522 = vmatpush1.msra.mxu0 0.0
      %523 = vmatprep.subr.mxu0 0.0
      %524 = vmatpush1.msra.mxu0 0.0
      %525 = vmatprep.subr.mxu0 0.0
      %526 = vmatpush1.msra.mxu0 0.0
      %527 = vmatprep.subr.mxu0 0.0
      %528 = vmatpush1.msra.mxu0 0.0
      %529 = vmatprep.subr.mxu0 0.0
      %530 = vmatpush1.msra.mxu0 0.0
      %531 = vmatprep.subr.mxu0 0.0
      %532 = vmatpush1.msra.mxu0 0.0
      %533 = vmatprep.subr.mxu0 0.0
      %534 = vmatpush1.msra.mxu0 0.0
      %535 = vmatprep.subr.mxu0 0.0
      %536 = vmatpush1.msra.mxu0 0.0
      %537 = vmatprep.subr.mxu0 0.0
      %538 = vmatpush1.msra.mxu0 0.0
      %539 = vmatprep.subr.mxu0 0.0
      %540 = vmatpush1.msra.mxu0 0.0
      %541 = vmatprep.subr.mxu0 0.0
      %542 = vmatpush1.msra.mxu0 0.0
      %543 = vmatprep.subr.mxu0 0.0
      %544 = vmatpush1.msra.mxu0 0.0
      %545 = vmatprep.subr.mxu0 0.0
      %546 = vmatpush1.msra.mxu0 0.0
      %547 = vmatprep.subr.mxu0 0.0
      %548 = vmatpush1.msra.mxu0 0.0
      %549 = vmatprep.mubr.f32.mxu0 0.0
      %550 = vmatmul.mubr.f32.gmra.mrb[0].mxu0 %v477
      %v551 = vpop.f32.mrb[0].mxu0
      %v552 = vadd.f32 %v402, %v551
      %v553 = vpop.f32.mrb[0].mxu0
      %v554 = vadd.f32 %v404, %v553
      %555 = vdwg.mxu0
      %556 = vmatprep.subr.mxu0 0.0
      %557 = vmatpush1.msra.mxu0 %v483
      %558 = vmatprep.subr.mxu0 0.0
      %559 = vmatpush1.msra.mxu0 0.0
      %560 = vmatprep.subr.mxu0 0.0
      %561 = vmatpush1.msra.mxu0 0.0
      %562 = vmatprep.subr.mxu0 0.0
      %563 = vmatpush1.msra.mxu0 0.0
      %564 = vmatprep.subr.mxu0 0.0
      %565 = vmatpush1.msra.mxu0 0.0
      %566 = vmatprep.subr.mxu0 0.0
      %567 = vmatpush1.msra.mxu0 0.0
      %568 = vmatprep.subr.mxu0 0.0
      %569 = vmatpush1.msra.mxu0 0.0
      %570 = vmatprep.subr.mxu0 0.0
      %571 = vmatpush1.msra.mxu0 0.0
      %572 = vmatprep.subr.mxu0 0.0
      %573 = vmatpush1.msra.mxu0 0.0
      %574 = vmatprep.subr.mxu0 0.0
      %575 = vmatpush1.msra.mxu0 0.0
      %576 = vmatprep.subr.mxu0 0.0
      %577 = vmatpush1.msra.mxu0 0.0
      %578 = vmatprep.subr.mxu0 0.0
      %579 = vmatpush1.msra.mxu0 0.0
      %580 = vmatprep.subr.mxu0 0.0
      %581 = vmatpush1.msra.mxu0 0.0
      %582 = vmatprep.subr.mxu0 0.0
      %583 = vmatpush1.msra.mxu0 0.0
      %584 = vmatprep.subr.mxu0 0.0
      %585 = vmatpush1.msra.mxu0 0.0
      %586 = vmatprep.subr.mxu0 0.0
      %587 = vmatpush1.msra.mxu0 0.0
      %588 = vmatprep.subr.mxu0 0.0
      %589 = vmatpush1.msra.mxu0 0.0
      %590 = vmatprep.subr.mxu0 0.0
      %591 = vmatpush1.msra.mxu0 0.0
      %592 = vmatprep.subr.mxu0 0.0
      %593 = vmatpush1.msra.mxu0 0.0
      %594 = vmatprep.subr.mxu0 0.0
      %595 = vmatpush1.msra.mxu0 0.0
      %596 = vmatprep.subr.mxu0 0.0
      %597 = vmatpush1.msra.mxu0 0.0
      %598 = vmatprep.subr.mxu0 0.0
      %599 = vmatpush1.msra.mxu0 0.0
      %600 = vmatprep.subr.mxu0 0.0
      %601 = vmatpush1.msra.mxu0 0.0
      %602 = vmatprep.subr.mxu0 0.0
      %603 = vmatpush1.msra.mxu0 0.0
      %604 = vmatprep.subr.mxu0 0.0
      %605 = vmatpush1.msra.mxu0 0.0
      %606 = vmatprep.subr.mxu0 0.0
      %607 = vmatpush1.msra.mxu0 0.0
      %608 = vmatprep.subr.mxu0 0.0
      %609 = vmatpush1.msra.mxu0 0.0
      %610 = vmatprep.subr.mxu0 0.0
      %611 = vmatpush1.msra.mxu0 0.0
      %612 = vmatprep.subr.mxu0 0.0
      %613 = vmatpush1.msra.mxu0 0.0
      %614 = vmatprep.subr.mxu0 0.0
      %615 = vmatpush1.msra.mxu0 0.0
      %616 = vmatprep.subr.mxu0 0.0
      %617 = vmatpush1.msra.mxu0 0.0
      %618 = vmatprep.subr.mxu0 0.0
      %619 = vmatpush1.msra.mxu0 0.0
      %620 = vmatprep.mubr.f32.mxu0 0.0
      %621 = vmatmul.mubr.f32.gmra.mrb[0].mxu0 %v477
      %v622 = vpop.f32.mrb[0].mxu0
      %v623 = vadd.f32 %v473, %v622
      %v624 = vpop.f32.mrb[0].mxu0
      %625 = vdwg.mxu0
      %s626 = scalar_lea.vmem %s1, 16
      %v627 = vld [vmem:[%s626] sm:$0xff]
      %v628 = vld [vmem:[%s291] sm:$0xff]
      %v629 = vld [vmem:[%s291 + $0x8] sm:$0xf]
      %v632 = vcombine.high %v628, %v628
      %633 = vrot.lane.b32.xlu0 %v628, 126
      %v634 = vpop.permute.xlu0 %633
      %635 = vrot.lane.b32.xlu0 %v632, 126
      %v636 = vpop.permute.xlu0 %635
      %637 = vrot.lane.b32.xlu0 %v629, 126
      %v638 = vpop.permute.xlu0 %637
      %vm639 = vcmask 1031168
      %v640 = vsel %vm639, %v634, %v636
      %v641 = vsel %vm639, %v636, %v638
      %v643 = vsel %vm324, %v627, 0
      %v645 = vsel %vm328, %v640, 0
      %v647 = vsel %vm328, %v641, 0
      %v649 = vsel %vm328, %v638, 0
      %651 = vmatprep.subr.mxu0 %v647
      %652 = vmatpush1.msra.mxu0 %v645
      %653 = vmatprep.subr.mxu0 0.0
      %654 = vmatpush1.msra.mxu0 0.0
      %655 = vmatprep.subr.mxu0 0.0
      %656 = vmatpush1.msra.mxu0 0.0
      %657 = vmatprep.subr.mxu0 0.0
      %658 = vmatpush1.msra.mxu0 0.0
      %659 = vmatprep.subr.mxu0 0.0
      %660 = vmatpush1.msra.mxu0 0.0
      %661 = vmatprep.subr.mxu0 0.0
      %662 = vmatpush1.msra.mxu0 0.0
      %663 = vmatprep.subr.mxu0 0.0
      %664 = vmatpush1.msra.mxu0 0.0
      %665 = vmatprep.subr.mxu0 0.0
      %666 = vmatpush1.msra.mxu0 0.0
      %667 = vmatprep.subr.mxu0 0.0
      %668 = vmatpush1.msra.mxu0 0.0
      %669 = vmatprep.subr.mxu0 0.0
      %670 = vmatpush1.msra.mxu0 0.0
      %671 = vmatprep.subr.mxu0 0.0
      %672 = vmatpush1.msra.mxu0 0.0
      %673 = vmatprep.subr.mxu0 0.0
      %674 = vmatpush1.msra.mxu0 0.0
      %675 = vmatprep.subr.mxu0 0.0
      %676 = vmatpush1.msra.mxu0 0.0
      %677 = vmatprep.subr.mxu0 0.0
      %678 = vmatpush1.msra.mxu0 0.0
      %679 = vmatprep.subr.mxu0 0.0
      %680 = vmatpush1.msra.mxu0 0.0
      %681 = vmatprep.subr.mxu0 0.0
      %682 = vmatpush1.msra.mxu0 0.0
      %683 = vmatprep.subr.mxu0 0.0
      %684 = vmatpush1.msra.mxu0 0.0
      %685 = vmatprep.subr.mxu0 0.0
      %686 = vmatpush1.msra.mxu0 0.0
      %687 = vmatprep.subr.mxu0 0.0
      %688 = vmatpush1.msra.mxu0 0.0
      %689 = vmatprep.subr.mxu0 0.0
      %690 = vmatpush1.msra.mxu0 0.0
      %691 = vmatprep.subr.mxu0 0.0
      %692 = vmatpush1.msra.mxu0 0.0
      %693 = vmatprep.subr.mxu0 0.0
      %694 = vmatpush1.msra.mxu0 0.0
      %695 = vmatprep.subr.mxu0 0.0
      %696 = vmatpush1.msra.mxu0 0.0
      %697 = vmatprep.subr.mxu0 0.0
      %698 = vmatpush1.msra.mxu0 0.0
      %699 = vmatprep.subr.mxu0 0.0
      %700 = vmatpush1.msra.mxu0 0.0
      %701 = vmatprep.subr.mxu0 0.0
      %702 = vmatpush1.msra.mxu0 0.0
      %703 = vmatprep.subr.mxu0 0.0
      %704 = vmatpush1.msra.mxu0 0.0
      %705 = vmatprep.subr.mxu0 0.0
      %706 = vmatpush1.msra.mxu0 0.0
      %707 = vmatprep.subr.mxu0 0.0
      %708 = vmatpush1.msra.mxu0 0.0
      %709 = vmatprep.subr.mxu0 0.0
      %710 = vmatpush1.msra.mxu0 0.0
      %711 = vmatprep.subr.mxu0 0.0
      %712 = vmatpush1.msra.mxu0 0.0
      %713 = vmatprep.subr.mxu0 0.0
      %714 = vmatpush1.msra.mxu0 0.0
      %715 = vmatprep.mubr.f32.mxu0 0.0
      %716 = vmatmul.mubr.f32.gmra.mrb[0].mxu0 %v643
      %v717 = vpop.f32.mrb[0].mxu0
      %v718 = vadd.f32 0.0, %v717
      %v719 = vpop.f32.mrb[0].mxu0
      %v720 = vadd.f32 0.0, %v719
      %721 = vdwg.mxu0
      %722 = vmatprep.subr.mxu0 0.0
      %723 = vmatpush1.msra.mxu0 %v649
      %724 = vmatprep.subr.mxu0 0.0
      %725 = vmatpush1.msra.mxu0 0.0
      %726 = vmatprep.subr.mxu0 0.0
      %727 = vmatpush1.msra.mxu0 0.0
      %728 = vmatprep.subr.mxu0 0.0
      %729 = vmatpush1.msra.mxu0 0.0
      %730 = vmatprep.subr.mxu0 0.0
      %731 = vmatpush1.msra.mxu0 0.0
      %732 = vmatprep.subr.mxu0 0.0
      %733 = vmatpush1.msra.mxu0 0.0
      %734 = vmatprep.subr.mxu0 0.0
      %735 = vmatpush1.msra.mxu0 0.0
      %736 = vmatprep.subr.mxu0 0.0
      %737 = vmatpush1.msra.mxu0 0.0
      %738 = vmatprep.subr.mxu0 0.0
      %739 = vmatpush1.msra.mxu0 0.0
      %740 = vmatprep.subr.mxu0 0.0
      %741 = vmatpush1.msra.mxu0 0.0
      %742 = vmatprep.subr.mxu0 0.0
      %743 = vmatpush1.msra.mxu0 0.0
      %744 = vmatprep.subr.mxu0 0.0
      %745 = vmatpush1.msra.mxu0 0.0
      %746 = vmatprep.subr.mxu0 0.0
      %747 = vmatpush1.msra.mxu0 0.0
      %748 = vmatprep.subr.mxu0 0.0
      %749 = vmatpush1.msra.mxu0 0.0
      %750 = vmatprep.subr.mxu0 0.0
      %751 = vmatpush1.msra.mxu0 0.0
      %752 = vmatprep.subr.mxu0 0.0
      %753 = vmatpush1.msra.mxu0 0.0
      %754 = vmatprep.subr.mxu0 0.0
      %755 = vmatpush1.msra.mxu0 0.0
      %756 = vmatprep.subr.mxu0 0.0
      %757 = vmatpush1.msra.mxu0 0.0
      %758 = vmatprep.subr.mxu0 0.0
      %759 = vmatpush1.msra.mxu0 0.0
      %760 = vmatprep.subr.mxu0 0.0
      %761 = vmatpush1.msra.mxu0 0.0
      %762 = vmatprep.subr.mxu0 0.0
      %763 = vmatpush1.msra.mxu0 0.0
      %764 = vmatprep.subr.mxu0 0.0
      %765 = vmatpush1.msra.mxu0 0.0
      %766 = vmatprep.subr.mxu0 0.0
      %767 = vmatpush1.msra.mxu0 0.0
      %768 = vmatprep.subr.mxu0 0.0
      %769 = vmatpush1.msra.mxu0 0.0
      %770 = vmatprep.subr.mxu0 0.0
      %771 = vmatpush1.msra.mxu0 0.0
      %772 = vmatprep.subr.mxu0 0.0
      %773 = vmatpush1.msra.mxu0 0.0
      %774 = vmatprep.subr.mxu0 0.0
      %775 = vmatpush1.msra.mxu0 0.0
      %776 = vmatprep.subr.mxu0 0.0
      %777 = vmatpush1.msra.mxu0 0.0
      %778 = vmatprep.subr.mxu0 0.0
      %779 = vmatpush1.msra.mxu0 0.0
      %780 = vmatprep.subr.mxu0 0.0
      %781 = vmatpush1.msra.mxu0 0.0
      %782 = vmatprep.subr.mxu0 0.0
      %783 = vmatpush1.msra.mxu0 0.0
      %784 = vmatprep.subr.mxu0 0.0
      %785 = vmatpush1.msra.mxu0 0.0
      %786 = vmatprep.mubr.f32.mxu0 0.0
      %787 = vmatmul.mubr.f32.gmra.mrb[0].mxu0 %v643
      %v788 = vpop.f32.mrb[0].mxu0
      %v789 = vadd.f32 0.0, %v788
      %v790 = vpop.f32.mrb[0].mxu0
      %791 = vdwg.mxu0
      %v792 = vadd.f32 %v552, %v718
      %v793 = vadd.f32 %v554, %v720
      %v794 = vadd.f32 %v623, %v789
      %s795 = scalar_lea.vmem %s1, 24
      %v796 = vld [vmem:[%s795] sm:$0xff]
      %v797 = vld [vmem:[%s291] sm:$0xff]
      %v798 = vld [vmem:[%s291 + $0x8] sm:$0xf]
      %v801 = vcombine.high %v797, %v797
      %802 = vrot.lane.b32.xlu0 %v797, 110
      %v803 = vpop.permute.xlu0 %802
      %804 = vrot.lane.b32.xlu0 %v801, 110
      %v805 = vpop.permute.xlu0 %804
      %806 = vrot.lane.b32.xlu0 %v798, 110
      %v807 = vpop.permute.xlu0 %806
      %vm808 = vcmask 900096
      %v809 = vsel %vm808, %v803, %v805
      %v810 = vsel %vm808, %v805, %v807
      %v812 = vsel %vm324, %v796, 0
      %v814 = vsel %vm328, %v809, 0
      %v816 = vsel %vm328, %v810, 0
      %v818 = vsel %vm328, %v807, 0
      %820 = vmatprep.subr.mxu0 %v816
      %821 = vmatpush1.msra.mxu0 %v814
      %822 = vmatprep.subr.mxu0 0.0
      %823 = vmatpush1.msra.mxu0 0.0
      %824 = vmatprep.subr.mxu0 0.0
      %825 = vmatpush1.msra.mxu0 0.0
      %826 = vmatprep.subr.mxu0 0.0
      %827 = vmatpush1.msra.mxu0 0.0
      %828 = vmatprep.subr.mxu0 0.0
      %829 = vmatpush1.msra.mxu0 0.0
      %830 = vmatprep.subr.mxu0 0.0
      %831 = vmatpush1.msra.mxu0 0.0
      %832 = vmatprep.subr.mxu0 0.0
      %833 = vmatpush1.msra.mxu0 0.0
      %834 = vmatprep.subr.mxu0 0.0
      %835 = vmatpush1.msra.mxu0 0.0
      %836 = vmatprep.subr.mxu0 0.0
      %837 = vmatpush1.msra.mxu0 0.0
      %838 = vmatprep.subr.mxu0 0.0
      %839 = vmatpush1.msra.mxu0 0.0
      %840 = vmatprep.subr.mxu0 0.0
      %841 = vmatpush1.msra.mxu0 0.0
      %842 = vmatprep.subr.mxu0 0.0
      %843 = vmatpush1.msra.mxu0 0.0
      %844 = vmatprep.subr.mxu0 0.0
      %845 = vmatpush1.msra.mxu0 0.0
      %846 = vmatprep.subr.mxu0 0.0
      %847 = vmatpush1.msra.mxu0 0.0
      %848 = vmatprep.subr.mxu0 0.0
      %849 = vmatpush1.msra.mxu0 0.0
      %850 = vmatprep.subr.mxu0 0.0
      %851 = vmatpush1.msra.mxu0 0.0
      %852 = vmatprep.subr.mxu0 0.0
      %853 = vmatpush1.msra.mxu0 0.0
      %854 = vmatprep.subr.mxu0 0.0
      %855 = vmatpush1.msra.mxu0 0.0
      %856 = vmatprep.subr.mxu0 0.0
      %857 = vmatpush1.msra.mxu0 0.0
      %858 = vmatprep.subr.mxu0 0.0
      %859 = vmatpush1.msra.mxu0 0.0
      %860 = vmatprep.subr.mxu0 0.0
      %861 = vmatpush1.msra.mxu0 0.0
      %862 = vmatprep.subr.mxu0 0.0
      %863 = vmatpush1.msra.mxu0 0.0
      %864 = vmatprep.subr.mxu0 0.0
      %865 = vmatpush1.msra.mxu0 0.0
      %866 = vmatprep.subr.mxu0 0.0
      %867 = vmatpush1.msra.mxu0 0.0
      %868 = vmatprep.subr.mxu0 0.0
      %869 = vmatpush1.msra.mxu0 0.0
      %870 = vmatprep.subr.mxu0 0.0
      %871 = vmatpush1.msra.mxu0 0.0
      %872 = vmatprep.subr.mxu0 0.0
      %873 = vmatpush1.msra.mxu0 0.0
      %874 = vmatprep.subr.mxu0 0.0
      %875 = vmatpush1.msra.mxu0 0.0
      %876 = vmatprep.subr.mxu0 0.0
      %877 = vmatpush1.msra.mxu0 0.0
      %878 = vmatprep.subr.mxu0 0.0
      %879 = vmatpush1.msra.mxu0 0.0
      %880 = vmatprep.subr.mxu0 0.0
      %881 = vmatpush1.msra.mxu0 0.0
      %882 = vmatprep.subr.mxu0 0.0
      %883 = vmatpush1.msra.mxu0 0.0
      %884 = vmatprep.mubr.f32.mxu0 0.0
      %885 = vmatmul.mubr.f32.gmra.mrb[0].mxu0 %v812
      %v886 = vpop.f32.mrb[0].mxu0
      %v887 = vadd.f32 0.0, %v886
      %v888 = vpop.f32.mrb[0].mxu0
      %v889 = vadd.f32 0.0, %v888
      %890 = vdwg.mxu0
      %891 = vmatprep.subr.mxu0 0.0
      %892 = vmatpush1.msra.mxu0 %v818
      %893 = vmatprep.subr.mxu0 0.0
      %894 = vmatpush1.msra.mxu0 0.0
      %895 = vmatprep.subr.mxu0 0.0
      %896 = vmatpush1.msra.mxu0 0.0
      %897 = vmatprep.subr.mxu0 0.0
      %898 = vmatpush1.msra.mxu0 0.0
      %899 = vmatprep.subr.mxu0 0.0
      %900 = vmatpush1.msra.mxu0 0.0
      %901 = vmatprep.subr.mxu0 0.0
      %902 = vmatpush1.msra.mxu0 0.0
      %903 = vmatprep.subr.mxu0 0.0
      %904 = vmatpush1.msra.mxu0 0.0
      %905 = vmatprep.subr.mxu0 0.0
      %906 = vmatpush1.msra.mxu0 0.0
      %907 = vmatprep.subr.mxu0 0.0
      %908 = vmatpush1.msra.mxu0 0.0
      %909 = vmatprep.subr.mxu0 0.0
      %910 = vmatpush1.msra.mxu0 0.0
      %911 = vmatprep.subr.mxu0 0.0
      %912 = vmatpush1.msra.mxu0 0.0
      %913 = vmatprep.subr.mxu0 0.0
      %914 = vmatpush1.msra.mxu0 0.0
      %915 = vmatprep.subr.mxu0 0.0
      %916 = vmatpush1.msra.mxu0 0.0
      %917 = vmatprep.subr.mxu0 0.0
      %918 = vmatpush1.msra.mxu0 0.0
      %919 = vmatprep.subr.mxu0 0.0
      %920 = vmatpush1.msra.mxu0 0.0
      %921 = vmatprep.subr.mxu0 0.0
      %922 = vmatpush1.msra.mxu0 0.0
      %923 = vmatprep.subr.mxu0 0.0
      %924 = vmatpush1.msra.mxu0 0.0
      %925 = vmatprep.subr.mxu0 0.0
      %926 = vmatpush1.msra.mxu0 0.0
      %927 = vmatprep.subr.mxu0 0.0
      %928 = vmatpush1.msra.mxu0 0.0
      %929 = vmatprep.subr.mxu0 0.0
      %930 = vmatpush1.msra.mxu0 0.0
      %931 = vmatprep.subr.mxu0 0.0
      %932 = vmatpush1.msra.mxu0 0.0
      %933 = vmatprep.subr.mxu0 0.0
      %934 = vmatpush1.msra.mxu0 0.0
      %935 = vmatprep.subr.mxu0 0.0
      %936 = vmatpush1.msra.mxu0 0.0
      %937 = vmatprep.subr.mxu0 0.0
      %938 = vmatpush1.msra.mxu0 0.0
      %939 = vmatprep.subr.mxu0 0.0
      %940 = vmatpush1.msra.mxu0 0.0
      %941 = vmatprep.subr.mxu0 0.0
      %942 = vmatpush1.msra.mxu0 0.0
      %943 = vmatprep.subr.mxu0 0.0
      %944 = vmatpush1.msra.mxu0 0.0
      %945 = vmatprep.subr.mxu0 0.0
      %946 = vmatpush1.msra.mxu0 0.0
      %947 = vmatprep.subr.mxu0 0.0
      %948 = vmatpush1.msra.mxu0 0.0
      %949 = vmatprep.subr.mxu0 0.0
      %950 = vmatpush1.msra.mxu0 0.0
      %951 = vmatprep.subr.mxu0 0.0
      %952 = vmatpush1.msra.mxu0 0.0
      %953 = vmatprep.subr.mxu0 0.0
      %954 = vmatpush1.msra.mxu0 0.0
      %955 = vmatprep.mubr.f32.mxu0 0.0
      %956 = vmatmul.mubr.f32.gmra.mrb[0].mxu0 %v812
      %v957 = vpop.f32.mrb[0].mxu0
      %v958 = vadd.f32 0.0, %v957
      %v959 = vpop.f32.mrb[0].mxu0
      %960 = vdwg.mxu0
      %v961 = vadd.f32 %v792, %v887
      %v962 = vadd.f32 %v793, %v889
      %v963 = vadd.f32 %v794, %v958
      %s964 = scalar_lea.vmem %s1, 32
      %v965 = vld [vmem:[%s964] sm:$0xff]
      %v966 = vld [vmem:[%s291] sm:$0xff]
      %v967 = vld [vmem:[%s291 + $0x8] sm:$0xf]
      %v970 = vcombine.high %v966, %v966
      %971 = vrot.lane.b32.xlu0 %v966, 109
      %v972 = vpop.permute.xlu0 %971
      %973 = vrot.lane.b32.xlu0 %v970, 109
      %v974 = vpop.permute.xlu0 %973
      %975 = vrot.lane.b32.xlu0 %v967, 109
      %v976 = vpop.permute.xlu0 %975
      %vm977 = vcmask 891904
      %v978 = vsel %vm977, %v972, %v974
      %v979 = vsel %vm977, %v974, %v976
      %v981 = vsel %vm324, %v965, 0
      %v983 = vsel %vm328, %v978, 0
      %v985 = vsel %vm328, %v979, 0
      %v987 = vsel %vm328, %v976, 0
      %989 = vmatprep.subr.mxu0 %v985
      %990 = vmatpush1.msra.mxu0 %v983
      %991 = vmatprep.subr.mxu0 0.0
      %992 = vmatpush1.msra.mxu0 0.0
      %993 = vmatprep.subr.mxu0 0.0
      %994 = vmatpush1.msra.mxu0 0.0
      %995 = vmatprep.subr.mxu0 0.0
      %996 = vmatpush1.msra.mxu0 0.0
      %997 = vmatprep.subr.mxu0 0.0
      %998 = vmatpush1.msra.mxu0 0.0
      %999 = vmatprep.subr.mxu0 0.0
      %1000 = vmatpush1.msra.mxu0 0.0
      %1001 = vmatprep.subr.mxu0 0.0
      %1002 = vmatpush1.msra.mxu0 0.0
      %1003 = vmatprep.subr.mxu0 0.0
      %1004 = vmatpush1.msra.mxu0 0.0
      %1005 = vmatprep.subr.mxu0 0.0
      %1006 = vmatpush1.msra.mxu0 0.0
      %1007 = vmatprep.subr.mxu0 0.0
      %1008 = vmatpush1.msra.mxu0 0.0
      %1009 = vmatprep.subr.mxu0 0.0
      %1010 = vmatpush1.msra.mxu0 0.0
      %1011 = vmatprep.subr.mxu0 0.0
      %1012 = vmatpush1.msra.mxu0 0.0
      %1013 = vmatprep.subr.mxu0 0.0
      %1014 = vmatpush1.msra.mxu0 0.0
      %1015 = vmatprep.subr.mxu0 0.0
      %1016 = vmatpush1.msra.mxu0 0.0
      %1017 = vmatprep.subr.mxu0 0.0
      %1018 = vmatpush1.msra.mxu0 0.0
      %1019 = vmatprep.subr.mxu0 0.0
      %1020 = vmatpush1.msra.mxu0 0.0
      %1021 = vmatprep.subr.mxu0 0.0
      %1022 = vmatpush1.msra.mxu0 0.0
      %1023 = vmatprep.subr.mxu0 0.0
      %1024 = vmatpush1.msra.mxu0 0.0
      %1025 = vmatprep.subr.mxu0 0.0
      %1026 = vmatpush1.msra.mxu0 0.0
      %1027 = vmatprep.subr.mxu0 0.0
      %1028 = vmatpush1.msra.mxu0 0.0
      %1029 = vmatprep.subr.mxu0 0.0
      %1030 = vmatpush1.msra.mxu0 0.0
      %1031 = vmatprep.subr.mxu0 0.0
      %1032 = vmatpush1.msra.mxu0 0.0
      %1033 = vmatprep.subr.mxu0 0.0
      %1034 = vmatpush1.msra.mxu0 0.0
      %1035 = vmatprep.subr.mxu0 0.0
      %1036 = vmatpush1.msra.mxu0 0.0
      %1037 = vmatprep.subr.mxu0 0.0
      %1038 = vmatpush1.msra.mxu0 0.0
      %1039 = vmatprep.subr.mxu0 0.0
      %1040 = vmatpush1.msra.mxu0 0.0
      %1041 = vmatprep.subr.mxu0 0.0
      %1042 = vmatpush1.msra.mxu0 0.0
      %1043 = vmatprep.subr.mxu0 0.0
      %1044 = vmatpush1.msra.mxu0 0.0
      %1045 = vmatprep.subr.mxu0 0.0
      %1046 = vmatpush1.msra.mxu0 0.0
      %1047 = vmatprep.subr.mxu0 0.0
      %1048 = vmatpush1.msra.mxu0 0.0
      %1049 = vmatprep.subr.mxu0 0.0
      %1050 = vmatpush1.msra.mxu0 0.0
      %1051 = vmatprep.subr.mxu0 0.0
      %1052 = vmatpush1.msra.mxu0 0.0
      %1053 = vmatprep.mubr.f32.mxu0 0.0
      %1054 = vmatmul.mubr.f32.gmra.mrb[0].mxu0 %v981
      %v1055 = vpop.f32.mrb[0].mxu0
      %v1056 = vadd.f32 0.0, %v1055
      %v1057 = vpop.f32.mrb[0].mxu0
      %v1058 = vadd.f32 0.0, %v1057
      %1059 = vdwg.mxu0
      %1060 = vmatprep.subr.mxu0 0.0
      %1061 = vmatpush1.msra.mxu0 %v987
      %1062 = vmatprep.subr.mxu0 0.0
      %1063 = vmatpush1.msra.mxu0 0.0
      %1064 = vmatprep.subr.mxu0 0.0
      %1065 = vmatpush1.msra.mxu0 0.0
      %1066 = vmatprep.subr.mxu0 0.0
      %1067 = vmatpush1.msra.mxu0 0.0
      %1068 = vmatprep.subr.mxu0 0.0
      %1069 = vmatpush1.msra.mxu0 0.0
      %1070 = vmatprep.subr.mxu0 0.0
      %1071 = vmatpush1.msra.mxu0 0.0
      %1072 = vmatprep.subr.mxu0 0.0
      %1073 = vmatpush1.msra.mxu0 0.0
      %1074 = vmatprep.subr.mxu0 0.0
      %1075 = vmatpush1.msra.mxu0 0.0
      %1076 = vmatprep.subr.mxu0 0.0
      %1077 = vmatpush1.msra.mxu0 0.0
      %1078 = vmatprep.subr.mxu0 0.0
      %1079 = vmatpush1.msra.mxu0 0.0
      %1080 = vmatprep.subr.mxu0 0.0
      %1081 = vmatpush1.msra.mxu0 0.0
      %1082 = vmatprep.subr.mxu0 0.0
      %1083 = vmatpush1.msra.mxu0 0.0
      %1084 = vmatprep.subr.mxu0 0.0
      %1085 = vmatpush1.msra.mxu0 0.0
      %1086 = vmatprep.subr.mxu0 0.0
      %1087 = vmatpush1.msra.mxu0 0.0
      %1088 = vmatprep.subr.mxu0 0.0
      %1089 = vmatpush1.msra.mxu0 0.0
      %1090 = vmatprep.subr.mxu0 0.0
      %1091 = vmatpush1.msra.mxu0 0.0
      %1092 = vmatprep.subr.mxu0 0.0
      %1093 = vmatpush1.msra.mxu0 0.0
      %1094 = vmatprep.subr.mxu0 0.0
      %1095 = vmatpush1.msra.mxu0 0.0
      %1096 = vmatprep.subr.mxu0 0.0
      %1097 = vmatpush1.msra.mxu0 0.0
      %1098 = vmatprep.subr.mxu0 0.0
      %1099 = vmatpush1.msra.mxu0 0.0
      %1100 = vmatprep.subr.mxu0 0.0
      %1101 = vmatpush1.msra.mxu0 0.0
      %1102 = vmatprep.subr.mxu0 0.0
      %1103 = vmatpush1.msra.mxu0 0.0
      %1104 = vmatprep.subr.mxu0 0.0
      %1105 = vmatpush1.msra.mxu0 0.0
      %1106 = vmatprep.subr.mxu0 0.0
      %1107 = vmatpush1.msra.mxu0 0.0
      %1108 = vmatprep.subr.mxu0 0.0
      %1109 = vmatpush1.msra.mxu0 0.0
      %1110 = vmatprep.subr.mxu0 0.0
      %1111 = vmatpush1.msra.mxu0 0.0
      %1112 = vmatprep.subr.mxu0 0.0
      %1113 = vmatpush1.msra.mxu0 0.0
      %1114 = vmatprep.subr.mxu0 0.0
      %1115 = vmatpush1.msra.mxu0 0.0
      %1116 = vmatprep.subr.mxu0 0.0
      %1117 = vmatpush1.msra.mxu0 0.0
      %1118 = vmatprep.subr.mxu0 0.0
      %1119 = vmatpush1.msra.mxu0 0.0
      %1120 = vmatprep.subr.mxu0 0.0
      %1121 = vmatpush1.msra.mxu0 0.0
      %1122 = vmatprep.subr.mxu0 0.0
      %1123 = vmatpush1.msra.mxu0 0.0
      %1124 = vmatprep.mubr.f32.mxu0 0.0
      %1125 = vmatmul.mubr.f32.gmra.mrb[0].mxu0 %v981
      %v1126 = vpop.f32.mrb[0].mxu0
      %v1127 = vadd.f32 0.0, %v1126
      %v1128 = vpop.f32.mrb[0].mxu0
      %1129 = vdwg.mxu0
      %v1130 = vadd.f32 %v961, %v1056
      %v1131 = vadd.f32 %v962, %v1058
      %v1132 = vadd.f32 %v963, %v1127
      %s1133 = scalar_lea.vmem %s1, 40
      %v1134 = vld [vmem:[%s1133] sm:$0xff]
      %v1135 = vld [vmem:[%s291] sm:$0xff]
      %v1136 = vld [vmem:[%s291 + $0x8] sm:$0xf]
      %v1139 = vcombine.high %v1135, %v1135
      %1140 = vrot.lane.b32.xlu0 %v1135, 108
      %v1141 = vpop.permute.xlu0 %1140
      %1142 = vrot.lane.b32.xlu0 %v1139, 108
      %v1143 = vpop.permute.xlu0 %1142
      %1144 = vrot.lane.b32.xlu0 %v1136, 108
      %v1145 = vpop.permute.xlu0 %1144
      %vm1146 = vcmask 883712
      %v1147 = vsel %vm1146, %v1141, %v1143
      %v1148 = vsel %vm1146, %v1143, %v1145
      %v1150 = vsel %vm324, %v1134, 0
      %v1152 = vsel %vm328, %v1147, 0
      %v1154 = vsel %vm328, %v1148, 0
      %v1156 = vsel %vm328, %v1145, 0
      %1158 = vmatprep.subr.mxu0 %v1154
      %1159 = vmatpush1.msra.mxu0 %v1152
      %1160 = vmatprep.subr.mxu0 0.0
      %1161 = vmatpush1.msra.mxu0 0.0
      %1162 = vmatprep.subr.mxu0 0.0
      %1163 = vmatpush1.msra.mxu0 0.0
      %1164 = vmatprep.subr.mxu0 0.0
      %1165 = vmatpush1.msra.mxu0 0.0
      %1166 = vmatprep.subr.mxu0 0.0
      %1167 = vmatpush1.msra.mxu0 0.0
      %1168 = vmatprep.subr.mxu0 0.0
      %1169 = vmatpush1.msra.mxu0 0.0
      %1170 = vmatprep.subr.mxu0 0.0
      %1171 = vmatpush1.msra.mxu0 0.0
      %1172 = vmatprep.subr.mxu0 0.0
      %1173 = vmatpush1.msra.mxu0 0.0
      %1174 = vmatprep.subr.mxu0 0.0
      %1175 = vmatpush1.msra.mxu0 0.0
      %1176 = vmatprep.subr.mxu0 0.0
      %1177 = vmatpush1.msra.mxu0 0.0
      %1178 = vmatprep.subr.mxu0 0.0
      %1179 = vmatpush1.msra.mxu0 0.0
      %1180 = vmatprep.subr.mxu0 0.0
      %1181 = vmatpush1.msra.mxu0 0.0
      %1182 = vmatprep.subr.mxu0 0.0
      %1183 = vmatpush1.msra.mxu0 0.0
      %1184 = vmatprep.subr.mxu0 0.0
      %1185 = vmatpush1.msra.mxu0 0.0
      %1186 = vmatprep.subr.mxu0 0.0
      %1187 = vmatpush1.msra.mxu0 0.0
      %1188 = vmatprep.subr.mxu0 0.0
      %1189 = vmatpush1.msra.mxu0 0.0
      %1190 = vmatprep.subr.mxu0 0.0
      %1191 = vmatpush1.msra.mxu0 0.0
      %1192 = vmatprep.subr.mxu0 0.0
      %1193 = vmatpush1.msra.mxu0 0.0
      %1194 = vmatprep.subr.mxu0 0.0
      %1195 = vmatpush1.msra.mxu0 0.0
      %1196 = vmatprep.subr.mxu0 0.0
      %1197 = vmatpush1.msra.mxu0 0.0
      %1198 = vmatprep.subr.mxu0 0.0
      %1199 = vmatpush1.msra.mxu0 0.0
      %1200 = vmatprep.subr.mxu0 0.0
      %1201 = vmatpush1.msra.mxu0 0.0
      %1202 = vmatprep.subr.mxu0 0.0
      %1203 = vmatpush1.msra.mxu0 0.0
      %1204 = vmatprep.subr.mxu0 0.0
      %1205 = vmatpush1.msra.mxu0 0.0
      %1206 = vmatprep.subr.mxu0 0.0
      %1207 = vmatpush1.msra.mxu0 0.0
      %1208 = vmatprep.subr.mxu0 0.0
      %1209 = vmatpush1.msra.mxu0 0.0
      %1210 = vmatprep.subr.mxu0 0.0
      %1211 = vmatpush1.msra.mxu0 0.0
      %1212 = vmatprep.subr.mxu0 0.0
      %1213 = vmatpush1.msra.mxu0 0.0
      %1214 = vmatprep.subr.mxu0 0.0
      %1215 = vmatpush1.msra.mxu0 0.0
      %1216 = vmatprep.subr.mxu0 0.0
      %1217 = vmatpush1.msra.mxu0 0.0
      %1218 = vmatprep.subr.mxu0 0.0
      %1219 = vmatpush1.msra.mxu0 0.0
      %1220 = vmatprep.subr.mxu0 0.0
      %1221 = vmatpush1.msra.mxu0 0.0
      %1222 = vmatprep.mubr.f32.mxu0 0.0
      %1223 = vmatmul.mubr.f32.gmra.mrb[0].mxu0 %v1150
      %v1224 = vpop.f32.mrb[0].mxu0
      %v1225 = vadd.f32 0.0, %v1224
      %v1226 = vpop.f32.mrb[0].mxu0
      %v1227 = vadd.f32 0.0, %v1226
      %1228 = vdwg.mxu0
      %1229 = vmatprep.subr.mxu0 0.0
      %1230 = vmatpush1.msra.mxu0 %v1156
      %1231 = vmatprep.subr.mxu0 0.0
      %1232 = vmatpush1.msra.mxu0 0.0
      %1233 = vmatprep.subr.mxu0 0.0
      %1234 = vmatpush1.msra.mxu0 0.0
      %1235 = vmatprep.subr.mxu0 0.0
      %1236 = vmatpush1.msra.mxu0 0.0
      %1237 = vmatprep.subr.mxu0 0.0
      %1238 = vmatpush1.msra.mxu0 0.0
      %1239 = vmatprep.subr.mxu0 0.0
      %1240 = vmatpush1.msra.mxu0 0.0
      %1241 = vmatprep.subr.mxu0 0.0
      %1242 = vmatpush1.msra.mxu0 0.0
      %1243 = vmatprep.subr.mxu0 0.0
      %1244 = vmatpush1.msra.mxu0 0.0
      %1245 = vmatprep.subr.mxu0 0.0
      %1246 = vmatpush1.msra.mxu0 0.0
      %1247 = vmatprep.subr.mxu0 0.0
      %1248 = vmatpush1.msra.mxu0 0.0
      %1249 = vmatprep.subr.mxu0 0.0
      %1250 = vmatpush1.msra.mxu0 0.0
      %1251 = vmatprep.subr.mxu0 0.0
      %1252 = vmatpush1.msra.mxu0 0.0
      %1253 = vmatprep.subr.mxu0 0.0
      %1254 = vmatpush1.msra.mxu0 0.0
      %1255 = vmatprep.subr.mxu0 0.0
      %1256 = vmatpush1.msra.mxu0 0.0
      %1257 = vmatprep.subr.mxu0 0.0
      %1258 = vmatpush1.msra.mxu0 0.0
      %1259 = vmatprep.subr.mxu0 0.0
      %1260 = vmatpush1.msra.mxu0 0.0
      %1261 = vmatprep.subr.mxu0 0.0
      %1262 = vmatpush1.msra.mxu0 0.0
      %1263 = vmatprep.subr.mxu0 0.0
      %1264 = vmatpush1.msra.mxu0 0.0
      %1265 = vmatprep.subr.mxu0 0.0
      %1266 = vmatpush1.msra.mxu0 0.0
      %1267 = vmatprep.subr.mxu0 0.0
      %1268 = vmatpush1.msra.mxu0 0.0
      %1269 = vmatprep.subr.mxu0 0.0
      %1270 = vmatpush1.msra.mxu0 0.0
      %1271 = vmatprep.subr.mxu0 0.0
      %1272 = vmatpush1.msra.mxu0 0.0
      %1273 = vmatprep.subr.mxu0 0.0
      %1274 = vmatpush1.msra.mxu0 0.0
      %1275 = vmatprep.subr.mxu0 0.0
      %1276 = vmatpush1.msra.mxu0 0.0
      %1277 = vmatprep.subr.mxu0 0.0
      %1278 = vmatpush1.msra.mxu0 0.0
      %1279 = vmatprep.subr.mxu0 0.0
      %1280 = vmatpush1.msra.mxu0 0.0
      %1281 = vmatprep.subr.mxu0 0.0
      %1282 = vmatpush1.msra.mxu0 0.0
      %1283 = vmatprep.subr.mxu0 0.0
      %1284 = vmatpush1.msra.mxu0 0.0
      %1285 = vmatprep.subr.mxu0 0.0
      %1286 = vmatpush1.msra.mxu0 0.0
      %1287 = vmatprep.subr.mxu0 0.0
      %1288 = vmatpush1.msra.mxu0 0.0
      %1289 = vmatprep.subr.mxu0 0.0
      %1290 = vmatpush1.msra.mxu0 0.0
      %1291 = vmatprep.subr.mxu0 0.0
      %1292 = vmatpush1.msra.mxu0 0.0
      %1293 = vmatprep.mubr.f32.mxu0 0.0
      %1294 = vmatmul.mubr.f32.gmra.mrb[0].mxu0 %v1150
      %v1295 = vpop.f32.mrb[0].mxu0
      %v1296 = vadd.f32 0.0, %v1295
      %v1297 = vpop.f32.mrb[0].mxu0
      %1298 = vdwg.mxu0
      %v1299 = vadd.f32 %v1130, %v1225
      %v1300 = vadd.f32 %v1131, %v1227
      %v1301 = vadd.f32 %v1132, %v1296
      %s1302 = scalar_lea.vmem %s1, 48
      %v1303 = vld [vmem:[%s1302] sm:$0xff]
      %v1304 = vld [vmem:[%s291] sm:$0xff]
      %v1305 = vld [vmem:[%s291 + $0x8] sm:$0xf]
      %v1308 = vcombine.high %v1304, %v1304
      %1309 = vrot.lane.b32.xlu0 %v1304, 92
      %v1310 = vpop.permute.xlu0 %1309
      %1311 = vrot.lane.b32.xlu0 %v1308, 92
      %v1312 = vpop.permute.xlu0 %1311
      %1313 = vrot.lane.b32.xlu0 %v1305, 92
      %v1314 = vpop.permute.xlu0 %1313
      %vm1315 = vcmask 752640
      %v1316 = vsel %vm1315, %v1310, %v1312
      %v1317 = vsel %vm1315, %v1312, %v1314
      %v1319 = vsel %vm324, %v1303, 0
      %v1321 = vsel %vm328, %v1316, 0
      %v1323 = vsel %vm328, %v1317, 0
      %v1325 = vsel %vm328, %v1314, 0
      %1327 = vmatprep.subr.mxu0 %v1323
      %1328 = vmatpush1.msra.mxu0 %v1321
      %1329 = vmatprep.subr.mxu0 0.0
      %1330 = vmatpush1.msra.mxu0 0.0
      %1331 = vmatprep.subr.mxu0 0.0
      %1332 = vmatpush1.msra.mxu0 0.0
      %1333 = vmatprep.subr.mxu0 0.0
      %1334 = vmatpush1.msra.mxu0 0.0
      %1335 = vmatprep.subr.mxu0 0.0
      %1336 = vmatpush1.msra.mxu0 0.0
      %1337 = vmatprep.subr.mxu0 0.0
      %1338 = vmatpush1.msra.mxu0 0.0
      %1339 = vmatprep.subr.mxu0 0.0
      %1340 = vmatpush1.msra.mxu0 0.0
      %1341 = vmatprep.subr.mxu0 0.0
      %1342 = vmatpush1.msra.mxu0 0.0
      %1343 = vmatprep.subr.mxu0 0.0
      %1344 = vmatpush1.msra.mxu0 0.0
      %1345 = vmatprep.subr.mxu0 0.0
      %1346 = vmatpush1.msra.mxu0 0.0
      %1347 = vmatprep.subr.mxu0 0.0
      %1348 = vmatpush1.msra.mxu0 0.0
      %1349 = vmatprep.subr.mxu0 0.0
      %1350 = vmatpush1.msra.mxu0 0.0
      %1351 = vmatprep.subr.mxu0 0.0
      %1352 = vmatpush1.msra.mxu0 0.0
      %1353 = vmatprep.subr.mxu0 0.0
      %1354 = vmatpush1.msra.mxu0 0.0
      %1355 = vmatprep.subr.mxu0 0.0
      %1356 = vmatpush1.msra.mxu0 0.0
      %1357 = vmatprep.subr.mxu0 0.0
      %1358 = vmatpush1.msra.mxu0 0.0
      %1359 = vmatprep.subr.mxu0 0.0
      %1360 = vmatpush1.msra.mxu0 0.0
      %1361 = vmatprep.subr.mxu0 0.0
      %1362 = vmatpush1.msra.mxu0 0.0
      %1363 = vmatprep.subr.mxu0 0.0
      %1364 = vmatpush1.msra.mxu0 0.0
      %1365 = vmatprep.subr.mxu0 0.0
      %1366 = vmatpush1.msra.mxu0 0.0
      %1367 = vmatprep.subr.mxu0 0.0
      %1368 = vmatpush1.msra.mxu0 0.0
      %1369 = vmatprep.subr.mxu0 0.0
      %1370 = vmatpush1.msra.mxu0 0.0
      %1371 = vmatprep.subr.mxu0 0.0
      %1372 = vmatpush1.msra.mxu0 0.0
      %1373 = vmatprep.subr.mxu0 0.0
      %1374 = vmatpush1.msra.mxu0 0.0
      %1375 = vmatprep.subr.mxu0 0.0
      %1376 = vmatpush1.msra.mxu0 0.0
      %1377 = vmatprep.subr.mxu0 0.0
      %1378 = vmatpush1.msra.mxu0 0.0
      %1379 = vmatprep.subr.mxu0 0.0
      %1380 = vmatpush1.msra.mxu0 0.0
      %1381 = vmatprep.subr.mxu0 0.0
      %1382 = vmatpush1.msra.mxu0 0.0
      %1383 = vmatprep.subr.mxu0 0.0
      %1384 = vmatpush1.msra.mxu0 0.0
      %1385 = vmatprep.subr.mxu0 0.0
      %1386 = vmatpush1.msra.mxu0 0.0
      %1387 = vmatprep.subr.mxu0 0.0
      %1388 = vmatpush1.msra.mxu0 0.0
      %1389 = vmatprep.subr.mxu0 0.0
      %1390 = vmatpush1.msra.mxu0 0.0
      %1391 = vmatprep.mubr.f32.mxu0 0.0
      %1392 = vmatmul.mubr.f32.gmra.mrb[0].mxu0 %v1319
      %v1393 = vpop.f32.mrb[0].mxu0
      %v1394 = vadd.f32 0.0, %v1393
      %v1395 = vpop.f32.mrb[0].mxu0
      %v1396 = vadd.f32 0.0, %v1395
      %1397 = vdwg.mxu0
      %1398 = vmatprep.subr.mxu0 0.0
      %1399 = vmatpush1.msra.mxu0 %v1325
      %1400 = vmatprep.subr.mxu0 0.0
      %1401 = vmatpush1.msra.mxu0 0.0
      %1402 = vmatprep.subr.mxu0 0.0
      %1403 = vmatpush1.msra.mxu0 0.0
      %1404 = vmatprep.subr.mxu0 0.0
      %1405 = vmatpush1.msra.mxu0 0.0
      %1406 = vmatprep.subr.mxu0 0.0
      %1407 = vmatpush1.msra.mxu0 0.0
      %1408 = vmatprep.subr.mxu0 0.0
      %1409 = vmatpush1.msra.mxu0 0.0
      %1410 = vmatprep.subr.mxu0 0.0
      %1411 = vmatpush1.msra.mxu0 0.0
      %1412 = vmatprep.subr.mxu0 0.0
      %1413 = vmatpush1.msra.mxu0 0.0
      %1414 = vmatprep.subr.mxu0 0.0
      %1415 = vmatpush1.msra.mxu0 0.0
      %1416 = vmatprep.subr.mxu0 0.0
      %1417 = vmatpush1.msra.mxu0 0.0
      %1418 = vmatprep.subr.mxu0 0.0
      %1419 = vmatpush1.msra.mxu0 0.0
      %1420 = vmatprep.subr.mxu0 0.0
      %1421 = vmatpush1.msra.mxu0 0.0
      %1422 = vmatprep.subr.mxu0 0.0
      %1423 = vmatpush1.msra.mxu0 0.0
      %1424 = vmatprep.subr.mxu0 0.0
      %1425 = vmatpush1.msra.mxu0 0.0
      %1426 = vmatprep.subr.mxu0 0.0
      %1427 = vmatpush1.msra.mxu0 0.0
      %1428 = vmatprep.subr.mxu0 0.0
      %1429 = vmatpush1.msra.mxu0 0.0
      %1430 = vmatprep.subr.mxu0 0.0
      %1431 = vmatpush1.msra.mxu0 0.0
      %1432 = vmatprep.subr.mxu0 0.0
      %1433 = vmatpush1.msra.mxu0 0.0
      %1434 = vmatprep.subr.mxu0 0.0
      %1435 = vmatpush1.msra.mxu0 0.0
      %1436 = vmatprep.subr.mxu0 0.0
      %1437 = vmatpush1.msra.mxu0 0.0
      %1438 = vmatprep.subr.mxu0 0.0
      %1439 = vmatpush1.msra.mxu0 0.0
      %1440 = vmatprep.subr.mxu0 0.0
      %1441 = vmatpush1.msra.mxu0 0.0
      %1442 = vmatprep.subr.mxu0 0.0
      %1443 = vmatpush1.msra.mxu0 0.0
      %1444 = vmatprep.subr.mxu0 0.0
      %1445 = vmatpush1.msra.mxu0 0.0
      %1446 = vmatprep.subr.mxu0 0.0
      %1447 = vmatpush1.msra.mxu0 0.0
      %1448 = vmatprep.subr.mxu0 0.0
      %1449 = vmatpush1.msra.mxu0 0.0
      %1450 = vmatprep.subr.mxu0 0.0
      %1451 = vmatpush1.msra.mxu0 0.0
      %1452 = vmatprep.subr.mxu0 0.0
      %1453 = vmatpush1.msra.mxu0 0.0
      %1454 = vmatprep.subr.mxu0 0.0
      %1455 = vmatpush1.msra.mxu0 0.0
      %1456 = vmatprep.subr.mxu0 0.0
      %1457 = vmatpush1.msra.mxu0 0.0
      %1458 = vmatprep.subr.mxu0 0.0
      %1459 = vmatpush1.msra.mxu0 0.0
      %1460 = vmatprep.subr.mxu0 0.0
      %1461 = vmatpush1.msra.mxu0 0.0
      %1462 = vmatprep.mubr.f32.mxu0 0.0
      %1463 = vmatmul.mubr.f32.gmra.mrb[0].mxu0 %v1319
      %v1464 = vpop.f32.mrb[0].mxu0
      %v1465 = vadd.f32 0.0, %v1464
      %v1466 = vpop.f32.mrb[0].mxu0
      %1467 = vdwg.mxu0
      %v1468 = vadd.f32 %v1299, %v1394
      %v1469 = vadd.f32 %v1300, %v1396
      %v1470 = vadd.f32 %v1301, %v1465
      %s1471 = scalar_lea.vmem %s1, 56
      %v1472 = vld [vmem:[%s1471] sm:$0xff]
      %v1473 = vld [vmem:[%s291] sm:$0xff]
      %v1474 = vld [vmem:[%s291 + $0x8] sm:$0xf]
      %v1477 = vcombine.high %v1473, %v1473
      %1478 = vrot.lane.b32.xlu0 %v1473, 91
      %v1479 = vpop.permute.xlu0 %1478
      %1480 = vrot.lane.b32.xlu0 %v1477, 91
      %v1481 = vpop.permute.xlu0 %1480
      %1482 = vrot.lane.b32.xlu0 %v1474, 91
      %v1483 = vpop.permute.xlu0 %1482
      %vm1484 = vcmask 744448
      %v1485 = vsel %vm1484, %v1479, %v1481
      %v1486 = vsel %vm1484, %v1481, %v1483
      %v1488 = vsel %vm324, %v1472, 0
      %v1490 = vsel %vm328, %v1485, 0
      %v1492 = vsel %vm328, %v1486, 0
      %v1494 = vsel %vm328, %v1483, 0
      %1496 = vmatprep.subr.mxu0 %v1492
      %1497 = vmatpush1.msra.mxu0 %v1490
      %1498 = vmatprep.subr.mxu0 0.0
      %1499 = vmatpush1.msra.mxu0 0.0
      %1500 = vmatprep.subr.mxu0 0.0
      %1501 = vmatpush1.msra.mxu0 0.0
      %1502 = vmatprep.subr.mxu0 0.0
      %1503 = vmatpush1.msra.mxu0 0.0
      %1504 = vmatprep.subr.mxu0 0.0
      %1505 = vmatpush1.msra.mxu0 0.0
      %1506 = vmatprep.subr.mxu0 0.0
      %1507 = vmatpush1.msra.mxu0 0.0
      %1508 = vmatprep.subr.mxu0 0.0
      %1509 = vmatpush1.msra.mxu0 0.0
      %1510 = vmatprep.subr.mxu0 0.0
      %1511 = vmatpush1.msra.mxu0 0.0
      %1512 = vmatprep.subr.mxu0 0.0
      %1513 = vmatpush1.msra.mxu0 0.0
      %1514 = vmatprep.subr.mxu0 0.0
      %1515 = vmatpush1.msra.mxu0 0.0
      %1516 = vmatprep.subr.mxu0 0.0
      %1517 = vmatpush1.msra.mxu0 0.0
      %1518 = vmatprep.subr.mxu0 0.0
      %1519 = vmatpush1.msra.mxu0 0.0
      %1520 = vmatprep.subr.mxu0 0.0
      %1521 = vmatpush1.msra.mxu0 0.0
      %1522 = vmatprep.subr.mxu0 0.0
      %1523 = vmatpush1.msra.mxu0 0.0
      %1524 = vmatprep.subr.mxu0 0.0
      %1525 = vmatpush1.msra.mxu0 0.0
      %1526 = vmatprep.subr.mxu0 0.0
      %1527 = vmatpush1.msra.mxu0 0.0
      %1528 = vmatprep.subr.mxu0 0.0
      %1529 = vmatpush1.msra.mxu0 0.0
      %1530 = vmatprep.subr.mxu0 0.0
      %1531 = vmatpush1.msra.mxu0 0.0
      %1532 = vmatprep.subr.mxu0 0.0
      %1533 = vmatpush1.msra.mxu0 0.0
      %1534 = vmatprep.subr.mxu0 0.0
      %1535 = vmatpush1.msra.mxu0 0.0
      %1536 = vmatprep.subr.mxu0 0.0
      %1537 = vmatpush1.msra.mxu0 0.0
      %1538 = vmatprep.subr.mxu0 0.0
      %1539 = vmatpush1.msra.mxu0 0.0
      %1540 = vmatprep.subr.mxu0 0.0
      %1541 = vmatpush1.msra.mxu0 0.0
      %1542 = vmatprep.subr.mxu0 0.0
      %1543 = vmatpush1.msra.mxu0 0.0
      %1544 = vmatprep.subr.mxu0 0.0
      %1545 = vmatpush1.msra.mxu0 0.0
      %1546 = vmatprep.subr.mxu0 0.0
      %1547 = vmatpush1.msra.mxu0 0.0
      %1548 = vmatprep.subr.mxu0 0.0
      %1549 = vmatpush1.msra.mxu0 0.0
      %1550 = vmatprep.subr.mxu0 0.0
      %1551 = vmatpush1.msra.mxu0 0.0
      %1552 = vmatprep.subr.mxu0 0.0
      %1553 = vmatpush1.msra.mxu0 0.0
      %1554 = vmatprep.subr.mxu0 0.0
      %1555 = vmatpush1.msra.mxu0 0.0
      %1556 = vmatprep.subr.mxu0 0.0
      %1557 = vmatpush1.msra.mxu0 0.0
      %1558 = vmatprep.subr.mxu0 0.0
      %1559 = vmatpush1.msra.mxu0 0.0
      %1560 = vmatprep.mubr.f32.mxu0 0.0
      %1561 = vmatmul.mubr.f32.gmra.mrb[0].mxu0 %v1488
      %v1562 = vpop.f32.mrb[0].mxu0
      %v1563 = vadd.f32 0.0, %v1562
      %v1564 = vpop.f32.mrb[0].mxu0
      %v1565 = vadd.f32 0.0, %v1564
      %1566 = vdwg.mxu0
      %1567 = vmatprep.subr.mxu0 0.0
      %1568 = vmatpush1.msra.mxu0 %v1494
      %1569 = vmatprep.subr.mxu0 0.0
      %1570 = vmatpush1.msra.mxu0 0.0
      %1571 = vmatprep.subr.mxu0 0.0
      %1572 = vmatpush1.msra.mxu0 0.0
      %1573 = vmatprep.subr.mxu0 0.0
      %1574 = vmatpush1.msra.mxu0 0.0
      %1575 = vmatprep.subr.mxu0 0.0
      %1576 = vmatpush1.msra.mxu0 0.0
      %1577 = vmatprep.subr.mxu0 0.0
      %1578 = vmatpush1.msra.mxu0 0.0
      %1579 = vmatprep.subr.mxu0 0.0
      %1580 = vmatpush1.msra.mxu0 0.0
      %1581 = vmatprep.subr.mxu0 0.0
      %1582 = vmatpush1.msra.mxu0 0.0
      %1583 = vmatprep.subr.mxu0 0.0
      %1584 = vmatpush1.msra.mxu0 0.0
      %1585 = vmatprep.subr.mxu0 0.0
      %1586 = vmatpush1.msra.mxu0 0.0
      %1587 = vmatprep.subr.mxu0 0.0
      %1588 = vmatpush1.msra.mxu0 0.0
      %1589 = vmatprep.subr.mxu0 0.0
      %1590 = vmatpush1.msra.mxu0 0.0
      %1591 = vmatprep.subr.mxu0 0.0
      %1592 = vmatpush1.msra.mxu0 0.0
      %1593 = vmatprep.subr.mxu0 0.0
      %1594 = vmatpush1.msra.mxu0 0.0
      %1595 = vmatprep.subr.mxu0 0.0
      %1596 = vmatpush1.msra.mxu0 0.0
      %1597 = vmatprep.subr.mxu0 0.0
      %1598 = vmatpush1.msra.mxu0 0.0
      %1599 = vmatprep.subr.mxu0 0.0
      %1600 = vmatpush1.msra.mxu0 0.0
      %1601 = vmatprep.subr.mxu0 0.0
      %1602 = vmatpush1.msra.mxu0 0.0
      %1603 = vmatprep.subr.mxu0 0.0
      %1604 = vmatpush1.msra.mxu0 0.0
      %1605 = vmatprep.subr.mxu0 0.0
      %1606 = vmatpush1.msra.mxu0 0.0
      %1607 = vmatprep.subr.mxu0 0.0
      %1608 = vmatpush1.msra.mxu0 0.0
      %1609 = vmatprep.subr.mxu0 0.0
      %1610 = vmatpush1.msra.mxu0 0.0
      %1611 = vmatprep.subr.mxu0 0.0
      %1612 = vmatpush1.msra.mxu0 0.0
      %1613 = vmatprep.subr.mxu0 0.0
      %1614 = vmatpush1.msra.mxu0 0.0
      %1615 = vmatprep.subr.mxu0 0.0
      %1616 = vmatpush1.msra.mxu0 0.0
      %1617 = vmatprep.subr.mxu0 0.0
      %1618 = vmatpush1.msra.mxu0 0.0
      %1619 = vmatprep.subr.mxu0 0.0
      %1620 = vmatpush1.msra.mxu0 0.0
      %1621 = vmatprep.subr.mxu0 0.0
      %1622 = vmatpush1.msra.mxu0 0.0
      %1623 = vmatprep.subr.mxu0 0.0
      %1624 = vmatpush1.msra.mxu0 0.0
      %1625 = vmatprep.subr.mxu0 0.0
      %1626 = vmatpush1.msra.mxu0 0.0
      %1627 = vmatprep.subr.mxu0 0.0
      %1628 = vmatpush1.msra.mxu0 0.0
      %1629 = vmatprep.subr.mxu0 0.0
      %1630 = vmatpush1.msra.mxu0 0.0
      %1631 = vmatprep.mubr.f32.mxu0 0.0
      %1632 = vmatmul.mubr.f32.gmra.mrb[0].mxu0 %v1488
      %v1633 = vpop.f32.mrb[0].mxu0
      %v1634 = vadd.f32 0.0, %v1633
      %v1635 = vpop.f32.mrb[0].mxu0
      %1636 = vdwg.mxu0
      %v1637 = vadd.f32 %v1468, %v1563
      %v1638 = vadd.f32 %v1469, %v1565
      %v1639 = vadd.f32 %v1470, %v1634
      %s1640 = scalar_lea.vmem %s1, 64
      %v1641 = vld [vmem:[%s1640] sm:$0xff]
      %v1642 = vld [vmem:[%s291] sm:$0xff]
      %v1643 = vld [vmem:[%s291 + $0x8] sm:$0xf]
      %v1646 = vcombine.high %v1642, %v1642
      %1647 = vrot.lane.b32.xlu0 %v1642, 90
      %v1648 = vpop.permute.xlu0 %1647
      %1649 = vrot.lane.b32.xlu0 %v1646, 90
      %v1650 = vpop.permute.xlu0 %1649
      %1651 = vrot.lane.b32.xlu0 %v1643, 90
      %v1652 = vpop.permute.xlu0 %1651
      %vm1653 = vcmask 736256
      %v1654 = vsel %vm1653, %v1648, %v1650
      %v1655 = vsel %vm1653, %v1650, %v1652
      %v1657 = vsel %vm324, %v1641, 0
      %v1659 = vsel %vm328, %v1654, 0
      %v1661 = vsel %vm328, %v1655, 0
      %v1663 = vsel %vm328, %v1652, 0
      %1665 = vmatprep.subr.mxu0 %v1661
      %1666 = vmatpush1.msra.mxu0 %v1659
      %1667 = vmatprep.subr.mxu0 0.0
      %1668 = vmatpush1.msra.mxu0 0.0
      %1669 = vmatprep.subr.mxu0 0.0
      %1670 = vmatpush1.msra.mxu0 0.0
      %1671 = vmatprep.subr.mxu0 0.0
      %1672 = vmatpush1.msra.mxu0 0.0
      %1673 = vmatprep.subr.mxu0 0.0
      %1674 = vmatpush1.msra.mxu0 0.0
      %1675 = vmatprep.subr.mxu0 0.0
      %1676 = vmatpush1.msra.mxu0 0.0
      %1677 = vmatprep.subr.mxu0 0.0
      %1678 = vmatpush1.msra.mxu0 0.0
      %1679 = vmatprep.subr.mxu0 0.0
      %1680 = vmatpush1.msra.mxu0 0.0
      %1681 = vmatprep.subr.mxu0 0.0
      %1682 = vmatpush1.msra.mxu0 0.0
      %1683 = vmatprep.subr.mxu0 0.0
      %1684 = vmatpush1.msra.mxu0 0.0
      %1685 = vmatprep.subr.mxu0 0.0
      %1686 = vmatpush1.msra.mxu0 0.0
      %1687 = vmatprep.subr.mxu0 0.0
      %1688 = vmatpush1.msra.mxu0 0.0
      %1689 = vmatprep.subr.mxu0 0.0
      %1690 = vmatpush1.msra.mxu0 0.0
      %1691 = vmatprep.subr.mxu0 0.0
      %1692 = vmatpush1.msra.mxu0 0.0
      %1693 = vmatprep.subr.mxu0 0.0
      %1694 = vmatpush1.msra.mxu0 0.0
      %1695 = vmatprep.subr.mxu0 0.0
      %1696 = vmatpush1.msra.mxu0 0.0
      %1697 = vmatprep.subr.mxu0 0.0
      %1698 = vmatpush1.msra.mxu0 0.0
      %1699 = vmatprep.subr.mxu0 0.0
      %1700 = vmatpush1.msra.mxu0 0.0
      %1701 = vmatprep.subr.mxu0 0.0
      %1702 = vmatpush1.msra.mxu0 0.0
      %1703 = vmatprep.subr.mxu0 0.0
      %1704 = vmatpush1.msra.mxu0 0.0
      %1705 = vmatprep.subr.mxu0 0.0
      %1706 = vmatpush1.msra.mxu0 0.0
      %1707 = vmatprep.subr.mxu0 0.0
      %1708 = vmatpush1.msra.mxu0 0.0
      %1709 = vmatprep.subr.mxu0 0.0
      %1710 = vmatpush1.msra.mxu0 0.0
      %1711 = vmatprep.subr.mxu0 0.0
      %1712 = vmatpush1.msra.mxu0 0.0
      %1713 = vmatprep.subr.mxu0 0.0
      %1714 = vmatpush1.msra.mxu0 0.0
      %1715 = vmatprep.subr.mxu0 0.0
      %1716 = vmatpush1.msra.mxu0 0.0
      %1717 = vmatprep.subr.mxu0 0.0
      %1718 = vmatpush1.msra.mxu0 0.0
      %1719 = vmatprep.subr.mxu0 0.0
      %1720 = vmatpush1.msra.mxu0 0.0
      %1721 = vmatprep.subr.mxu0 0.0
      %1722 = vmatpush1.msra.mxu0 0.0
      %1723 = vmatprep.subr.mxu0 0.0
      %1724 = vmatpush1.msra.mxu0 0.0
      %1725 = vmatprep.subr.mxu0 0.0
      %1726 = vmatpush1.msra.mxu0 0.0
      %1727 = vmatprep.subr.mxu0 0.0
      %1728 = vmatpush1.msra.mxu0 0.0
      %1729 = vmatprep.mubr.f32.mxu0 0.0
      %1730 = vmatmul.mubr.f32.gmra.mrb[0].mxu0 %v1657
      %v1731 = vpop.f32.mrb[0].mxu0
      %v1732 = vadd.f32 0.0, %v1731
      %v1733 = vpop.f32.mrb[0].mxu0
      %v1734 = vadd.f32 0.0, %v1733
      %1735 = vdwg.mxu0
      %1736 = vmatprep.subr.mxu0 0.0
      %1737 = vmatpush1.msra.mxu0 %v1663
      %1738 = vmatprep.subr.mxu0 0.0
      %1739 = vmatpush1.msra.mxu0 0.0
      %1740 = vmatprep.subr.mxu0 0.0
      %1741 = vmatpush1.msra.mxu0 0.0
      %1742 = vmatprep.subr.mxu0 0.0
      %1743 = vmatpush1.msra.mxu0 0.0
      %1744 = vmatprep.subr.mxu0 0.0
      %1745 = vmatpush1.msra.mxu0 0.0
      %1746 = vmatprep.subr.mxu0 0.0
      %1747 = vmatpush1.msra.mxu0 0.0
      %1748 = vmatprep.subr.mxu0 0.0
      %1749 = vmatpush1.msra.mxu0 0.0
      %1750 = vmatprep.subr.mxu0 0.0
      %1751 = vmatpush1.msra.mxu0 0.0
      %1752 = vmatprep.subr.mxu0 0.0
      %1753 = vmatpush1.msra.mxu0 0.0
      %1754 = vmatprep.subr.mxu0 0.0
      %1755 = vmatpush1.msra.mxu0 0.0
      %1756 = vmatprep.subr.mxu0 0.0
      %1757 = vmatpush1.msra.mxu0 0.0
      %1758 = vmatprep.subr.mxu0 0.0
      %1759 = vmatpush1.msra.mxu0 0.0
      %1760 = vmatprep.subr.mxu0 0.0
      %1761 = vmatpush1.msra.mxu0 0.0
      %1762 = vmatprep.subr.mxu0 0.0
      %1763 = vmatpush1.msra.mxu0 0.0
      %1764 = vmatprep.subr.mxu0 0.0
      %1765 = vmatpush1.msra.mxu0 0.0
      %1766 = vmatprep.subr.mxu0 0.0
      %1767 = vmatpush1.msra.mxu0 0.0
      %1768 = vmatprep.subr.mxu0 0.0
      %1769 = vmatpush1.msra.mxu0 0.0
      %1770 = vmatprep.subr.mxu0 0.0
      %1771 = vmatpush1.msra.mxu0 0.0
      %1772 = vmatprep.subr.mxu0 0.0
      %1773 = vmatpush1.msra.mxu0 0.0
      %1774 = vmatprep.subr.mxu0 0.0
      %1775 = vmatpush1.msra.mxu0 0.0
      %1776 = vmatprep.subr.mxu0 0.0
      %1777 = vmatpush1.msra.mxu0 0.0
      %1778 = vmatprep.subr.mxu0 0.0
      %1779 = vmatpush1.msra.mxu0 0.0
      %1780 = vmatprep.subr.mxu0 0.0
      %1781 = vmatpush1.msra.mxu0 0.0
      %1782 = vmatprep.subr.mxu0 0.0
      %1783 = vmatpush1.msra.mxu0 0.0
      %1784 = vmatprep.subr.mxu0 0.0
      %1785 = vmatpush1.msra.mxu0 0.0
      %1786 = vmatprep.subr.mxu0 0.0
      %1787 = vmatpush1.msra.mxu0 0.0
      %1788 = vmatprep.subr.mxu0 0.0
      %1789 = vmatpush1.msra.mxu0 0.0
      %1790 = vmatprep.subr.mxu0 0.0
      %1791 = vmatpush1.msra.mxu0 0.0
      %1792 = vmatprep.subr.mxu0 0.0
      %1793 = vmatpush1.msra.mxu0 0.0
      %1794 = vmatprep.subr.mxu0 0.0
      %1795 = vmatpush1.msra.mxu0 0.0
      %1796 = vmatprep.subr.mxu0 0.0
      %1797 = vmatpush1.msra.mxu0 0.0
      %1798 = vmatprep.subr.mxu0 0.0
      %1799 = vmatpush1.msra.mxu0 0.0
      %1800 = vmatprep.mubr.f32.mxu0 0.0
      %1801 = vmatmul.mubr.f32.gmra.mrb[0].mxu0 %v1657
      %v1802 = vpop.f32.mrb[0].mxu0
      %v1803 = vadd.f32 0.0, %v1802
      %v1804 = vpop.f32.mrb[0].mxu0
      %1805 = vdwg.mxu0
      %v1806 = vadd.f32 %v1637, %v1732
      %v1807 = vadd.f32 %v1638, %v1734
      %v1808 = vadd.f32 %v1639, %v1803
      %v1809 = vld [vmem:[%s2] sm:$0xff]
      %1811 = vset.pattern.permute.xlu0 0
      %1812 = vperm.xlu0 %1811, %v1809
      %v1813 = vpop.permute.xlu0 %1812
      %v1815 = vadd.f32 %v1806, %v1813
      %v1816 = vadd.f32 %v1807, %v1813
      %v1817 = vadd.f32 %v1808, %v1813
      %v1818 = vmax.f32 %v1815, 0.0
      %v1819 = vmax.f32 %v1816, 0.0
      %v1820 = vmax.f32 %v1817, 0.0
      %v1821 = vld [vmem:[%s295] sm:$0x7]
      %v1823 = vlaneseq
      %v1824 = vshrl.u32 %v1823, 7
      %v1825 = vsub.s32 0, %v1824
      %v1826 = vrot.slane %v1821, %v1825
      %v1827 = vlaneseq
      %v1828 = vshrl.u32 %v1827, 7
      %v1829 = vsub.s32 1, %v1828
      %v1830 = vrot.slane %v1821, %v1829
      %v1831 = vlaneseq
      %v1832 = vshrl.u32 %v1831, 7
      %v1833 = vsub.s32 2, %v1832
      %v1834 = vrot.slane %v1821, %v1833
      %v1838 = vmul.f32 %v1818, %v1826
      %v1839 = vmul.f32 %v1819, %v1830
      %v1840 = vmul.f32 %v1820, %v1834
      %1841 = vst [vmem:[#allocation2] sm:$0xff] %v1838
      %1842 = vst [vmem:[#allocation2 + $0x8] sm:$0xff] %v1839
      %vm1843 = vcmask 564224
      %1844 = vst.msk [vmem:[#allocation2 + $0x10] sm:$0xff] %vm1843, %v1840
      %v1845 = vld [vmem:[%s4] sm:$0xff]
      %v1846 = vld [vmem:[#allocation2] sm:$0xff]
      %v1847 = vld [vmem:[#allocation2 + $0x8] sm:$0xff]
      %v1848 = vld [vmem:[#allocation2 + $0x10] sm:$0xff]
      %s1849 = scalar_lea.vmem %s4, 8
      %v1850 = vld [vmem:[%s1849] sm:$0xff]
      %1854 = vrot.lane.b32.xlu0 %v1846, 127
      %v1855 = vpop.permute.xlu0 %1854
      %1856 = vrot.lane.b32.xlu0 %v1847, 127
      %v1857 = vpop.permute.xlu0 %1856
      %1858 = vrot.lane.b32.xlu0 %v1848, 127
      %v1859 = vpop.permute.xlu0 %1858
      %v1860 = vsel %vm321, %v1855, %v1857
      %v1861 = vsel %vm321, %v1857, %v1859
      %vm1865 = vcmask 64512
      %v1867 = vsel %vm1865, %v1850, 0
      %1869 = vmatprep.subr.mxu0 %v1861
      %1870 = vmatpush1.msra.mxu0 %v1860
      %1871 = vmatprep.subr.mxu0 0.0
      %1872 = vmatpush1.msra.mxu0 0.0
      %1873 = vmatprep.subr.mxu0 0.0
      %1874 = vmatpush1.msra.mxu0 0.0
      %1875 = vmatprep.subr.mxu0 0.0
      %1876 = vmatpush1.msra.mxu0 0.0
      %1877 = vmatprep.subr.mxu0 0.0
      %1878 = vmatpush1.msra.mxu0 0.0
      %1879 = vmatprep.subr.mxu0 0.0
      %1880 = vmatpush1.msra.mxu0 0.0
      %1881 = vmatprep.subr.mxu0 0.0
      %1882 = vmatpush1.msra.mxu0 0.0
      %1883 = vmatprep.subr.mxu0 0.0
      %1884 = vmatpush1.msra.mxu0 0.0
      %1885 = vmatprep.subr.mxu0 0.0
      %1886 = vmatpush1.msra.mxu0 0.0
      %1887 = vmatprep.subr.mxu0 0.0
      %1888 = vmatpush1.msra.mxu0 0.0
      %1889 = vmatprep.subr.mxu0 0.0
      %1890 = vmatpush1.msra.mxu0 0.0
      %1891 = vmatprep.subr.mxu0 0.0
      %1892 = vmatpush1.msra.mxu0 0.0
      %1893 = vmatprep.subr.mxu0 0.0
      %1894 = vmatpush1.msra.mxu0 0.0
      %1895 = vmatprep.subr.mxu0 0.0
      %1896 = vmatpush1.msra.mxu0 0.0
      %1897 = vmatprep.subr.mxu0 0.0
      %1898 = vmatpush1.msra.mxu0 0.0
      %1899 = vmatprep.subr.mxu0 0.0
      %1900 = vmatpush1.msra.mxu0 0.0
      %1901 = vmatprep.subr.mxu0 0.0
      %1902 = vmatpush1.msra.mxu0 0.0
      %1903 = vmatprep.subr.mxu0 0.0
      %1904 = vmatpush1.msra.mxu0 0.0
      %1905 = vmatprep.subr.mxu0 0.0
      %1906 = vmatpush1.msra.mxu0 0.0
      %1907 = vmatprep.subr.mxu0 0.0
      %1908 = vmatpush1.msra.mxu0 0.0
      %1909 = vmatprep.subr.mxu0 0.0
      %1910 = vmatpush1.msra.mxu0 0.0
      %1911 = vmatprep.subr.mxu0 0.0
      %1912 = vmatpush1.msra.mxu0 0.0
      %1913 = vmatprep.subr.mxu0 0.0
      %1914 = vmatpush1.msra.mxu0 0.0
      %1915 = vmatprep.subr.mxu0 0.0
      %1916 = vmatpush1.msra.mxu0 0.0
      %1917 = vmatprep.subr.mxu0 0.0
      %1918 = vmatpush1.msra.mxu0 0.0
      %1919 = vmatprep.subr.mxu0 0.0
      %1920 = vmatpush1.msra.mxu0 0.0
      %1921 = vmatprep.subr.mxu0 0.0
      %1922 = vmatpush1.msra.mxu0 0.0
      %1923 = vmatprep.subr.mxu0 0.0
      %1924 = vmatpush1.msra.mxu0 0.0
      %1925 = vmatprep.subr.mxu0 0.0
      %1926 = vmatpush1.msra.mxu0 0.0
      %1927 = vmatprep.subr.mxu0 0.0
      %1928 = vmatpush1.msra.mxu0 0.0
      %1929 = vmatprep.subr.mxu0 0.0
      %1930 = vmatpush1.msra.mxu0 0.0
      %1931 = vmatprep.subr.mxu0 0.0
      %1932 = vmatpush1.msra.mxu0 0.0
      %1933 = vmatprep.mubr.f32.mxu0 0.0
      %1934 = vmatmul.mubr.f32.gmra.mrb[0].mxu0 %v1867
      %v1935 = vpop.f32.mrb[0].mxu0
      %v1936 = vadd.f32 0.0, %v1935
      %v1937 = vpop.f32.mrb[0].mxu0
      %v1938 = vadd.f32 0.0, %v1937
      %1939 = vdwg.mxu0
      %1940 = vmatprep.subr.mxu0 0.0
      %1941 = vmatpush1.msra.mxu0 %v1859
      %1942 = vmatprep.subr.mxu0 0.0
      %1943 = vmatpush1.msra.mxu0 0.0
      %1944 = vmatprep.subr.mxu0 0.0
      %1945 = vmatpush1.msra.mxu0 0.0
      %1946 = vmatprep.subr.mxu0 0.0
      %1947 = vmatpush1.msra.mxu0 0.0
      %1948 = vmatprep.subr.mxu0 0.0
      %1949 = vmatpush1.msra.mxu0 0.0
      %1950 = vmatprep.subr.mxu0 0.0
      %1951 = vmatpush1.msra.mxu0 0.0
      %1952 = vmatprep.subr.mxu0 0.0
      %1953 = vmatpush1.msra.mxu0 0.0
      %1954 = vmatprep.subr.mxu0 0.0
      %1955 = vmatpush1.msra.mxu0 0.0
      %1956 = vmatprep.subr.mxu0 0.0
      %1957 = vmatpush1.msra.mxu0 0.0
      %1958 = vmatprep.subr.mxu0 0.0
      %1959 = vmatpush1.msra.mxu0 0.0
      %1960 = vmatprep.subr.mxu0 0.0
      %1961 = vmatpush1.msra.mxu0 0.0
      %1962 = vmatprep.subr.mxu0 0.0
      %1963 = vmatpush1.msra.mxu0 0.0
      %1964 = vmatprep.subr.mxu0 0.0
      %1965 = vmatpush1.msra.mxu0 0.0
      %1966 = vmatprep.subr.mxu0 0.0
      %1967 = vmatpush1.msra.mxu0 0.0
      %1968 = vmatprep.subr.mxu0 0.0
      %1969 = vmatpush1.msra.mxu0 0.0
      %1970 = vmatprep.subr.mxu0 0.0
      %1971 = vmatpush1.msra.mxu0 0.0
      %1972 = vmatprep.subr.mxu0 0.0
      %1973 = vmatpush1.msra.mxu0 0.0
      %1974 = vmatprep.subr.mxu0 0.0
      %1975 = vmatpush1.msra.mxu0 0.0
      %1976 = vmatprep.subr.mxu0 0.0
      %1977 = vmatpush1.msra.mxu0 0.0
      %1978 = vmatprep.subr.mxu0 0.0
      %1979 = vmatpush1.msra.mxu0 0.0
      %1980 = vmatprep.subr.mxu0 0.0
      %1981 = vmatpush1.msra.mxu0 0.0
      %1982 = vmatprep.subr.mxu0 0.0
      %1983 = vmatpush1.msra.mxu0 0.0
      %1984 = vmatprep.subr.mxu0 0.0
      %1985 = vmatpush1.msra.mxu0 0.0
      %1986 = vmatprep.subr.mxu0 0.0
      %1987 = vmatpush1.msra.mxu0 0.0
      %1988 = vmatprep.subr.mxu0 0.0
      %1989 = vmatpush1.msra.mxu0 0.0
      %1990 = vmatprep.subr.mxu0 0.0
      %1991 = vmatpush1.msra.mxu0 0.0
      %1992 = vmatprep.subr.mxu0 0.0
      %1993 = vmatpush1.msra.mxu0 0.0
      %1994 = vmatprep.subr.mxu0 0.0
      %1995 = vmatpush1.msra.mxu0 0.0
      %1996 = vmatprep.subr.mxu0 0.0
      %1997 = vmatpush1.msra.mxu0 0.0
      %1998 = vmatprep.subr.mxu0 0.0
      %1999 = vmatpush1.msra.mxu0 0.0
      %2000 = vmatprep.subr.mxu0 0.0
      %2001 = vmatpush1.msra.mxu0 0.0
      %2002 = vmatprep.subr.mxu0 0.0
      %2003 = vmatpush1.msra.mxu0 0.0
      %2004 = vmatprep.mubr.f32.mxu0 0.0
      %2005 = vmatmul.mubr.f32.gmra.mrb[0].mxu0 %v1867
      %v2006 = vpop.f32.mrb[0].mxu0
      %v2007 = vadd.f32 0.0, %v2006
      %v2008 = vpop.f32.mrb[0].mxu0
      %2009 = vdwg.mxu0
      %v2011 = vsel %vm1865, %v1845, 0
      %2013 = vmatprep.subr.mxu0 %v1847
      %2014 = vmatpush1.msra.mxu0 %v1846
      %2015 = vmatprep.subr.mxu0 0.0
      %2016 = vmatpush1.msra.mxu0 0.0
      %2017 = vmatprep.subr.mxu0 0.0
      %2018 = vmatpush1.msra.mxu0 0.0
      %2019 = vmatprep.subr.mxu0 0.0
      %2020 = vmatpush1.msra.mxu0 0.0
      %2021 = vmatprep.subr.mxu0 0.0
      %2022 = vmatpush1.msra.mxu0 0.0
      %2023 = vmatprep.subr.mxu0 0.0
      %2024 = vmatpush1.msra.mxu0 0.0
      %2025 = vmatprep.subr.mxu0 0.0
      %2026 = vmatpush1.msra.mxu0 0.0
      %2027 = vmatprep.subr.mxu0 0.0
      %2028 = vmatpush1.msra.mxu0 0.0
      %2029 = vmatprep.subr.mxu0 0.0
      %2030 = vmatpush1.msra.mxu0 0.0
      %2031 = vmatprep.subr.mxu0 0.0
      %2032 = vmatpush1.msra.mxu0 0.0
      %2033 = vmatprep.subr.mxu0 0.0
      %2034 = vmatpush1.msra.mxu0 0.0
      %2035 = vmatprep.subr.mxu0 0.0
      %2036 = vmatpush1.msra.mxu0 0.0
      %2037 = vmatprep.subr.mxu0 0.0
      %2038 = vmatpush1.msra.mxu0 0.0
      %2039 = vmatprep.subr.mxu0 0.0
      %2040 = vmatpush1.msra.mxu0 0.0
      %2041 = vmatprep.subr.mxu0 0.0
      %2042 = vmatpush1.msra.mxu0 0.0
      %2043 = vmatprep.subr.mxu0 0.0
      %2044 = vmatpush1.msra.mxu0 0.0
      %2045 = vmatprep.subr.mxu0 0.0
      %2046 = vmatpush1.msra.mxu0 0.0
      %2047 = vmatprep.subr.mxu0 0.0
      %2048 = vmatpush1.msra.mxu0 0.0
      %2049 = vmatprep.subr.mxu0 0.0
      %2050 = vmatpush1.msra.mxu0 0.0
      %2051 = vmatprep.subr.mxu0 0.0
      %2052 = vmatpush1.msra.mxu0 0.0
      %2053 = vmatprep.subr.mxu0 0.0
      %2054 = vmatpush1.msra.mxu0 0.0
      %2055 = vmatprep.subr.mxu0 0.0
      %2056 = vmatpush1.msra.mxu0 0.0
      %2057 = vmatprep.subr.mxu0 0.0
      %2058 = vmatpush1.msra.mxu0 0.0
      %2059 = vmatprep.subr.mxu0 0.0
      %2060 = vmatpush1.msra.mxu0 0.0
      %2061 = vmatprep.subr.mxu0 0.0
      %2062 = vmatpush1.msra.mxu0 0.0
      %2063 = vmatprep.subr.mxu0 0.0
      %2064 = vmatpush1.msra.mxu0 0.0
      %2065 = vmatprep.subr.mxu0 0.0
      %2066 = vmatpush1.msra.mxu0 0.0
      %2067 = vmatprep.subr.mxu0 0.0
      %2068 = vmatpush1.msra.mxu0 0.0
      %2069 = vmatprep.subr.mxu0 0.0
      %2070 = vmatpush1.msra.mxu0 0.0
      %2071 = vmatprep.subr.mxu0 0.0
      %2072 = vmatpush1.msra.mxu0 0.0
      %2073 = vmatprep.subr.mxu0 0.0
      %2074 = vmatpush1.msra.mxu0 0.0
      %2075 = vmatprep.subr.mxu0 0.0
      %2076 = vmatpush1.msra.mxu0 0.0
      %2077 = vmatprep.mubr.f32.mxu0 0.0
      %2078 = vmatmul.mubr.f32.gmra.mrb[0].mxu0 %v2011
      %v2079 = vpop.f32.mrb[0].mxu0
      %v2080 = vadd.f32 %v1936, %v2079
      %v2081 = vpop.f32.mrb[0].mxu0
      %v2082 = vadd.f32 %v1938, %v2081
      %2083 = vdwg.mxu0
      %2084 = vmatprep.subr.mxu0 0.0
      %2085 = vmatpush1.msra.mxu0 %v1848
      %2086 = vmatprep.subr.mxu0 0.0
      %2087 = vmatpush1.msra.mxu0 0.0
      %2088 = vmatprep.subr.mxu0 0.0
      %2089 = vmatpush1.msra.mxu0 0.0
      %2090 = vmatprep.subr.mxu0 0.0
      %2091 = vmatpush1.msra.mxu0 0.0
      %2092 = vmatprep.subr.mxu0 0.0
      %2093 = vmatpush1.msra.mxu0 0.0
      %2094 = vmatprep.subr.mxu0 0.0
      %2095 = vmatpush1.msra.mxu0 0.0
      %2096 = vmatprep.subr.mxu0 0.0
      %2097 = vmatpush1.msra.mxu0 0.0
      %2098 = vmatprep.subr.mxu0 0.0
      %2099 = vmatpush1.msra.mxu0 0.0
      %2100 = vmatprep.subr.mxu0 0.0
      %2101 = vmatpush1.msra.mxu0 0.0
      %2102 = vmatprep.subr.mxu0 0.0
      %2103 = vmatpush1.msra.mxu0 0.0
      %2104 = vmatprep.subr.mxu0 0.0
      %2105 = vmatpush1.msra.mxu0 0.0
      %2106 = vmatprep.subr.mxu0 0.0
      %2107 = vmatpush1.msra.mxu0 0.0
      %2108 = vmatprep.subr.mxu0 0.0
      %2109 = vmatpush1.msra.mxu0 0.0
      %2110 = vmatprep.subr.mxu0 0.0
      %2111 = vmatpush1.msra.mxu0 0.0
      %2112 = vmatprep.subr.mxu0 0.0
      %2113 = vmatpush1.msra.mxu0 0.0
      %2114 = vmatprep.subr.mxu0 0.0
      %2115 = vmatpush1.msra.mxu0 0.0
      %2116 = vmatprep.subr.mxu0 0.0
      %2117 = vmatpush1.msra.mxu0 0.0
      %2118 = vmatprep.subr.mxu0 0.0
      %2119 = vmatpush1.msra.mxu0 0.0
      %2120 = vmatprep.subr.mxu0 0.0
      %2121 = vmatpush1.msra.mxu0 0.0
      %2122 = vmatprep.subr.mxu0 0.0
      %2123 = vmatpush1.msra.mxu0 0.0
      %2124 = vmatprep.subr.mxu0 0.0
      %2125 = vmatpush1.msra.mxu0 0.0
      %2126 = vmatprep.subr.mxu0 0.0
      %2127 = vmatpush1.msra.mxu0 0.0
      %2128 = vmatprep.subr.mxu0 0.0
      %2129 = vmatpush1.msra.mxu0 0.0
      %2130 = vmatprep.subr.mxu0 0.0
      %2131 = vmatpush1.msra.mxu0 0.0
      %2132 = vmatprep.subr.mxu0 0.0
      %2133 = vmatpush1.msra.mxu0 0.0
      %2134 = vmatprep.subr.mxu0 0.0
      %2135 = vmatpush1.msra.mxu0 0.0
      %2136 = vmatprep.subr.mxu0 0.0
      %2137 = vmatpush1.msra.mxu0 0.0
      %2138 = vmatprep.subr.mxu0 0.0
      %2139 = vmatpush1.msra.mxu0 0.0
      %2140 = vmatprep.subr.mxu0 0.0
      %2141 = vmatpush1.msra.mxu0 0.0
      %2142 = vmatprep.subr.mxu0 0.0
      %2143 = vmatpush1.msra.mxu0 0.0
      %2144 = vmatprep.subr.mxu0 0.0
      %2145 = vmatpush1.msra.mxu0 0.0
      %2146 = vmatprep.subr.mxu0 0.0
      %2147 = vmatpush1.msra.mxu0 0.0
      %2148 = vmatprep.mubr.f32.mxu0 0.0
      %2149 = vmatmul.mubr.f32.gmra.mrb[0].mxu0 %v2011
      %v2150 = vpop.f32.mrb[0].mxu0
      %v2151 = vadd.f32 %v2007, %v2150
      %v2152 = vpop.f32.mrb[0].mxu0
      %2153 = vdwg.mxu0
      %s2154 = scalar_lea.vmem %s4, 16
      %v2155 = vld [vmem:[%s2154] sm:$0xff]
      %2156 = vrot.lane.b32.xlu0 %v1846, 126
      %v2157 = vpop.permute.xlu0 %2156
      %2158 = vrot.lane.b32.xlu0 %v1847, 126
      %v2159 = vpop.permute.xlu0 %2158
      %2160 = vrot.lane.b32.xlu0 %v1848, 126
      %v2161 = vpop.permute.xlu0 %2160
      %v2162 = vsel %vm639, %v2157, %v2159
      %v2163 = vsel %vm639, %v2159, %v2161
      %v2168 = vsel %vm1865, %v2155, 0
      %2170 = vmatprep.subr.mxu0 %v2163
      %2171 = vmatpush1.msra.mxu0 %v2162
      %2172 = vmatprep.subr.mxu0 0.0
      %2173 = vmatpush1.msra.mxu0 0.0
      %2174 = vmatprep.subr.mxu0 0.0
      %2175 = vmatpush1.msra.mxu0 0.0
      %2176 = vmatprep.subr.mxu0 0.0
      %2177 = vmatpush1.msra.mxu0 0.0
      %2178 = vmatprep.subr.mxu0 0.0
      %2179 = vmatpush1.msra.mxu0 0.0
      %2180 = vmatprep.subr.mxu0 0.0
      %2181 = vmatpush1.msra.mxu0 0.0
      %2182 = vmatprep.subr.mxu0 0.0
      %2183 = vmatpush1.msra.mxu0 0.0
      %2184 = vmatprep.subr.mxu0 0.0
      %2185 = vmatpush1.msra.mxu0 0.0
      %2186 = vmatprep.subr.mxu0 0.0
      %2187 = vmatpush1.msra.mxu0 0.0
      %2188 = vmatprep.subr.mxu0 0.0
      %2189 = vmatpush1.msra.mxu0 0.0
      %2190 = vmatprep.subr.mxu0 0.0
      %2191 = vmatpush1.msra.mxu0 0.0
      %2192 = vmatprep.subr.mxu0 0.0
      %2193 = vmatpush1.msra.mxu0 0.0
      %2194 = vmatprep.subr.mxu0 0.0
      %2195 = vmatpush1.msra.mxu0 0.0
      %2196 = vmatprep.subr.mxu0 0.0
      %2197 = vmatpush1.msra.mxu0 0.0
      %2198 = vmatprep.subr.mxu0 0.0
      %2199 = vmatpush1.msra.mxu0 0.0
      %2200 = vmatprep.subr.mxu0 0.0
      %2201 = vmatpush1.msra.mxu0 0.0
      %2202 = vmatprep.subr.mxu0 0.0
      %2203 = vmatpush1.msra.mxu0 0.0
      %2204 = vmatprep.subr.mxu0 0.0
      %2205 = vmatpush1.msra.mxu0 0.0
      %2206 = vmatprep.subr.mxu0 0.0
      %2207 = vmatpush1.msra.mxu0 0.0
      %2208 = vmatprep.subr.mxu0 0.0
      %2209 = vmatpush1.msra.mxu0 0.0
      %2210 = vmatprep.subr.mxu0 0.0
      %2211 = vmatpush1.msra.mxu0 0.0
      %2212 = vmatprep.subr.mxu0 0.0
      %2213 = vmatpush1.msra.mxu0 0.0
      %2214 = vmatprep.subr.mxu0 0.0
      %2215 = vmatpush1.msra.mxu0 0.0
      %2216 = vmatprep.subr.mxu0 0.0
      %2217 = vmatpush1.msra.mxu0 0.0
      %2218 = vmatprep.subr.mxu0 0.0
      %2219 = vmatpush1.msra.mxu0 0.0
      %2220 = vmatprep.subr.mxu0 0.0
      %2221 = vmatpush1.msra.mxu0 0.0
      %2222 = vmatprep.subr.mxu0 0.0
      %2223 = vmatpush1.msra.mxu0 0.0
      %2224 = vmatprep.subr.mxu0 0.0
      %2225 = vmatpush1.msra.mxu0 0.0
      %2226 = vmatprep.subr.mxu0 0.0
      %2227 = vmatpush1.msra.mxu0 0.0
      %2228 = vmatprep.subr.mxu0 0.0
      %2229 = vmatpush1.msra.mxu0 0.0
      %2230 = vmatprep.subr.mxu0 0.0
      %2231 = vmatpush1.msra.mxu0 0.0
      %2232 = vmatprep.subr.mxu0 0.0
      %2233 = vmatpush1.msra.mxu0 0.0
      %2234 = vmatprep.mubr.f32.mxu0 0.0
      %2235 = vmatmul.mubr.f32.gmra.mrb[0].mxu0 %v2168
      %v2236 = vpop.f32.mrb[0].mxu0
      %v2237 = vadd.f32 0.0, %v2236
      %v2238 = vpop.f32.mrb[0].mxu0
      %v2239 = vadd.f32 0.0, %v2238
      %2240 = vdwg.mxu0
      %2241 = vmatprep.subr.mxu0 0.0
      %2242 = vmatpush1.msra.mxu0 %v2161
      %2243 = vmatprep.subr.mxu0 0.0
      %2244 = vmatpush1.msra.mxu0 0.0
      %2245 = vmatprep.subr.mxu0 0.0
      %2246 = vmatpush1.msra.mxu0 0.0
      %2247 = vmatprep.subr.mxu0 0.0
      %2248 = vmatpush1.msra.mxu0 0.0
      %2249 = vmatprep.subr.mxu0 0.0
      %2250 = vmatpush1.msra.mxu0 0.0
      %2251 = vmatprep.subr.mxu0 0.0
      %2252 = vmatpush1.msra.mxu0 0.0
      %2253 = vmatprep.subr.mxu0 0.0
      %2254 = vmatpush1.msra.mxu0 0.0
      %2255 = vmatprep.subr.mxu0 0.0
      %2256 = vmatpush1.msra.mxu0 0.0
      %2257 = vmatprep.subr.mxu0 0.0
      %2258 = vmatpush1.msra.mxu0 0.0
      %2259 = vmatprep.subr.mxu0 0.0
      %2260 = vmatpush1.msra.mxu0 0.0
      %2261 = vmatprep.subr.mxu0 0.0
      %2262 = vmatpush1.msra.mxu0 0.0
      %2263 = vmatprep.subr.mxu0 0.0
      %2264 = vmatpush1.msra.mxu0 0.0
      %2265 = vmatprep.subr.mxu0 0.0
      %2266 = vmatpush1.msra.mxu0 0.0
      %2267 = vmatprep.subr.mxu0 0.0
      %2268 = vmatpush1.msra.mxu0 0.0
      %2269 = vmatprep.subr.mxu0 0.0
      %2270 = vmatpush1.msra.mxu0 0.0
      %2271 = vmatprep.subr.mxu0 0.0
      %2272 = vmatpush1.msra.mxu0 0.0
      %2273 = vmatprep.subr.mxu0 0.0
      %2274 = vmatpush1.msra.mxu0 0.0
      %2275 = vmatprep.subr.mxu0 0.0
      %2276 = vmatpush1.msra.mxu0 0.0
      %2277 = vmatprep.subr.mxu0 0.0
      %2278 = vmatpush1.msra.mxu0 0.0
      %2279 = vmatprep.subr.mxu0 0.0
      %2280 = vmatpush1.msra.mxu0 0.0
      %2281 = vmatprep.subr.mxu0 0.0
      %2282 = vmatpush1.msra.mxu0 0.0
      %2283 = vmatprep.subr.mxu0 0.0
      %2284 = vmatpush1.msra.mxu0 0.0
      %2285 = vmatprep.subr.mxu0 0.0
      %2286 = vmatpush1.msra.mxu0 0.0
      %2287 = vmatprep.subr.mxu0 0.0
      %2288 = vmatpush1.msra.mxu0 0.0
      %2289 = vmatprep.subr.mxu0 0.0
      %2290 = vmatpush1.msra.mxu0 0.0
      %2291 = vmatprep.subr.mxu0 0.0
      %2292 = vmatpush1.msra.mxu0 0.0
      %2293 = vmatprep.subr.mxu0 0.0
      %2294 = vmatpush1.msra.mxu0 0.0
      %2295 = vmatprep.subr.mxu0 0.0
      %2296 = vmatpush1.msra.mxu0 0.0
      %2297 = vmatprep.subr.mxu0 0.0
      %2298 = vmatpush1.msra.mxu0 0.0
      %2299 = vmatprep.subr.mxu0 0.0
      %2300 = vmatpush1.msra.mxu0 0.0
      %2301 = vmatprep.subr.mxu0 0.0
      %2302 = vmatpush1.msra.mxu0 0.0
      %2303 = vmatprep.subr.mxu0 0.0
      %2304 = vmatpush1.msra.mxu0 0.0
      %2305 = vmatprep.mubr.f32.mxu0 0.0
      %2306 = vmatmul.mubr.f32.gmra.mrb[0].mxu0 %v2168
      %v2307 = vpop.f32.mrb[0].mxu0
      %v2308 = vadd.f32 0.0, %v2307
      %v2309 = vpop.f32.mrb[0].mxu0
      %2310 = vdwg.mxu0
      %v2311 = vadd.f32 %v2080, %v2237
      %v2312 = vadd.f32 %v2082, %v2239
      %v2313 = vadd.f32 %v2151, %v2308
      %s2314 = scalar_lea.vmem %s4, 24
      %v2315 = vld [vmem:[%s2314] sm:$0xff]
      %2316 = vrot.lane.b32.xlu0 %v1846, 110
      %v2317 = vpop.permute.xlu0 %2316
      %2318 = vrot.lane.b32.xlu0 %v1847, 110
      %v2319 = vpop.permute.xlu0 %2318
      %2320 = vrot.lane.b32.xlu0 %v1848, 110
      %v2321 = vpop.permute.xlu0 %2320
      %v2322 = vsel %vm808, %v2317, %v2319
      %v2323 = vsel %vm808, %v2319, %v2321
      %v2328 = vsel %vm1865, %v2315, 0
      %2330 = vmatprep.subr.mxu0 %v2323
      %2331 = vmatpush1.msra.mxu0 %v2322
      %2332 = vmatprep.subr.mxu0 0.0
      %2333 = vmatpush1.msra.mxu0 0.0
      %2334 = vmatprep.subr.mxu0 0.0
      %2335 = vmatpush1.msra.mxu0 0.0
      %2336 = vmatprep.subr.mxu0 0.0
      %2337 = vmatpush1.msra.mxu0 0.0
      %2338 = vmatprep.subr.mxu0 0.0
      %2339 = vmatpush1.msra.mxu0 0.0
      %2340 = vmatprep.subr.mxu0 0.0
      %2341 = vmatpush1.msra.mxu0 0.0
      %2342 = vmatprep.subr.mxu0 0.0
      %2343 = vmatpush1.msra.mxu0 0.0
      %2344 = vmatprep.subr.mxu0 0.0
      %2345 = vmatpush1.msra.mxu0 0.0
      %2346 = vmatprep.subr.mxu0 0.0
      %2347 = vmatpush1.msra.mxu0 0.0
      %2348 = vmatprep.subr.mxu0 0.0
      %2349 = vmatpush1.msra.mxu0 0.0
      %2350 = vmatprep.subr.mxu0 0.0
      %2351 = vmatpush1.msra.mxu0 0.0
      %2352 = vmatprep.subr.mxu0 0.0
      %2353 = vmatpush1.msra.mxu0 0.0
      %2354 = vmatprep.subr.mxu0 0.0
      %2355 = vmatpush1.msra.mxu0 0.0
      %2356 = vmatprep.subr.mxu0 0.0
      %2357 = vmatpush1.msra.mxu0 0.0
      %2358 = vmatprep.subr.mxu0 0.0
      %2359 = vmatpush1.msra.mxu0 0.0
      %2360 = vmatprep.subr.mxu0 0.0
      %2361 = vmatpush1.msra.mxu0 0.0
      %2362 = vmatprep.subr.mxu0 0.0
      %2363 = vmatpush1.msra.mxu0 0.0
      %2364 = vmatprep.subr.mxu0 0.0
      %2365 = vmatpush1.msra.mxu0 0.0
      %2366 = vmatprep.subr.mxu0 0.0
      %2367 = vmatpush1.msra.mxu0 0.0
      %2368 = vmatprep.subr.mxu0 0.0
      %2369 = vmatpush1.msra.mxu0 0.0
      %2370 = vmatprep.subr.mxu0 0.0
      %2371 = vmatpush1.msra.mxu0 0.0
      %2372 = vmatprep.subr.mxu0 0.0
      %2373 = vmatpush1.msra.mxu0 0.0
      %2374 = vmatprep.subr.mxu0 0.0
      %2375 = vmatpush1.msra.mxu0 0.0
      %2376 = vmatprep.subr.mxu0 0.0
      %2377 = vmatpush1.msra.mxu0 0.0
      %2378 = vmatprep.subr.mxu0 0.0
      %2379 = vmatpush1.msra.mxu0 0.0
      %2380 = vmatprep.subr.mxu0 0.0
      %2381 = vmatpush1.msra.mxu0 0.0
      %2382 = vmatprep.subr.mxu0 0.0
      %2383 = vmatpush1.msra.mxu0 0.0
      %2384 = vmatprep.subr.mxu0 0.0
      %2385 = vmatpush1.msra.mxu0 0.0
      %2386 = vmatprep.subr.mxu0 0.0
      %2387 = vmatpush1.msra.mxu0 0.0
      %2388 = vmatprep.subr.mxu0 0.0
      %2389 = vmatpush1.msra.mxu0 0.0
      %2390 = vmatprep.subr.mxu0 0.0
      %2391 = vmatpush1.msra.mxu0 0.0
      %2392 = vmatprep.subr.mxu0 0.0
      %2393 = vmatpush1.msra.mxu0 0.0
      %2394 = vmatprep.mubr.f32.mxu0 0.0
      %2395 = vmatmul.mubr.f32.gmra.mrb[0].mxu0 %v2328
      %v2396 = vpop.f32.mrb[0].mxu0
      %v2397 = vadd.f32 0.0, %v2396
      %v2398 = vpop.f32.mrb[0].mxu0
      %v2399 = vadd.f32 0.0, %v2398
      %2400 = vdwg.mxu0
      %2401 = vmatprep.subr.mxu0 0.0
      %2402 = vmatpush1.msra.mxu0 %v2321
      %2403 = vmatprep.subr.mxu0 0.0
      %2404 = vmatpush1.msra.mxu0 0.0
      %2405 = vmatprep.subr.mxu0 0.0
      %2406 = vmatpush1.msra.mxu0 0.0
      %2407 = vmatprep.subr.mxu0 0.0
      %2408 = vmatpush1.msra.mxu0 0.0
      %2409 = vmatprep.subr.mxu0 0.0
      %2410 = vmatpush1.msra.mxu0 0.0
      %2411 = vmatprep.subr.mxu0 0.0
      %2412 = vmatpush1.msra.mxu0 0.0
      %2413 = vmatprep.subr.mxu0 0.0
      %2414 = vmatpush1.msra.mxu0 0.0
      %2415 = vmatprep.subr.mxu0 0.0
      %2416 = vmatpush1.msra.mxu0 0.0
      %2417 = vmatprep.subr.mxu0 0.0
      %2418 = vmatpush1.msra.mxu0 0.0
      %2419 = vmatprep.subr.mxu0 0.0
      %2420 = vmatpush1.msra.mxu0 0.0
      %2421 = vmatprep.subr.mxu0 0.0
      %2422 = vmatpush1.msra.mxu0 0.0
      %2423 = vmatprep.subr.mxu0 0.0
      %2424 = vmatpush1.msra.mxu0 0.0
      %2425 = vmatprep.subr.mxu0 0.0
      %2426 = vmatpush1.msra.mxu0 0.0
      %2427 = vmatprep.subr.mxu0 0.0
      %2428 = vmatpush1.msra.mxu0 0.0
      %2429 = vmatprep.subr.mxu0 0.0
      %2430 = vmatpush1.msra.mxu0 0.0
      %2431 = vmatprep.subr.mxu0 0.0
      %2432 = vmatpush1.msra.mxu0 0.0
      %2433 = vmatprep.subr.mxu0 0.0
      %2434 = vmatpush1.msra.mxu0 0.0
      %2435 = vmatprep.subr.mxu0 0.0
      %2436 = vmatpush1.msra.mxu0 0.0
      %2437 = vmatprep.subr.mxu0 0.0
      %2438 = vmatpush1.msra.mxu0 0.0
      %2439 = vmatprep.subr.mxu0 0.0
      %2440 = vmatpush1.msra.mxu0 0.0
      %2441 = vmatprep.subr.mxu0 0.0
      %2442 = vmatpush1.msra.mxu0 0.0
      %2443 = vmatprep.subr.mxu0 0.0
      %2444 = vmatpush1.msra.mxu0 0.0
      %2445 = vmatprep.subr.mxu0 0.0
      %2446 = vmatpush1.msra.mxu0 0.0
      %2447 = vmatprep.subr.mxu0 0.0
      %2448 = vmatpush1.msra.mxu0 0.0
      %2449 = vmatprep.subr.mxu0 0.0
      %2450 = vmatpush1.msra.mxu0 0.0
      %2451 = vmatprep.subr.mxu0 0.0
      %2452 = vmatpush1.msra.mxu0 0.0
      %2453 = vmatprep.subr.mxu0 0.0
      %2454 = vmatpush1.msra.mxu0 0.0
      %2455 = vmatprep.subr.mxu0 0.0
      %2456 = vmatpush1.msra.mxu0 0.0
      %2457 = vmatprep.subr.mxu0 0.0
      %2458 = vmatpush1.msra.mxu0 0.0
      %2459 = vmatprep.subr.mxu0 0.0
      %2460 = vmatpush1.msra.mxu0 0.0
      %2461 = vmatprep.subr.mxu0 0.0
      %2462 = vmatpush1.msra.mxu0 0.0
      %2463 = vmatprep.subr.mxu0 0.0
      %2464 = vmatpush1.msra.mxu0 0.0
      %2465 = vmatprep.mubr.f32.mxu0 0.0
      %2466 = vmatmul.mubr.f32.gmra.mrb[0].mxu0 %v2328
      %v2467 = vpop.f32.mrb[0].mxu0
      %v2468 = vadd.f32 0.0, %v2467
      %v2469 = vpop.f32.mrb[0].mxu0
      %2470 = vdwg.mxu0
      %v2471 = vadd.f32 %v2311, %v2397
      %v2472 = vadd.f32 %v2312, %v2399
      %v2473 = vadd.f32 %v2313, %v2468
      %s2474 = scalar_lea.vmem %s4, 32
      %v2475 = vld [vmem:[%s2474] sm:$0xff]
      %2476 = vrot.lane.b32.xlu0 %v1846, 109
      %v2477 = vpop.permute.xlu0 %2476
      %2478 = vrot.lane.b32.xlu0 %v1847, 109
      %v2479 = vpop.permute.xlu0 %2478
      %2480 = vrot.lane.b32.xlu0 %v1848, 109
      %v2481 = vpop.permute.xlu0 %2480
      %v2482 = vsel %vm977, %v2477, %v2479
      %v2483 = vsel %vm977, %v2479, %v2481
      %v2488 = vsel %vm1865, %v2475, 0
      %2490 = vmatprep.subr.mxu0 %v2483
      %2491 = vmatpush1.msra.mxu0 %v2482
      %2492 = vmatprep.subr.mxu0 0.0
      %2493 = vmatpush1.msra.mxu0 0.0
      %2494 = vmatprep.subr.mxu0 0.0
      %2495 = vmatpush1.msra.mxu0 0.0
      %2496 = vmatprep.subr.mxu0 0.0
      %2497 = vmatpush1.msra.mxu0 0.0
      %2498 = vmatprep.subr.mxu0 0.0
      %2499 = vmatpush1.msra.mxu0 0.0
      %2500 = vmatprep.subr.mxu0 0.0
      %2501 = vmatpush1.msra.mxu0 0.0
      %2502 = vmatprep.subr.mxu0 0.0
      %2503 = vmatpush1.msra.mxu0 0.0
      %2504 = vmatprep.subr.mxu0 0.0
      %2505 = vmatpush1.msra.mxu0 0.0
      %2506 = vmatprep.subr.mxu0 0.0
      %2507 = vmatpush1.msra.mxu0 0.0
      %2508 = vmatprep.subr.mxu0 0.0
      %2509 = vmatpush1.msra.mxu0 0.0
      %2510 = vmatprep.subr.mxu0 0.0
      %2511 = vmatpush1.msra.mxu0 0.0
      %2512 = vmatprep.subr.mxu0 0.0
      %2513 = vmatpush1.msra.mxu0 0.0
      %2514 = vmatprep.subr.mxu0 0.0
      %2515 = vmatpush1.msra.mxu0 0.0
      %2516 = vmatprep.subr.mxu0 0.0
      %2517 = vmatpush1.msra.mxu0 0.0
      %2518 = vmatprep.subr.mxu0 0.0
      %2519 = vmatpush1.msra.mxu0 0.0
      %2520 = vmatprep.subr.mxu0 0.0
      %2521 = vmatpush1.msra.mxu0 0.0
      %2522 = vmatprep.subr.mxu0 0.0
      %2523 = vmatpush1.msra.mxu0 0.0
      %2524 = vmatprep.subr.mxu0 0.0
      %2525 = vmatpush1.msra.mxu0 0.0
      %2526 = vmatprep.subr.mxu0 0.0
      %2527 = vmatpush1.msra.mxu0 0.0
      %2528 = vmatprep.subr.mxu0 0.0
      %2529 = vmatpush1.msra.mxu0 0.0
      %2530 = vmatprep.subr.mxu0 0.0
      %2531 = vmatpush1.msra.mxu0 0.0
      %2532 = vmatprep.subr.mxu0 0.0
      %2533 = vmatpush1.msra.mxu0 0.0
      %2534 = vmatprep.subr.mxu0 0.0
      %2535 = vmatpush1.msra.mxu0 0.0
      %2536 = vmatprep.subr.mxu0 0.0
      %2537 = vmatpush1.msra.mxu0 0.0
      %2538 = vmatprep.subr.mxu0 0.0
      %2539 = vmatpush1.msra.mxu0 0.0
      %2540 = vmatprep.subr.mxu0 0.0
      %2541 = vmatpush1.msra.mxu0 0.0
      %2542 = vmatprep.subr.mxu0 0.0
      %2543 = vmatpush1.msra.mxu0 0.0
      %2544 = vmatprep.subr.mxu0 0.0
      %2545 = vmatpush1.msra.mxu0 0.0
      %2546 = vmatprep.subr.mxu0 0.0
      %2547 = vmatpush1.msra.mxu0 0.0
      %2548 = vmatprep.subr.mxu0 0.0
      %2549 = vmatpush1.msra.mxu0 0.0
      %2550 = vmatprep.subr.mxu0 0.0
      %2551 = vmatpush1.msra.mxu0 0.0
      %2552 = vmatprep.subr.mxu0 0.0
      %2553 = vmatpush1.msra.mxu0 0.0
      %2554 = vmatprep.mubr.f32.mxu0 0.0
      %2555 = vmatmul.mubr.f32.gmra.mrb[0].mxu0 %v2488
      %v2556 = vpop.f32.mrb[0].mxu0
      %v2557 = vadd.f32 0.0, %v2556
      %v2558 = vpop.f32.mrb[0].mxu0
      %v2559 = vadd.f32 0.0, %v2558
      %2560 = vdwg.mxu0
      %2561 = vmatprep.subr.mxu0 0.0
      %2562 = vmatpush1.msra.mxu0 %v2481
      %2563 = vmatprep.subr.mxu0 0.0
      %2564 = vmatpush1.msra.mxu0 0.0
      %2565 = vmatprep.subr.mxu0 0.0
      %2566 = vmatpush1.msra.mxu0 0.0
      %2567 = vmatprep.subr.mxu0 0.0
      %2568 = vmatpush1.msra.mxu0 0.0
      %2569 = vmatprep.subr.mxu0 0.0
      %2570 = vmatpush1.msra.mxu0 0.0
      %2571 = vmatprep.subr.mxu0 0.0
      %2572 = vmatpush1.msra.mxu0 0.0
      %2573 = vmatprep.subr.mxu0 0.0
      %2574 = vmatpush1.msra.mxu0 0.0
      %2575 = vmatprep.subr.mxu0 0.0
      %2576 = vmatpush1.msra.mxu0 0.0
      %2577 = vmatprep.subr.mxu0 0.0
      %2578 = vmatpush1.msra.mxu0 0.0
      %2579 = vmatprep.subr.mxu0 0.0
      %2580 = vmatpush1.msra.mxu0 0.0
      %2581 = vmatprep.subr.mxu0 0.0
      %2582 = vmatpush1.msra.mxu0 0.0
      %2583 = vmatprep.subr.mxu0 0.0
      %2584 = vmatpush1.msra.mxu0 0.0
      %2585 = vmatprep.subr.mxu0 0.0
      %2586 = vmatpush1.msra.mxu0 0.0
      %2587 = vmatprep.subr.mxu0 0.0
      %2588 = vmatpush1.msra.mxu0 0.0
      %2589 = vmatprep.subr.mxu0 0.0
      %2590 = vmatpush1.msra.mxu0 0.0
      %2591 = vmatprep.subr.mxu0 0.0
      %2592 = vmatpush1.msra.mxu0 0.0
      %2593 = vmatprep.subr.mxu0 0.0
      %2594 = vmatpush1.msra.mxu0 0.0
      %2595 = vmatprep.subr.mxu0 0.0
      %2596 = vmatpush1.msra.mxu0 0.0
      %2597 = vmatprep.subr.mxu0 0.0
      %2598 = vmatpush1.msra.mxu0 0.0
      %2599 = vmatprep.subr.mxu0 0.0
      %2600 = vmatpush1.msra.mxu0 0.0
      %2601 = vmatprep.subr.mxu0 0.0
      %2602 = vmatpush1.msra.mxu0 0.0
      %2603 = vmatprep.subr.mxu0 0.0
      %2604 = vmatpush1.msra.mxu0 0.0
      %2605 = vmatprep.subr.mxu0 0.0
      %2606 = vmatpush1.msra.mxu0 0.0
      %2607 = vmatprep.subr.mxu0 0.0
      %2608 = vmatpush1.msra.mxu0 0.0
      %2609 = vmatprep.subr.mxu0 0.0
      %2610 = vmatpush1.msra.mxu0 0.0
      %2611 = vmatprep.subr.mxu0 0.0
      %2612 = vmatpush1.msra.mxu0 0.0
      %2613 = vmatprep.subr.mxu0 0.0
      %2614 = vmatpush1.msra.mxu0 0.0
      %2615 = vmatprep.subr.mxu0 0.0
      %2616 = vmatpush1.msra.mxu0 0.0
      %2617 = vmatprep.subr.mxu0 0.0
      %2618 = vmatpush1.msra.mxu0 0.0
      %2619 = vmatprep.subr.mxu0 0.0
      %2620 = vmatpush1.msra.mxu0 0.0
      %2621 = vmatprep.subr.mxu0 0.0
      %2622 = vmatpush1.msra.mxu0 0.0
      %2623 = vmatprep.subr.mxu0 0.0
      %2624 = vmatpush1.msra.mxu0 0.0
      %2625 = vmatprep.mubr.f32.mxu0 0.0
      %2626 = vmatmul.mubr.f32.gmra.mrb[0].mxu0 %v2488
      %v2627 = vpop.f32.mrb[0].mxu0
      %v2628 = vadd.f32 0.0, %v2627
      %v2629 = vpop.f32.mrb[0].mxu0
      %2630 = vdwg.mxu0
      %v2631 = vadd.f32 %v2471, %v2557
      %v2632 = vadd.f32 %v2472, %v2559
      %v2633 = vadd.f32 %v2473, %v2628
      %s2634 = scalar_lea.vmem %s4, 40
      %v2635 = vld [vmem:[%s2634] sm:$0xff]
      %2636 = vrot.lane.b32.xlu0 %v1846, 108
      %v2637 = vpop.permute.xlu0 %2636
      %2638 = vrot.lane.b32.xlu0 %v1847, 108
      %v2639 = vpop.permute.xlu0 %2638
      %2640 = vrot.lane.b32.xlu0 %v1848, 108
      %v2641 = vpop.permute.xlu0 %2640
      %v2642 = vsel %vm1146, %v2637, %v2639
      %v2643 = vsel %vm1146, %v2639, %v2641
      %v2648 = vsel %vm1865, %v2635, 0
      %2650 = vmatprep.subr.mxu0 %v2643
      %2651 = vmatpush1.msra.mxu0 %v2642
      %2652 = vmatprep.subr.mxu0 0.0
      %2653 = vmatpush1.msra.mxu0 0.0
      %2654 = vmatprep.subr.mxu0 0.0
      %2655 = vmatpush1.msra.mxu0 0.0
      %2656 = vmatprep.subr.mxu0 0.0
      %2657 = vmatpush1.msra.mxu0 0.0
      %2658 = vmatprep.subr.mxu0 0.0
      %2659 = vmatpush1.msra.mxu0 0.0
      %2660 = vmatprep.subr.mxu0 0.0
      %2661 = vmatpush1.msra.mxu0 0.0
      %2662 = vmatprep.subr.mxu0 0.0
      %2663 = vmatpush1.msra.mxu0 0.0
      %2664 = vmatprep.subr.mxu0 0.0
      %2665 = vmatpush1.msra.mxu0 0.0
      %2666 = vmatprep.subr.mxu0 0.0
      %2667 = vmatpush1.msra.mxu0 0.0
      %2668 = vmatprep.subr.mxu0 0.0
      %2669 = vmatpush1.msra.mxu0 0.0
      %2670 = vmatprep.subr.mxu0 0.0
      %2671 = vmatpush1.msra.mxu0 0.0
      %2672 = vmatprep.subr.mxu0 0.0
      %2673 = vmatpush1.msra.mxu0 0.0
      %2674 = vmatprep.subr.mxu0 0.0
      %2675 = vmatpush1.msra.mxu0 0.0
      %2676 = vmatprep.subr.mxu0 0.0
      %2677 = vmatpush1.msra.mxu0 0.0
      %2678 = vmatprep.subr.mxu0 0.0
      %2679 = vmatpush1.msra.mxu0 0.0
      %2680 = vmatprep.subr.mxu0 0.0
      %2681 = vmatpush1.msra.mxu0 0.0
      %2682 = vmatprep.subr.mxu0 0.0
      %2683 = vmatpush1.msra.mxu0 0.0
      %2684 = vmatprep.subr.mxu0 0.0
      %2685 = vmatpush1.msra.mxu0 0.0
      %2686 = vmatprep.subr.mxu0 0.0
      %2687 = vmatpush1.msra.mxu0 0.0
      %2688 = vmatprep.subr.mxu0 0.0
      %2689 = vmatpush1.msra.mxu0 0.0
      %2690 = vmatprep.subr.mxu0 0.0
      %2691 = vmatpush1.msra.mxu0 0.0
      %2692 = vmatprep.subr.mxu0 0.0
      %2693 = vmatpush1.msra.mxu0 0.0
      %2694 = vmatprep.subr.mxu0 0.0
      %2695 = vmatpush1.msra.mxu0 0.0
      %2696 = vmatprep.subr.mxu0 0.0
      %2697 = vmatpush1.msra.mxu0 0.0
      %2698 = vmatprep.subr.mxu0 0.0
      %2699 = vmatpush1.msra.mxu0 0.0
      %2700 = vmatprep.subr.mxu0 0.0
      %2701 = vmatpush1.msra.mxu0 0.0
      %2702 = vmatprep.subr.mxu0 0.0
      %2703 = vmatpush1.msra.mxu0 0.0
      %2704 = vmatprep.subr.mxu0 0.0
      %2705 = vmatpush1.msra.mxu0 0.0
      %2706 = vmatprep.subr.mxu0 0.0
      %2707 = vmatpush1.msra.mxu0 0.0
      %2708 = vmatprep.subr.mxu0 0.0
      %2709 = vmatpush1.msra.mxu0 0.0
      %2710 = vmatprep.subr.mxu0 0.0
      %2711 = vmatpush1.msra.mxu0 0.0
      %2712 = vmatprep.subr.mxu0 0.0
      %2713 = vmatpush1.msra.mxu0 0.0
      %2714 = vmatprep.mubr.f32.mxu0 0.0
      %2715 = vmatmul.mubr.f32.gmra.mrb[0].mxu0 %v2648
      %v2716 = vpop.f32.mrb[0].mxu0
      %v2717 = vadd.f32 0.0, %v2716
      %v2718 = vpop.f32.mrb[0].mxu0
      %v2719 = vadd.f32 0.0, %v2718
      %2720 = vdwg.mxu0
      %2721 = vmatprep.subr.mxu0 0.0
      %2722 = vmatpush1.msra.mxu0 %v2641
      %2723 = vmatprep.subr.mxu0 0.0
      %2724 = vmatpush1.msra.mxu0 0.0
      %2725 = vmatprep.subr.mxu0 0.0
      %2726 = vmatpush1.msra.mxu0 0.0
      %2727 = vmatprep.subr.mxu0 0.0
      %2728 = vmatpush1.msra.mxu0 0.0
      %2729 = vmatprep.subr.mxu0 0.0
      %2730 = vmatpush1.msra.mxu0 0.0
      %2731 = vmatprep.subr.mxu0 0.0
      %2732 = vmatpush1.msra.mxu0 0.0
      %2733 = vmatprep.subr.mxu0 0.0
      %2734 = vmatpush1.msra.mxu0 0.0
      %2735 = vmatprep.subr.mxu0 0.0
      %2736 = vmatpush1.msra.mxu0 0.0
      %2737 = vmatprep.subr.mxu0 0.0
      %2738 = vmatpush1.msra.mxu0 0.0
      %2739 = vmatprep.subr.mxu0 0.0
      %2740 = vmatpush1.msra.mxu0 0.0
      %2741 = vmatprep.subr.mxu0 0.0
      %2742 = vmatpush1.msra.mxu0 0.0
      %2743 = vmatprep.subr.mxu0 0.0
      %2744 = vmatpush1.msra.mxu0 0.0
      %2745 = vmatprep.subr.mxu0 0.0
      %2746 = vmatpush1.msra.mxu0 0.0
      %2747 = vmatprep.subr.mxu0 0.0
      %2748 = vmatpush1.msra.mxu0 0.0
      %2749 = vmatprep.subr.mxu0 0.0
      %2750 = vmatpush1.msra.mxu0 0.0
      %2751 = vmatprep.subr.mxu0 0.0
      %2752 = vmatpush1.msra.mxu0 0.0
      %2753 = vmatprep.subr.mxu0 0.0
      %2754 = vmatpush1.msra.mxu0 0.0
      %2755 = vmatprep.subr.mxu0 0.0
      %2756 = vmatpush1.msra.mxu0 0.0
      %2757 = vmatprep.subr.mxu0 0.0
      %2758 = vmatpush1.msra.mxu0 0.0
      %2759 = vmatprep.subr.mxu0 0.0
      %2760 = vmatpush1.msra.mxu0 0.0
      %2761 = vmatprep.subr.mxu0 0.0
      %2762 = vmatpush1.msra.mxu0 0.0
      %2763 = vmatprep.subr.mxu0 0.0
      %2764 = vmatpush1.msra.mxu0 0.0
      %2765 = vmatprep.subr.mxu0 0.0
      %2766 = vmatpush1.msra.mxu0 0.0
      %2767 = vmatprep.subr.mxu0 0.0
      %2768 = vmatpush1.msra.mxu0 0.0
      %2769 = vmatprep.subr.mxu0 0.0
      %2770 = vmatpush1.msra.mxu0 0.0
      %2771 = vmatprep.subr.mxu0 0.0
      %2772 = vmatpush1.msra.mxu0 0.0
      %2773 = vmatprep.subr.mxu0 0.0
      %2774 = vmatpush1.msra.mxu0 0.0
      %2775 = vmatprep.subr.mxu0 0.0
      %2776 = vmatpush1.msra.mxu0 0.0
      %2777 = vmatprep.subr.mxu0 0.0
      %2778 = vmatpush1.msra.mxu0 0.0
      %2779 = vmatprep.subr.mxu0 0.0
      %2780 = vmatpush1.msra.mxu0 0.0
      %2781 = vmatprep.subr.mxu0 0.0
      %2782 = vmatpush1.msra.mxu0 0.0
      %2783 = vmatprep.subr.mxu0 0.0
      %2784 = vmatpush1.msra.mxu0 0.0
      %2785 = vmatprep.mubr.f32.mxu0 0.0
      %2786 = vmatmul.mubr.f32.gmra.mrb[0].mxu0 %v2648
      %v2787 = vpop.f32.mrb[0].mxu0
      %v2788 = vadd.f32 0.0, %v2787
      %v2789 = vpop.f32.mrb[0].mxu0
      %2790 = vdwg.mxu0
      %v2791 = vadd.f32 %v2631, %v2717
      %v2792 = vadd.f32 %v2632, %v2719
      %v2793 = vadd.f32 %v2633, %v2788
      %s2794 = scalar_lea.vmem %s4, 48
      %v2795 = vld [vmem:[%s2794] sm:$0xff]
      %2796 = vrot.lane.b32.xlu0 %v1846, 92
      %v2797 = vpop.permute.xlu0 %2796
      %2798 = vrot.lane.b32.xlu0 %v1847, 92
      %v2799 = vpop.permute.xlu0 %2798
      %2800 = vrot.lane.b32.xlu0 %v1848, 92
      %v2801 = vpop.permute.xlu0 %2800
      %v2802 = vsel %vm1315, %v2797, %v2799
      %v2803 = vsel %vm1315, %v2799, %v2801
      %v2808 = vsel %vm1865, %v2795, 0
      %2810 = vmatprep.subr.mxu0 %v2803
      %2811 = vmatpush1.msra.mxu0 %v2802
      %2812 = vmatprep.subr.mxu0 0.0
      %2813 = vmatpush1.msra.mxu0 0.0
      %2814 = vmatprep.subr.mxu0 0.0
      %2815 = vmatpush1.msra.mxu0 0.0
      %2816 = vmatprep.subr.mxu0 0.0
      %2817 = vmatpush1.msra.mxu0 0.0
      %2818 = vmatprep.subr.mxu0 0.0
      %2819 = vmatpush1.msra.mxu0 0.0
      %2820 = vmatprep.subr.mxu0 0.0
      %2821 = vmatpush1.msra.mxu0 0.0
      %2822 = vmatprep.subr.mxu0 0.0
      %2823 = vmatpush1.msra.mxu0 0.0
      %2824 = vmatprep.subr.mxu0 0.0
      %2825 = vmatpush1.msra.mxu0 0.0
      %2826 = vmatprep.subr.mxu0 0.0
      %2827 = vmatpush1.msra.mxu0 0.0
      %2828 = vmatprep.subr.mxu0 0.0
      %2829 = vmatpush1.msra.mxu0 0.0
      %2830 = vmatprep.subr.mxu0 0.0
      %2831 = vmatpush1.msra.mxu0 0.0
      %2832 = vmatprep.subr.mxu0 0.0
      %2833 = vmatpush1.msra.mxu0 0.0
      %2834 = vmatprep.subr.mxu0 0.0
      %2835 = vmatpush1.msra.mxu0 0.0
      %2836 = vmatprep.subr.mxu0 0.0
      %2837 = vmatpush1.msra.mxu0 0.0
      %2838 = vmatprep.subr.mxu0 0.0
      %2839 = vmatpush1.msra.mxu0 0.0
      %2840 = vmatprep.subr.mxu0 0.0
      %2841 = vmatpush1.msra.mxu0 0.0
      %2842 = vmatprep.subr.mxu0 0.0
      %2843 = vmatpush1.msra.mxu0 0.0
      %2844 = vmatprep.subr.mxu0 0.0
      %2845 = vmatpush1.msra.mxu0 0.0
      %2846 = vmatprep.subr.mxu0 0.0
      %2847 = vmatpush1.msra.mxu0 0.0
      %2848 = vmatprep.subr.mxu0 0.0
      %2849 = vmatpush1.msra.mxu0 0.0
      %2850 = vmatprep.subr.mxu0 0.0
      %2851 = vmatpush1.msra.mxu0 0.0
      %2852 = vmatprep.subr.mxu0 0.0
      %2853 = vmatpush1.msra.mxu0 0.0
      %2854 = vmatprep.subr.mxu0 0.0
      %2855 = vmatpush1.msra.mxu0 0.0
      %2856 = vmatprep.subr.mxu0 0.0
      %2857 = vmatpush1.msra.mxu0 0.0
      %2858 = vmatprep.subr.mxu0 0.0
      %2859 = vmatpush1.msra.mxu0 0.0
      %2860 = vmatprep.subr.mxu0 0.0
      %2861 = vmatpush1.msra.mxu0 0.0
      %2862 = vmatprep.subr.mxu0 0.0
      %2863 = vmatpush1.msra.mxu0 0.0
      %2864 = vmatprep.subr.mxu0 0.0
      %2865 = vmatpush1.msra.mxu0 0.0
      %2866 = vmatprep.subr.mxu0 0.0
      %2867 = vmatpush1.msra.mxu0 0.0
      %2868 = vmatprep.subr.mxu0 0.0
      %2869 = vmatpush1.msra.mxu0 0.0
      %2870 = vmatprep.subr.mxu0 0.0
      %2871 = vmatpush1.msra.mxu0 0.0
      %2872 = vmatprep.subr.mxu0 0.0
      %2873 = vmatpush1.msra.mxu0 0.0
      %2874 = vmatprep.mubr.f32.mxu0 0.0
      %2875 = vmatmul.mubr.f32.gmra.mrb[0].mxu0 %v2808
      %v2876 = vpop.f32.mrb[0].mxu0
      %v2877 = vadd.f32 0.0, %v2876
      %v2878 = vpop.f32.mrb[0].mxu0
      %v2879 = vadd.f32 0.0, %v2878
      %2880 = vdwg.mxu0
      %2881 = vmatprep.subr.mxu0 0.0
      %2882 = vmatpush1.msra.mxu0 %v2801
      %2883 = vmatprep.subr.mxu0 0.0
      %2884 = vmatpush1.msra.mxu0 0.0
      %2885 = vmatprep.subr.mxu0 0.0
      %2886 = vmatpush1.msra.mxu0 0.0
      %2887 = vmatprep.subr.mxu0 0.0
      %2888 = vmatpush1.msra.mxu0 0.0
      %2889 = vmatprep.subr.mxu0 0.0
      %2890 = vmatpush1.msra.mxu0 0.0
      %2891 = vmatprep.subr.mxu0 0.0
      %2892 = vmatpush1.msra.mxu0 0.0
      %2893 = vmatprep.subr.mxu0 0.0
      %2894 = vmatpush1.msra.mxu0 0.0
      %2895 = vmatprep.subr.mxu0 0.0
      %2896 = vmatpush1.msra.mxu0 0.0
      %2897 = vmatprep.subr.mxu0 0.0
      %2898 = vmatpush1.msra.mxu0 0.0
      %2899 = vmatprep.subr.mxu0 0.0
      %2900 = vmatpush1.msra.mxu0 0.0
      %2901 = vmatprep.subr.mxu0 0.0
      %2902 = vmatpush1.msra.mxu0 0.0
      %2903 = vmatprep.subr.mxu0 0.0
      %2904 = vmatpush1.msra.mxu0 0.0
      %2905 = vmatprep.subr.mxu0 0.0
      %2906 = vmatpush1.msra.mxu0 0.0
      %2907 = vmatprep.subr.mxu0 0.0
      %2908 = vmatpush1.msra.mxu0 0.0
      %2909 = vmatprep.subr.mxu0 0.0
      %2910 = vmatpush1.msra.mxu0 0.0
      %2911 = vmatprep.subr.mxu0 0.0
      %2912 = vmatpush1.msra.mxu0 0.0
      %2913 = vmatprep.subr.mxu0 0.0
      %2914 = vmatpush1.msra.mxu0 0.0
      %2915 = vmatprep.subr.mxu0 0.0
      %2916 = vmatpush1.msra.mxu0 0.0
      %2917 = vmatprep.subr.mxu0 0.0
      %2918 = vmatpush1.msra.mxu0 0.0
      %2919 = vmatprep.subr.mxu0 0.0
      %2920 = vmatpush1.msra.mxu0 0.0
      %2921 = vmatprep.subr.mxu0 0.0
      %2922 = vmatpush1.msra.mxu0 0.0
      %2923 = vmatprep.subr.mxu0 0.0
      %2924 = vmatpush1.msra.mxu0 0.0
      %2925 = vmatprep.subr.mxu0 0.0
      %2926 = vmatpush1.msra.mxu0 0.0
      %2927 = vmatprep.subr.mxu0 0.0
      %2928 = vmatpush1.msra.mxu0 0.0
      %2929 = vmatprep.subr.mxu0 0.0
      %2930 = vmatpush1.msra.mxu0 0.0
      %2931 = vmatprep.subr.mxu0 0.0
      %2932 = vmatpush1.msra.mxu0 0.0
      %2933 = vmatprep.subr.mxu0 0.0
      %2934 = vmatpush1.msra.mxu0 0.0
      %2935 = vmatprep.subr.mxu0 0.0
      %2936 = vmatpush1.msra.mxu0 0.0
      %2937 = vmatprep.subr.mxu0 0.0
      %2938 = vmatpush1.msra.mxu0 0.0
      %2939 = vmatprep.subr.mxu0 0.0
      %2940 = vmatpush1.msra.mxu0 0.0
      %2941 = vmatprep.subr.mxu0 0.0
      %2942 = vmatpush1.msra.mxu0 0.0
      %2943 = vmatprep.subr.mxu0 0.0
      %2944 = vmatpush1.msra.mxu0 0.0
      %2945 = vmatprep.mubr.f32.mxu0 0.0
      %2946 = vmatmul.mubr.f32.gmra.mrb[0].mxu0 %v2808
      %v2947 = vpop.f32.mrb[0].mxu0
      %v2948 = vadd.f32 0.0, %v2947
      %v2949 = vpop.f32.mrb[0].mxu0
      %2950 = vdwg.mxu0
      %v2951 = vadd.f32 %v2791, %v2877
      %v2952 = vadd.f32 %v2792, %v2879
      %v2953 = vadd.f32 %v2793, %v2948
      %s2954 = scalar_lea.vmem %s4, 56
      %v2955 = vld [vmem:[%s2954] sm:$0xff]
      %2956 = vrot.lane.b32.xlu0 %v1846, 91
      %v2957 = vpop.permute.xlu0 %2956
      %2958 = vrot.lane.b32.xlu0 %v1847, 91
      %v2959 = vpop.permute.xlu0 %2958
      %2960 = vrot.lane.b32.xlu0 %v1848, 91
      %v2961 = vpop.permute.xlu0 %2960
      %v2962 = vsel %vm1484, %v2957, %v2959
      %v2963 = vsel %vm1484, %v2959, %v2961
      %v2968 = vsel %vm1865, %v2955, 0
      %2970 = vmatprep.subr.mxu0 %v2963
      %2971 = vmatpush1.msra.mxu0 %v2962
      %2972 = vmatprep.subr.mxu0 0.0
      %2973 = vmatpush1.msra.mxu0 0.0
      %2974 = vmatprep.subr.mxu0 0.0
      %2975 = vmatpush1.msra.mxu0 0.0
      %2976 = vmatprep.subr.mxu0 0.0
      %2977 = vmatpush1.msra.mxu0 0.0
      %2978 = vmatprep.subr.mxu0 0.0
      %2979 = vmatpush1.msra.mxu0 0.0
      %2980 = vmatprep.subr.mxu0 0.0
      %2981 = vmatpush1.msra.mxu0 0.0
      %2982 = vmatprep.subr.mxu0 0.0
      %2983 = vmatpush1.msra.mxu0 0.0
      %2984 = vmatprep.subr.mxu0 0.0
      %2985 = vmatpush1.msra.mxu0 0.0
      %2986 = vmatprep.subr.mxu0 0.0
      %2987 = vmatpush1.msra.mxu0 0.0
      %2988 = vmatprep.subr.mxu0 0.0
      %2989 = vmatpush1.msra.mxu0 0.0
      %2990 = vmatprep.subr.mxu0 0.0
      %2991 = vmatpush1.msra.mxu0 0.0
      %2992 = vmatprep.subr.mxu0 0.0
      %2993 = vmatpush1.msra.mxu0 0.0
      %2994 = vmatprep.subr.mxu0 0.0
      %2995 = vmatpush1.msra.mxu0 0.0
      %2996 = vmatprep.subr.mxu0 0.0
      %2997 = vmatpush1.msra.mxu0 0.0
      %2998 = vmatprep.subr.mxu0 0.0
      %2999 = vmatpush1.msra.mxu0 0.0
      %3000 = vmatprep.subr.mxu0 0.0
      %3001 = vmatpush1.msra.mxu0 0.0
      %3002 = vmatprep.subr.mxu0 0.0
      %3003 = vmatpush1.msra.mxu0 0.0
      %3004 = vmatprep.subr.mxu0 0.0
      %3005 = vmatpush1.msra.mxu0 0.0
      %3006 = vmatprep.subr.mxu0 0.0
      %3007 = vmatpush1.msra.mxu0 0.0
      %3008 = vmatprep.subr.mxu0 0.0
      %3009 = vmatpush1.msra.mxu0 0.0
      %3010 = vmatprep.subr.mxu0 0.0
      %3011 = vmatpush1.msra.mxu0 0.0
      %3012 = vmatprep.subr.mxu0 0.0
      %3013 = vmatpush1.msra.mxu0 0.0
      %3014 = vmatprep.subr.mxu0 0.0
      %3015 = vmatpush1.msra.mxu0 0.0
      %3016 = vmatprep.subr.mxu0 0.0
      %3017 = vmatpush1.msra.mxu0 0.0
      %3018 = vmatprep.subr.mxu0 0.0
      %3019 = vmatpush1.msra.mxu0 0.0
      %3020 = vmatprep.subr.mxu0 0.0
      %3021 = vmatpush1.msra.mxu0 0.0
      %3022 = vmatprep.subr.mxu0 0.0
      %3023 = vmatpush1.msra.mxu0 0.0
      %3024 = vmatprep.subr.mxu0 0.0
      %3025 = vmatpush1.msra.mxu0 0.0
      %3026 = vmatprep.subr.mxu0 0.0
      %3027 = vmatpush1.msra.mxu0 0.0
      %3028 = vmatprep.subr.mxu0 0.0
      %3029 = vmatpush1.msra.mxu0 0.0
      %3030 = vmatprep.subr.mxu0 0.0
      %3031 = vmatpush1.msra.mxu0 0.0
      %3032 = vmatprep.subr.mxu0 0.0
      %3033 = vmatpush1.msra.mxu0 0.0
      %3034 = vmatprep.mubr.f32.mxu0 0.0
      %3035 = vmatmul.mubr.f32.gmra.mrb[0].mxu0 %v2968
      %v3036 = vpop.f32.mrb[0].mxu0
      %v3037 = vadd.f32 0.0, %v3036
      %v3038 = vpop.f32.mrb[0].mxu0
      %v3039 = vadd.f32 0.0, %v3038
      %3040 = vdwg.mxu0
      %3041 = vmatprep.subr.mxu0 0.0
      %3042 = vmatpush1.msra.mxu0 %v2961
      %3043 = vmatprep.subr.mxu0 0.0
      %3044 = vmatpush1.msra.mxu0 0.0
      %3045 = vmatprep.subr.mxu0 0.0
      %3046 = vmatpush1.msra.mxu0 0.0
      %3047 = vmatprep.subr.mxu0 0.0
      %3048 = vmatpush1.msra.mxu0 0.0
      %3049 = vmatprep.subr.mxu0 0.0
      %3050 = vmatpush1.msra.mxu0 0.0
      %3051 = vmatprep.subr.mxu0 0.0
      %3052 = vmatpush1.msra.mxu0 0.0
      %3053 = vmatprep.subr.mxu0 0.0
      %3054 = vmatpush1.msra.mxu0 0.0
      %3055 = vmatprep.subr.mxu0 0.0
      %3056 = vmatpush1.msra.mxu0 0.0
      %3057 = vmatprep.subr.mxu0 0.0
      %3058 = vmatpush1.msra.mxu0 0.0
      %3059 = vmatprep.subr.mxu0 0.0
      %3060 = vmatpush1.msra.mxu0 0.0
      %3061 = vmatprep.subr.mxu0 0.0
      %3062 = vmatpush1.msra.mxu0 0.0
      %3063 = vmatprep.subr.mxu0 0.0
      %3064 = vmatpush1.msra.mxu0 0.0
      %3065 = vmatprep.subr.mxu0 0.0
      %3066 = vmatpush1.msra.mxu0 0.0
      %3067 = vmatprep.subr.mxu0 0.0
      %3068 = vmatpush1.msra.mxu0 0.0
      %3069 = vmatprep.subr.mxu0 0.0
      %3070 = vmatpush1.msra.mxu0 0.0
      %3071 = vmatprep.subr.mxu0 0.0
      %3072 = vmatpush1.msra.mxu0 0.0
      %3073 = vmatprep.subr.mxu0 0.0
      %3074 = vmatpush1.msra.mxu0 0.0
      %3075 = vmatprep.subr.mxu0 0.0
      %3076 = vmatpush1.msra.mxu0 0.0
      %3077 = vmatprep.subr.mxu0 0.0
      %3078 = vmatpush1.msra.mxu0 0.0
      %3079 = vmatprep.subr.mxu0 0.0
      %3080 = vmatpush1.msra.mxu0 0.0
      %3081 = vmatprep.subr.mxu0 0.0
      %3082 = vmatpush1.msra.mxu0 0.0
      %3083 = vmatprep.subr.mxu0 0.0
      %3084 = vmatpush1.msra.mxu0 0.0
      %3085 = vmatprep.subr.mxu0 0.0
      %3086 = vmatpush1.msra.mxu0 0.0
      %3087 = vmatprep.subr.mxu0 0.0
      %3088 = vmatpush1.msra.mxu0 0.0
      %3089 = vmatprep.subr.mxu0 0.0
      %3090 = vmatpush1.msra.mxu0 0.0
      %3091 = vmatprep.subr.mxu0 0.0
      %3092 = vmatpush1.msra.mxu0 0.0
      %3093 = vmatprep.subr.mxu0 0.0
      %3094 = vmatpush1.msra.mxu0 0.0
      %3095 = vmatprep.subr.mxu0 0.0
      %3096 = vmatpush1.msra.mxu0 0.0
      %3097 = vmatprep.subr.mxu0 0.0
      %3098 = vmatpush1.msra.mxu0 0.0
      %3099 = vmatprep.subr.mxu0 0.0
      %3100 = vmatpush1.msra.mxu0 0.0
      %3101 = vmatprep.subr.mxu0 0.0
      %3102 = vmatpush1.msra.mxu0 0.0
      %3103 = vmatprep.subr.mxu0 0.0
      %3104 = vmatpush1.msra.mxu0 0.0
      %3105 = vmatprep.mubr.f32.mxu0 0.0
      %3106 = vmatmul.mubr.f32.gmra.mrb[0].mxu0 %v2968
      %v3107 = vpop.f32.mrb[0].mxu0
      %v3108 = vadd.f32 0.0, %v3107
      %v3109 = vpop.f32.mrb[0].mxu0
      %3110 = vdwg.mxu0
      %v3111 = vadd.f32 %v2951, %v3037
      %v3112 = vadd.f32 %v2952, %v3039
      %v3113 = vadd.f32 %v2953, %v3108
      %s3114 = scalar_lea.vmem %s4, 64
      %v3115 = vld [vmem:[%s3114] sm:$0xff]
      %3116 = vrot.lane.b32.xlu0 %v1846, 90
      %v3117 = vpop.permute.xlu0 %3116
      %3118 = vrot.lane.b32.xlu0 %v1847, 90
      %v3119 = vpop.permute.xlu0 %3118
      %3120 = vrot.lane.b32.xlu0 %v1848, 90
      %v3121 = vpop.permute.xlu0 %3120
      %v3122 = vsel %vm1653, %v3117, %v3119
      %v3123 = vsel %vm1653, %v3119, %v3121
      %v3128 = vsel %vm1865, %v3115, 0
      %3130 = vmatprep.subr.mxu0 %v3123
      %3131 = vmatpush1.msra.mxu0 %v3122
      %3132 = vmatprep.subr.mxu0 0.0
      %3133 = vmatpush1.msra.mxu0 0.0
      %3134 = vmatprep.subr.mxu0 0.0
      %3135 = vmatpush1.msra.mxu0 0.0
      %3136 = vmatprep.subr.mxu0 0.0
      %3137 = vmatpush1.msra.mxu0 0.0
      %3138 = vmatprep.subr.mxu0 0.0
      %3139 = vmatpush1.msra.mxu0 0.0
      %3140 = vmatprep.subr.mxu0 0.0
      %3141 = vmatpush1.msra.mxu0 0.0
      %3142 = vmatprep.subr.mxu0 0.0
      %3143 = vmatpush1.msra.mxu0 0.0
      %3144 = vmatprep.subr.mxu0 0.0
      %3145 = vmatpush1.msra.mxu0 0.0
      %3146 = vmatprep.subr.mxu0 0.0
      %3147 = vmatpush1.msra.mxu0 0.0
      %3148 = vmatprep.subr.mxu0 0.0
      %3149 = vmatpush1.msra.mxu0 0.0
      %3150 = vmatprep.subr.mxu0 0.0
      %3151 = vmatpush1.msra.mxu0 0.0
      %3152 = vmatprep.subr.mxu0 0.0
      %3153 = vmatpush1.msra.mxu0 0.0
      %3154 = vmatprep.subr.mxu0 0.0
      %3155 = vmatpush1.msra.mxu0 0.0
      %3156 = vmatprep.subr.mxu0 0.0
      %3157 = vmatpush1.msra.mxu0 0.0
      %3158 = vmatprep.subr.mxu0 0.0
      %3159 = vmatpush1.msra.mxu0 0.0
      %3160 = vmatprep.subr.mxu0 0.0
      %3161 = vmatpush1.msra.mxu0 0.0
      %3162 = vmatprep.subr.mxu0 0.0
      %3163 = vmatpush1.msra.mxu0 0.0
      %3164 = vmatprep.subr.mxu0 0.0
      %3165 = vmatpush1.msra.mxu0 0.0
      %3166 = vmatprep.subr.mxu0 0.0
      %3167 = vmatpush1.msra.mxu0 0.0
      %3168 = vmatprep.subr.mxu0 0.0
      %3169 = vmatpush1.msra.mxu0 0.0
      %3170 = vmatprep.subr.mxu0 0.0
      %3171 = vmatpush1.msra.mxu0 0.0
      %3172 = vmatprep.subr.mxu0 0.0
      %3173 = vmatpush1.msra.mxu0 0.0
      %3174 = vmatprep.subr.mxu0 0.0
      %3175 = vmatpush1.msra.mxu0 0.0
      %3176 = vmatprep.subr.mxu0 0.0
      %3177 = vmatpush1.msra.mxu0 0.0
      %3178 = vmatprep.subr.mxu0 0.0
      %3179 = vmatpush1.msra.mxu0 0.0
      %3180 = vmatprep.subr.mxu0 0.0
      %3181 = vmatpush1.msra.mxu0 0.0
      %3182 = vmatprep.subr.mxu0 0.0
      %3183 = vmatpush1.msra.mxu0 0.0
      %3184 = vmatprep.subr.mxu0 0.0
      %3185 = vmatpush1.msra.mxu0 0.0
      %3186 = vmatprep.subr.mxu0 0.0
      %3187 = vmatpush1.msra.mxu0 0.0
      %3188 = vmatprep.subr.mxu0 0.0
      %3189 = vmatpush1.msra.mxu0 0.0
      %3190 = vmatprep.subr.mxu0 0.0
      %3191 = vmatpush1.msra.mxu0 0.0
      %3192 = vmatprep.subr.mxu0 0.0
      %3193 = vmatpush1.msra.mxu0 0.0
      %3194 = vmatprep.mubr.f32.mxu0 0.0
      %3195 = vmatmul.mubr.f32.gmra.mrb[0].mxu0 %v3128
      %v3196 = vpop.f32.mrb[0].mxu0
      %v3197 = vadd.f32 0.0, %v3196
      %v3198 = vpop.f32.mrb[0].mxu0
      %v3199 = vadd.f32 0.0, %v3198
      %3200 = vdwg.mxu0
      %3201 = vmatprep.subr.mxu0 0.0
      %3202 = vmatpush1.msra.mxu0 %v3121
      %3203 = vmatprep.subr.mxu0 0.0
      %3204 = vmatpush1.msra.mxu0 0.0
      %3205 = vmatprep.subr.mxu0 0.0
      %3206 = vmatpush1.msra.mxu0 0.0
      %3207 = vmatprep.subr.mxu0 0.0
      %3208 = vmatpush1.msra.mxu0 0.0
      %3209 = vmatprep.subr.mxu0 0.0
      %3210 = vmatpush1.msra.mxu0 0.0
      %3211 = vmatprep.subr.mxu0 0.0
      %3212 = vmatpush1.msra.mxu0 0.0
      %3213 = vmatprep.subr.mxu0 0.0
      %3214 = vmatpush1.msra.mxu0 0.0
      %3215 = vmatprep.subr.mxu0 0.0
      %3216 = vmatpush1.msra.mxu0 0.0
      %3217 = vmatprep.subr.mxu0 0.0
      %3218 = vmatpush1.msra.mxu0 0.0
      %3219 = vmatprep.subr.mxu0 0.0
      %3220 = vmatpush1.msra.mxu0 0.0
      %3221 = vmatprep.subr.mxu0 0.0
      %3222 = vmatpush1.msra.mxu0 0.0
      %3223 = vmatprep.subr.mxu0 0.0
      %3224 = vmatpush1.msra.mxu0 0.0
      %3225 = vmatprep.subr.mxu0 0.0
      %3226 = vmatpush1.msra.mxu0 0.0
      %3227 = vmatprep.subr.mxu0 0.0
      %3228 = vmatpush1.msra.mxu0 0.0
      %3229 = vmatprep.subr.mxu0 0.0
      %3230 = vmatpush1.msra.mxu0 0.0
      %3231 = vmatprep.subr.mxu0 0.0
      %3232 = vmatpush1.msra.mxu0 0.0
      %3233 = vmatprep.subr.mxu0 0.0
      %3234 = vmatpush1.msra.mxu0 0.0
      %3235 = vmatprep.subr.mxu0 0.0
      %3236 = vmatpush1.msra.mxu0 0.0
      %3237 = vmatprep.subr.mxu0 0.0
      %3238 = vmatpush1.msra.mxu0 0.0
      %3239 = vmatprep.subr.mxu0 0.0
      %3240 = vmatpush1.msra.mxu0 0.0
      %3241 = vmatprep.subr.mxu0 0.0
      %3242 = vmatpush1.msra.mxu0 0.0
      %3243 = vmatprep.subr.mxu0 0.0
      %3244 = vmatpush1.msra.mxu0 0.0
      %3245 = vmatprep.subr.mxu0 0.0
      %3246 = vmatpush1.msra.mxu0 0.0
      %3247 = vmatprep.subr.mxu0 0.0
      %3248 = vmatpush1.msra.mxu0 0.0
      %3249 = vmatprep.subr.mxu0 0.0
      %3250 = vmatpush1.msra.mxu0 0.0
      %3251 = vmatprep.subr.mxu0 0.0
      %3252 = vmatpush1.msra.mxu0 0.0
      %3253 = vmatprep.subr.mxu0 0.0
      %3254 = vmatpush1.msra.mxu0 0.0
      %3255 = vmatprep.subr.mxu0 0.0
      %3256 = vmatpush1.msra.mxu0 0.0
      %3257 = vmatprep.subr.mxu0 0.0
      %3258 = vmatpush1.msra.mxu0 0.0
      %3259 = vmatprep.subr.mxu0 0.0
      %3260 = vmatpush1.msra.mxu0 0.0
      %3261 = vmatprep.subr.mxu0 0.0
      %3262 = vmatpush1.msra.mxu0 0.0
      %3263 = vmatprep.subr.mxu0 0.0
      %3264 = vmatpush1.msra.mxu0 0.0
      %3265 = vmatprep.mubr.f32.mxu0 0.0
      %3266 = vmatmul.mubr.f32.gmra.mrb[0].mxu0 %v3128
      %v3267 = vpop.f32.mrb[0].mxu0
      %v3268 = vadd.f32 0.0, %v3267
      %v3269 = vpop.f32.mrb[0].mxu0
      %3270 = vdwg.mxu0
      %v3271 = vadd.f32 %v3111, %v3197
      %v3272 = vadd.f32 %v3112, %v3199
      %v3273 = vadd.f32 %v3113, %v3268
      %v3274 = vld [vmem:[%s5] sm:$0xff]
      %3276 = vset.pattern.permute.xlu0 0
      %3277 = vperm.xlu0 %3276, %v3274
      %v3278 = vpop.permute.xlu0 %3277
      %v3280 = vadd.f32 %v3271, %v3278
      %v3281 = vadd.f32 %v3272, %v3278
      %v3282 = vadd.f32 %v3273, %v3278
      %v3283 = vmax.f32 %v3280, 0.0
      %v3284 = vmax.f32 %v3281, 0.0
      %v3285 = vmax.f32 %v3282, 0.0
      %3286 = vst [vmem:[%s304] sm:$0xff] %v3283
      %3287 = vst [vmem:[%s304 + $0x8] sm:$0xff] %v3284
      %vm3288 = vcmask 261120
      %3289 = vst.msk [vmem:[%s304 + $0x10] sm:$0xff] %vm3288, %v3285
      %p3290 = scmp.lt.s32.totalorder %s21, 1
      %s3291 = scalar_select %p3290, %s21, 1
      %p3292 = scmp.lt.s32.totalorder %s22, 0
      %s3293 = scalar_select %p3292, %s22, 0
      %s3294 = smul.addr %s3293, 3
      %s3295 = smul.addr %s3291, 3
      %s3296 = sadd.s32 %s3294, %s3295
      %s3297 = smul.addr %s3296, 8
      %s3298 = scalar_lea.vmem %s6, %s3297
      // Predicated region
      $region45: #{double_conv_pallas.1} parent=43 // pred_check
        %p3299 = pneg %p187
      $region46: #{double_conv_pallas.1} parent=43 // pred_check_branch
        %3301 = sbr.rel (%p3299) target = $region48
      $region47: #{double_conv_pallas.1} parent=43 // pred_region
        _
      $region48: #{double_conv_pallas.1} parent=43 // pred_fallthru
        _
    $region44: #{double_conv_pallas.1} parent=5 // pred_fallthru
      _
    %p3302 = scmp.le.s32.totalorder 2, %s12
    // Predicated region
    $region49: #{double_conv_pallas.1} parent=5 // pred_check
      %p3303 = pneg %p3302
    $region50: #{double_conv_pallas.1} parent=5 // pred_check_branch
      %3305 = sbr.rel (%p3303) target = $region52
    $region51: #{double_conv_pallas.1} parent=5 // pred_region
      %s3306 = ssub.s32 %s12, 2
      // Predicated region
      $region53: #{double_conv_pallas.1} parent=51 // pred_check
        %p3307 = pneg %p193
      $region54: #{double_conv_pallas.1} parent=51 // pred_check_branch
        %3309 = sbr.rel (%p3307) target = $region56
      $region55: #{double_conv_pallas.1} parent=51 // pred_region
        %p3310 = scmp.lt.s32.totalorder %s23, 1
        %s3311 = scalar_select %p3310, %s23, 1
        %p3312 = scmp.lt.s32.totalorder %s24, 0
        %s3313 = scalar_select %p3312, %s24, 0
        %s3314 = smul.addr %s3313, 3
        %s3315 = smul.addr %s3311, 3
        %s3316 = sadd.s32 %s3314, %s3315
        %s3317 = smul.addr %s3316, 8
        %s3318 = scalar_lea.vmem %s6, %s3317
      $region56: #{double_conv_pallas.1} parent=51 // pred_fallthru
        _
    $region52: #{double_conv_pallas.1} parent=5 // pred_fallthru
      _
  $region6: #{double_conv_pallas.1} parent=0 // loop_footer
    %s16 = sadd.s32 1, %s12
  $region7: #{double_conv_pallas.1} parent=0 // loop_footer_branch
    %11 = sbr.rel target = $region3
  $region8: #{double_conv_pallas.1} parent=0 // loop_exit
    _

</llo_original>
